<compile_context>
chip_gen: v7x
topology: tpu7x:2x2x1
jax: 0.10.0
libtpu: 0.0.40
codegen_flags: <defaults>
</compile_context>

<pallas_src>
from functools import partial

import jax
import jax.numpy as jnp
from jax.experimental import pallas as pl
from jax.experimental.pallas import tpu as pltpu


def _round_up(x, m):
    return (x + m - 1) // m * m


# ----------------------------------------------------------------------------- kernel body

def mbconv_pointwise_residual_kernel(x_ref, w1_ref, b1_ref, w2_ref, b2_ref, o_ref):
    """One (tile_m, C) row tile: out = x + proj(gelu(expand(x))).  Single full-K dot per GEMM."""
    x = x_ref[...]                                          # (TM, C) native dtype
    x_bf = x.astype(jnp.bfloat16)                           # MXU operand

    h = jnp.dot(x_bf, w1_ref[...], preferred_element_type=jnp.float32)   # (TM, Hp) f32
    h = h + b1_ref[...]                                     # f32 bias
    h = jax.nn.gelu(h, approximate=True)                    # f32, tanh -> EUP

    out = jnp.dot(h.astype(jnp.bfloat16), w2_ref[...],
                  preferred_element_type=jnp.float32)       # (TM, C) f32
    out = out + b2_ref[...] + x.astype(jnp.float32)         # bias + residual (full-precision x)
    o_ref[...] = out.astype(o_ref.dtype)


# ----------------------------------------------------------------------------- one-time param prep

def prepare_pointwise_params(w1, b1, w2, b2):
    """Cast/pad the pointwise-conv weights ONCE at model setup (not per call).

    w1: (C, hidden), b1: (hidden,), w2: (hidden, C), b2: (C,).
    The hidden dim is padded to a multiple of 128 (lane width); C stays unpadded.
    Padding is exact: gelu(0 + 0) = 0 contributes nothing through w2's zero rows.
    """
    C, hidden = w1.shape
    Hp = _round_up(hidden, 128)
    w1p = jnp.pad(w1.astype(jnp.bfloat16), ((0, 0), (0, Hp - hidden)))
    w2p = jnp.pad(w2.astype(jnp.bfloat16), ((0, Hp - hidden), (0, 0)))
    b1p = jnp.pad(b1.astype(jnp.float32), (0, Hp - hidden)).reshape(1, Hp)
    b2p = b2.astype(jnp.float32).reshape(1, C)
    return (w1p, b1p, w2p, b2p)


# ----------------------------------------------------------------------------- wrapper

def _vmem_capacity_bytes():
    try:
        info = pltpu.get_tpu_info()
        cap = getattr(info, "vmem_capacity_bytes", None)
        if cap:
            return int(cap)
    except Exception:
        pass
    return 64 * 1024 * 1024   # conservative: v7x per-TC VMEM


def _tile_footprint_bytes(tile_m, C, Hp, x_itemsize, wbuf):
    bf, f32 = 2, 4
    return (2 * tile_m * C * x_itemsize        # input tile (double-buffered)
            + 2 * tile_m * C * x_itemsize      # output tile (double-buffered)
            + wbuf * 2 * C * Hp * bf           # w1 + w2 (resident)
            + wbuf * 8 * (Hp + C) * f32        # biases (sublane-padded)
            + tile_m * Hp * f32                # f32 hidden intermediate
            + 2 * tile_m * C * f32)            # f32 result temporaries


def _const_block_spec(shape, single_buffer):
    index_map = lambda i: (0, 0)
    if single_buffer:
        try:
            return pl.BlockSpec(shape, index_map, pipeline_mode=pl.Buffered(1))
        except (TypeError, AttributeError):
            pass
    return pl.BlockSpec(shape, index_map)


def _pointwise_call(x_flat, params, tile_m, single_buffer_weights):
    w1, b1, w2, b2 = params
    M, C = x_flat.shape
    Cw, Hp = w1.shape
    assert Cw == C, "weight/input channel mismatch"

    # Row-tile size: never larger than needed, divisible by 8, auto-shrink to fit VMEM.
    tile_m = max(8, min(tile_m, _round_up(M, 8)))
    wbuf = 1 if single_buffer_weights else 2
    x_item = x_flat.dtype.itemsize
    vmem_cap = _vmem_capacity_bytes()
    while tile_m > 128 and _tile_footprint_bytes(tile_m, C, Hp, x_item, wbuf) > 0.7 * vmem_cap:
        tile_m //= 2
    footprint = _tile_footprint_bytes(tile_m, C, Hp, x_item, wbuf)
    vmem_limit = int(min(0.8 * vmem_cap, max(32 * 1024 * 1024, 1.5 * footprint)))
    vmem_limit = min(max(vmem_limit, int(1.2 * footprint)), int(0.9 * vmem_cap))

    grid = (pl.cdiv(M, tile_m),)

    cost = pl.CostEstimate(
        flops=4 * M * C * Hp,                              # two GEMMs, 2 flops/MAC
        transcendentals=M * Hp,                            # tanh in GELU
        bytes_accessed=int(2 * M * C * x_item              # x read + out write
                           + (w1.size + w2.size) * 2       # bf16 weights
                           + (b1.size + b2.size) * 4),     # f32 biases
    )

    return pl.pallas_call(
        mbconv_pointwise_residual_kernel,
        out_shape=jax.ShapeDtypeStruct((M, C), x_flat.dtype),
        grid_spec=pltpu.PrefetchScalarGridSpec(
            num_scalar_prefetch=0,
            grid=grid,
            in_specs=[
                pl.BlockSpec((tile_m, C), lambda i: (i, 0)),        # activation row tile
                _const_block_spec((C, Hp), single_buffer_weights),  # w1 (resident)
                _const_block_spec((1, Hp), single_buffer_weights),  # b1
                _const_block_spec((Hp, C), single_buffer_weights),  # w2 (resident)
                _const_block_spec((1, C), single_buffer_weights),   # b2
            ],
            out_specs=pl.BlockSpec((tile_m, C), lambda i: (i, 0)),
        ),
        compiler_params=pltpu.CompilerParams(
            dimension_semantics=("parallel",),      # independent row tiles -> megacore split
            vmem_limit_bytes=vmem_limit,
        ),
        cost_estimate=cost,
    )(x_flat, w1, b1, w2, b2)


def mbconv_residual_flat(x_flat, params, *, tile_m=512, single_buffer_weights=True):
    """Core entry point on NHWC-flattened activations: x_flat is (M, C) with M = N*H*W.

    `params` must come from prepare_pointwise_params().  Returns (M, C) in x_flat.dtype.
    Call this directly from an NHWC pipeline to avoid layout transposes.
    """
    try:
        return _pointwise_call(x_flat, params, tile_m, single_buffer_weights)
    except Exception:
        if not single_buffer_weights:
            raise
        # Fallback for jax versions where pipeline_mode=pl.Buffered(1) doesn't lower.
        return _pointwise_call(x_flat, params, tile_m, False)


def mbconv_residual(x_nchw, params, **kwargs):
    """NCHW adapter (PyTorch layout parity).  In an NHWC MaxViT pipeline call
    mbconv_residual_flat directly and skip these boundary transposes."""
    N, C, H, W = x_nchw.shape
    x_flat = jnp.transpose(x_nchw, (0, 2, 3, 1)).reshape(N * H * W, C)
    out_flat = mbconv_residual_flat(x_flat, params, **kwargs)
    return jnp.transpose(out_flat.reshape(N, H, W, C), (0, 3, 1, 2))


# ----------------------------------------------------------------------------- reference

def _reference_flat(x_flat, w1, b1, w2, b2):
    """Pure-JAX reference mirroring the kernel's dtype policy (bf16 MXU operands, f32 math)."""
    xb = x_flat.astype(jnp.bfloat16)
    h = jnp.dot(xb, w1.astype(jnp.bfloat16), preferred_element_type=jnp.float32)
    h = h + b1.astype(jnp.float32)
    h = jax.nn.gelu(h, approximate=True)
    out = jnp.dot(h.astype(jnp.bfloat16), w2.astype(jnp.bfloat16),
                  preferred_element_type=jnp.float32)
    out = out + b2.astype(jnp.float32) + x_flat.astype(jnp.float32)
    return out.astype(x_flat.dtype)


def _reference_nchw(x, w1, b1, w2, b2):
    N, C, H, W = x.shape
    xf = jnp.transpose(x, (0, 2, 3, 1)).reshape(-1, C)
    out = _reference_flat(xf, w1, b1, w2, b2)
    return jnp.transpose(out.reshape(N, H, W, C), (0, 3, 1, 2))


# ----------------------------------------------------------------------------- demo / check

if __name__ == "__main__":
    key = jax.random.PRNGKey(0)
    k_x, k_w1, k_b1, k_w2, k_b2, k_x2 = jax.random.split(key, 6)

    # MaxViT-stem-like small shape: C=64 channels, 16x16 spatial, expansion 4 -> hidden 256.
    N, C, H, W = 2, 64, 16, 16
    expansion = 4
    hidden = C * expansion

    x = jax.random.normal(k_x, (N, C, H, W), dtype=jnp.float32)
    w1 = jax.random.normal(k_w1, (C, hidden), dtype=jnp.float32) * 0.1
    b1 = jax.random.normal(k_b1, (hidden,), dtype=jnp.float32) * 0.1
    w2 = jax.random.normal(k_w2, (hidden, C), dtype=jnp.float32) * 0.1
    b2 = jax.random.normal(k_b2, (C,), dtype=jnp.float32) * 0.1

    params = prepare_pointwise_params(w1, b1, w2, b2)   # one-time bf16 cast + pad

    # Test 1: evenly-dividing row count.
    out = mbconv_residual(x, params)
    out = jax.block_until_ready(out)
    ref = _reference_nchw(x, w1, b1, w2, b2)
    assert out.shape == (N, C, H, W)
    assert out.dtype == x.dtype
    assert jnp.allclose(out.astype(jnp.float32), ref.astype(jnp.float32),
                        atol=2e-2, rtol=2e-2), "mismatch vs reference (even grid)"

    # Test 2: ragged row count (M = 100, not a multiple of 8) -> exercises masked tail block.
    x2 = jax.random.normal(k_x2, (1, C, 10, 10), dtype=jnp.float32)
    out2 = jax.block_until_ready(mbconv_residual(x2, params))
    ref2 = _reference_nchw(x2, w1, b1, w2, b2)
    assert out2.shape == x2.shape
    assert jnp.allclose(out2.astype(jnp.float32), ref2.astype(jnp.float32),
                        atol=2e-2, rtol=2e-2), "mismatch vs reference (ragged tail)"

    print("KERNEL_OK")
</pallas_src>

<mosaic_0001>
module attributes {stable_mosaic.version = 11 : i64} {
  func.func @mbconv_pointwise_residual_kernel(%arg0: i32, %arg1: memref<512x64xf32, #tpu.memory_space<vmem>>, %arg2: memref<64x256xbf16, #tpu.memory_space<vmem>>, %arg3: memref<1x256xf32, #tpu.memory_space<vmem>>, %arg4: memref<256x64xbf16, #tpu.memory_space<vmem>>, %arg5: memref<1x64xf32, #tpu.memory_space<vmem>>, %arg6: memref<512x64xf32, #tpu.memory_space<vmem>>) attributes {dimension_semantics = [#tpu.dimension_semantics<parallel>], iteration_bounds = array<i64: 1>, scalar_prefetch = 0 : i64, scratch_operands = 0 : i64, tpu.core_type = #tpu.core_type<tc>, window_params = [{transform_indices = @transform_0, window_bounds = array<i64: 512, 64>}, {pipeline_mode = #tpu.pipeline_mode<synchronous>, transform_indices = @transform_1, window_bounds = array<i64: 64, 256>}, {pipeline_mode = #tpu.pipeline_mode<synchronous>, transform_indices = @transform_2, window_bounds = array<i64: 1, 256>}, {pipeline_mode = #tpu.pipeline_mode<synchronous>, transform_indices = @transform_3, window_bounds = array<i64: 256, 64>}, {pipeline_mode = #tpu.pipeline_mode<synchronous>, transform_indices = @transform_4, window_bounds = array<i64: 1, 64>}, {transform_indices = @transform_5, window_bounds = array<i64: 512, 64>}]} {
    %c0 = arith.constant 0 : index
    %c0_0 = arith.constant 0 : index
    %0 = vector.load %arg1[%c0, %c0_0] : memref<512x64xf32, #tpu.memory_space<vmem>>, vector<512x64xf32>
    %1 = arith.truncf %0 : vector<512x64xf32> to vector<512x64xbf16>
    %c0_1 = arith.constant 0 : index
    %c0_2 = arith.constant 0 : index
    %2 = vector.load %arg2[%c0_1, %c0_2] : memref<64x256xbf16, #tpu.memory_space<vmem>>, vector<64x256xbf16>
    %cst = arith.constant dense<0.000000e+00> : vector<512x256xf32>
    %3 = tpu.matmul %1, %2, %cst {dimension_numbers = #tpu.dot_dimension_numbers<[1], [0], [0], [1], [0, 0, 1, 1], [], []>} : vector<512x64xbf16>, vector<64x256xbf16>, vector<512x256xf32> -> vector<512x256xf32>
    %c0_3 = arith.constant 0 : index
    %c0_4 = arith.constant 0 : index
    %4 = vector.load %arg3[%c0_3, %c0_4] : memref<1x256xf32, #tpu.memory_space<vmem>>, vector<1x256xf32>
    %5 = vector.broadcast %4 : vector<1x256xf32> to vector<512x256xf32>
    %6 = arith.addf %3, %5 : vector<512x256xf32>
    %7 = arith.mulf %6, %6 : vector<512x256xf32>
    %8 = arith.mulf %6, %7 : vector<512x256xf32>
    %cst_5 = arith.constant 4.471500e-02 : f32
    %9 = vector.broadcast %cst_5 : f32 to vector<512x256xf32>
    %10 = arith.mulf %9, %8 : vector<512x256xf32>
    %11 = arith.addf %6, %10 : vector<512x256xf32>
    %cst_6 = arith.constant 0.797884583 : f32
    %12 = vector.broadcast %cst_6 : f32 to vector<512x256xf32>
    %13 = arith.mulf %12, %11 : vector<512x256xf32>
    %14 = math.tanh %13 : vector<512x256xf32>
    %cst_7 = arith.constant 1.000000e+00 : f32
    %15 = vector.broadcast %cst_7 : f32 to vector<512x256xf32>
    %16 = arith.addf %15, %14 : vector<512x256xf32>
    %cst_8 = arith.constant 5.000000e-01 : f32
    %17 = vector.broadcast %cst_8 : f32 to vector<512x256xf32>
    %18 = arith.mulf %17, %16 : vector<512x256xf32>
    %19 = arith.mulf %6, %18 : vector<512x256xf32>
    %20 = arith.truncf %19 : vector<512x256xf32> to vector<512x256xbf16>
    %c0_9 = arith.constant 0 : index
    %c0_10 = arith.constant 0 : index
    %21 = vector.load %arg4[%c0_9, %c0_10] : memref<256x64xbf16, #tpu.memory_space<vmem>>, vector<256x64xbf16>
    %cst_11 = arith.constant dense<0.000000e+00> : vector<512x64xf32>
    %22 = tpu.matmul %20, %21, %cst_11 {dimension_numbers = #tpu.dot_dimension_numbers<[1], [0], [0], [1], [0, 0, 1, 1], [], []>} : vector<512x256xbf16>, vector<256x64xbf16>, vector<512x64xf32> -> vector<512x64xf32>
    %c0_12 = arith.constant 0 : index
    %c0_13 = arith.constant 0 : index
    %23 = vector.load %arg5[%c0_12, %c0_13] : memref<1x64xf32, #tpu.memory_space<vmem>>, vector<1x64xf32>
    %24 = vector.broadcast %23 : vector<1x64xf32> to vector<512x64xf32>
    %25 = arith.addf %22, %24 : vector<512x64xf32>
    %26 = arith.addf %25, %0 : vector<512x64xf32>
    %c0_14 = arith.constant 0 : index
    %c0_15 = arith.constant 0 : index
    %27 = vector.load %arg6[%c0_14, %c0_15] : memref<512x64xf32, #tpu.memory_space<vmem>>, vector<512x64xf32>
    tpu.vector_store %arg6[%c0_14, %c0_15], %26 {strides = array<i32>} : memref<512x64xf32, #tpu.memory_space<vmem>>, vector<512x64xf32>,
    return
  }
  func.func @transform_0(%arg0: i32) -> (i32, i32) {
    %c0_i32 = arith.constant 0 : i32
    %c0_i32_0 = arith.constant 0 : i32
    return %arg0, %c0_i32 : i32, i32
  }
  func.func @transform_1(%arg0: i32) -> (i32, i32) {
    %c0_i32 = arith.constant 0 : i32
    %c0_i32_0 = arith.constant 0 : i32
    %c0_i32_1 = arith.constant 0 : i32
    return %c0_i32, %c0_i32_0 : i32, i32
  }
  func.func @transform_2(%arg0: i32) -> (i32, i32) {
    %c0_i32 = arith.constant 0 : i32
    %c0_i32_0 = arith.constant 0 : i32
    %c0_i32_1 = arith.constant 0 : i32
    return %c0_i32, %c0_i32_0 : i32, i32
  }
  func.func @transform_3(%arg0: i32) -> (i32, i32) {
    %c0_i32 = arith.constant 0 : i32
    %c0_i32_0 = arith.constant 0 : i32
    %c0_i32_1 = arith.constant 0 : i32
    return %c0_i32, %c0_i32_0 : i32, i32
  }
  func.func @transform_4(%arg0: i32) -> (i32, i32) {
    %c0_i32 = arith.constant 0 : i32
    %c0_i32_0 = arith.constant 0 : i32
    %c0_i32_1 = arith.constant 0 : i32
    return %c0_i32, %c0_i32_0 : i32, i32
  }
  func.func @transform_5(%arg0: i32) -> (i32, i32) {
    %c0_i32 = arith.constant 0 : i32
    %c0_i32_0 = arith.constant 0 : i32
    return %arg0, %c0_i32 : i32, i32
  }
}

module attributes {stable_mosaic.version = 11 : i64} {
  func.func @mbconv_pointwise_residual_kernel(%arg0: i32, %arg1: memref<512x64xf32, #tpu.memory_space<vmem>>, %arg2: memref<64x256xbf16, #tpu.memory_space<vmem>>, %arg3: memref<1x256xf32, #tpu.memory_space<vmem>>, %arg4: memref<256x64xbf16, #tpu.memory_space<vmem>>, %arg5: memref<1x64xf32, #tpu.memory_space<vmem>>, %arg6: memref<512x64xf32, #tpu.memory_space<vmem>>) attributes {dimension_semantics = [#tpu.dimension_semantics<parallel>], iteration_bounds = array<i64: 1>, scalar_prefetch = 0 : i64, scratch_operands = 0 : i64, tpu.core_type = #tpu.core_type<tc>, window_params = [{transform_indices = @transform_0, window_bounds = array<i64: 512, 64>}, {pipeline_mode = #tpu.pipeline_mode<synchronous>, transform_indices = @transform_1, window_bounds = array<i64: 64, 256>}, {pipeline_mode = #tpu.pipeline_mode<synchronous>, transform_indices = @transform_2, window_bounds = array<i64: 1, 256>}, {pipeline_mode = #tpu.pipeline_mode<synchronous>, transform_indices = @transform_3, window_bounds = array<i64: 256, 64>}, {pipeline_mode = #tpu.pipeline_mode<synchronous>, transform_indices = @transform_4, window_bounds = array<i64: 1, 64>}, {transform_indices = @transform_5, window_bounds = array<i64: 512, 64>}]} {
    %c0 = arith.constant 0 : index
    %c0_0 = arith.constant 0 : index
    %0 = vector.load %arg1[%c0, %c0_0] : memref<512x64xf32, #tpu.memory_space<vmem>>, vector<512x64xf32>
    %1 = arith.truncf %0 : vector<512x64xf32> to vector<512x64xbf16>
    %c0_1 = arith.constant 0 : index
    %c0_2 = arith.constant 0 : index
    %2 = vector.load %arg2[%c0_1, %c0_2] : memref<64x256xbf16, #tpu.memory_space<vmem>>, vector<64x256xbf16>
    %cst = arith.constant dense<0.000000e+00> : vector<512x256xf32>
    %3 = tpu.matmul %1, %2, %cst {dimension_numbers = #tpu.dot_dimension_numbers<[1], [0], [0], [1], [0, 0, 1, 1], [], []>} : vector<512x64xbf16>, vector<64x256xbf16>, vector<512x256xf32> -> vector<512x256xf32>
    %c0_3 = arith.constant 0 : index
    %c0_4 = arith.constant 0 : index
    %4 = vector.load %arg3[%c0_3, %c0_4] : memref<1x256xf32, #tpu.memory_space<vmem>>, vector<1x256xf32>
    %5 = vector.broadcast %4 : vector<1x256xf32> to vector<512x256xf32>
    %6 = arith.addf %3, %5 : vector<512x256xf32>
    %7 = arith.mulf %6, %6 : vector<512x256xf32>
    %8 = arith.mulf %6, %7 : vector<512x256xf32>
    %cst_5 = arith.constant 4.471500e-02 : f32
    %9 = vector.broadcast %cst_5 : f32 to vector<512x256xf32>
    %10 = arith.mulf %9, %8 : vector<512x256xf32>
    %11 = arith.addf %6, %10 : vector<512x256xf32>
    %cst_6 = arith.constant 0.797884583 : f32
    %12 = vector.broadcast %cst_6 : f32 to vector<512x256xf32>
    %13 = arith.mulf %12, %11 : vector<512x256xf32>
    %14 = math.tanh %13 : vector<512x256xf32>
    %cst_7 = arith.constant 1.000000e+00 : f32
    %15 = vector.broadcast %cst_7 : f32 to vector<512x256xf32>
    %16 = arith.addf %15, %14 : vector<512x256xf32>
    %cst_8 = arith.constant 5.000000e-01 : f32
    %17 = vector.broadcast %cst_8 : f32 to vector<512x256xf32>
    %18 = arith.mulf %17, %16 : vector<512x256xf32>
    %19 = arith.mulf %6, %18 : vector<512x256xf32>
    %20 = arith.truncf %19 : vector<512x256xf32> to vector<512x256xbf16>
    %c0_9 = arith.constant 0 : index
    %c0_10 = arith.constant 0 : index
    %21 = vector.load %arg4[%c0_9, %c0_10] : memref<256x64xbf16, #tpu.memory_space<vmem>>, vector<256x64xbf16>
    %cst_11 = arith.constant dense<0.000000e+00> : vector<512x64xf32>
    %22 = tpu.matmul %20, %21, %cst_11 {dimension_numbers = #tpu.dot_dimension_numbers<[1], [0], [0], [1], [0, 0, 1, 1], [], []>} : vector<512x256xbf16>, vector<256x64xbf16>, vector<512x64xf32> -> vector<512x64xf32>
    %c0_12 = arith.constant 0 : index
    %c0_13 = arith.constant 0 : index
    %23 = vector.load %arg5[%c0_12, %c0_13] : memref<1x64xf32, #tpu.memory_space<vmem>>, vector<1x64xf32>
    %24 = vector.broadcast %23 : vector<1x64xf32> to vector<512x64xf32>
    %25 = arith.addf %22, %24 : vector<512x64xf32>
    %26 = arith.addf %25, %0 : vector<512x64xf32>
    %c0_14 = arith.constant 0 : index
    %c0_15 = arith.constant 0 : index
    %27 = vector.load %arg6[%c0_14, %c0_15] : memref<512x64xf32, #tpu.memory_space<vmem>>, vector<512x64xf32>
    tpu.vector_store %arg6[%c0_14, %c0_15], %26 {strides = array<i32>} : memref<512x64xf32, #tpu.memory_space<vmem>>, vector<512x64xf32>,
    return
  }
  func.func @transform_0(%arg0: i32) -> (i32, i32) {
    %c0_i32 = arith.constant 0 : i32
    %c0_i32_0 = arith.constant 0 : i32
    return %arg0, %c0_i32 : i32, i32
  }
  func.func @transform_1(%arg0: i32) -> (i32, i32) {
    %c0_i32 = arith.constant 0 : i32
    %c0_i32_0 = arith.constant 0 : i32
    %c0_i32_1 = arith.constant 0 : i32
    return %c0_i32, %c0_i32_0 : i32, i32
  }
  func.func @transform_2(%arg0: i32) -> (i32, i32) {
    %c0_i32 = arith.constant 0 : i32
    %c0_i32_0 = arith.constant 0 : i32
    %c0_i32_1 = arith.constant 0 : i32
    return %c0_i32, %c0_i32_0 : i32, i32
  }
  func.func @transform_3(%arg0: i32) -> (i32, i32) {
    %c0_i32 = arith.constant 0 : i32
    %c0_i32_0 = arith.constant 0 : i32
    %c0_i32_1 = arith.constant 0 : i32
    return %c0_i32, %c0_i32_0 : i32, i32
  }
  func.func @transform_4(%arg0: i32) -> (i32, i32) {
    %c0_i32 = arith.constant 0 : i32
    %c0_i32_0 = arith.constant 0 : i32
    %c0_i32_1 = arith.constant 0 : i32
    return %c0_i32, %c0_i32_0 : i32, i32
  }
  func.func @transform_5(%arg0: i32) -> (i32, i32) {
    %c0_i32 = arith.constant 0 : i32
    %c0_i32_0 = arith.constant 0 : i32
    return %arg0, %c0_i32 : i32, i32
  }
}

</mosaic_0001>

<llo_original>
// kernel: tpu_custom_call.1
$region0: #{tpu_custom_call.1}
  #allocation0 [shape = 'u32[]', space=smem, size = 0x4, offset = 0x4, fixed_abs, tag = 'smem constant byte address 0x4 - core index']
  #allocation1 [shape = 'u32[144,128]{1,0:T(1,128)}', space=vmem, size = 0x12000, scoped, tag = 'internal scratch']
  %s0 = inlined_call_operand.vmem [shape: f32[512,64], index: 0, kind: input, shape index: {}]
  %s1 = inlined_call_operand.vmem [shape: bf16[64,256], index: 1, kind: input, shape index: {}]
  %s2 = inlined_call_operand.vmem [shape: f32[1,256], index: 2, kind: input, shape index: {}]
  %s3 = inlined_call_operand.vmem [shape: bf16[256,64], index: 3, kind: input, shape index: {}]
  %s4 = inlined_call_operand.vmem [shape: f32[1,64], index: 4, kind: input, shape index: {}]
  %s5 = inlined_call_operand.vmem [shape: f32[512,64], index: 5, kind: output, shape index: {}]
  %s6 = sld [smem:[#allocation0]]
  $region30: #{tpu_custom_call.1} parent=0
    _
  %s8 = ssub.s32 1, %s6
  %s9 = scalar_select 0, %s8, %s6
  // Predicated region
  $region2: #{tpu_custom_call.1} parent=0 // pred_check
    _
  $region3: #{tpu_custom_call.1} parent=0 // pred_check_branch
    %11 = sbr.rel (0) target = $region5
  $region4: #{tpu_custom_call.1} parent=0 // pred_region
    _
  $region5: #{tpu_custom_call.1} parent=0 // pred_fallthru
    _
  // Predicated region
  $region6: #{tpu_custom_call.1} parent=0 // pred_check
    _
  $region7: #{tpu_custom_call.1} parent=0 // pred_check_branch
    %13 = sbr.rel (0) target = $region9
  $region8: #{tpu_custom_call.1} parent=0 // pred_region
    _
  $region9: #{tpu_custom_call.1} parent=0 // pred_fallthru
    _
  // Predicated region
  $region10: #{tpu_custom_call.1} parent=0 // pred_check
    _
  $region11: #{tpu_custom_call.1} parent=0 // pred_check_branch
    %15 = sbr.rel (0) target = $region13
  $region12: #{tpu_custom_call.1} parent=0 // pred_region
    _
  $region13: #{tpu_custom_call.1} parent=0 // pred_fallthru
    _
  // Predicated region
  $region14: #{tpu_custom_call.1} parent=0 // pred_check
    _
  $region15: #{tpu_custom_call.1} parent=0 // pred_check_branch
    %17 = sbr.rel (0) target = $region17
  $region16: #{tpu_custom_call.1} parent=0 // pred_region
    _
  $region17: #{tpu_custom_call.1} parent=0 // pred_fallthru
    _
  // Predicated region
  $region18: #{tpu_custom_call.1} parent=0 // pred_check
    _
  $region19: #{tpu_custom_call.1} parent=0 // pred_check_branch
    %19 = sbr.rel (0) target = $region21
  $region20: #{tpu_custom_call.1} parent=0 // pred_region
    _
  $region21: #{tpu_custom_call.1} parent=0 // pred_fallthru
    _
  %v21 = vld [vmem:[%s0] sm:$0xff]
  %v22 = vld [vmem:[%s0 + $0x8] sm:$0xff]
  %v23 = vld [vmem:[%s0 + $0x10] sm:$0xff]
  %v24 = vld [vmem:[%s0 + $0x18] sm:$0xff]
  %v25 = vld [vmem:[%s0 + $0x20] sm:$0xff]
  %v26 = vld [vmem:[%s0 + $0x28] sm:$0xff]
  %v27 = vld [vmem:[%s0 + $0x30] sm:$0xff]
  %v28 = vld [vmem:[%s0 + $0x38] sm:$0xff]
  %v29 = vld [vmem:[%s0 + $0x40] sm:$0xff]
  %v30 = vld [vmem:[%s0 + $0x48] sm:$0xff]
  %v31 = vld [vmem:[%s0 + $0x50] sm:$0xff]
  %v32 = vld [vmem:[%s0 + $0x58] sm:$0xff]
  %v33 = vld [vmem:[%s0 + $0x60] sm:$0xff]
  %v34 = vld [vmem:[%s0 + $0x68] sm:$0xff]
  %v35 = vld [vmem:[%s0 + $0x70] sm:$0xff]
  %v36 = vld [vmem:[%s0 + $0x78] sm:$0xff]
  %v37 = vld [vmem:[%s0 + $0x80] sm:$0xff]
  %v38 = vld [vmem:[%s0 + $0x88] sm:$0xff]
  %v39 = vld [vmem:[%s0 + $0x90] sm:$0xff]
  %v40 = vld [vmem:[%s0 + $0x98] sm:$0xff]
  %v41 = vld [vmem:[%s0 + $0xa0] sm:$0xff]
  %v42 = vld [vmem:[%s0 + $0xa8] sm:$0xff]
  %v43 = vld [vmem:[%s0 + $0xb0] sm:$0xff]
  %v44 = vld [vmem:[%s0 + $0xb8] sm:$0xff]
  %v45 = vld [vmem:[%s0 + $0xc0] sm:$0xff]
  %v46 = vld [vmem:[%s0 + $0xc8] sm:$0xff]
  %v47 = vld [vmem:[%s0 + $0xd0] sm:$0xff]
  %v48 = vld [vmem:[%s0 + $0xd8] sm:$0xff]
  %v49 = vld [vmem:[%s0 + $0xe0] sm:$0xff]
  %v50 = vld [vmem:[%s0 + $0xe8] sm:$0xff]
  %v51 = vld [vmem:[%s0 + $0xf0] sm:$0xff]
  %v52 = vld [vmem:[%s0 + $0xf8] sm:$0xff]
  %v53 = vld [vmem:[%s0 + $0x100] sm:$0xff]
  %v54 = vld [vmem:[%s0 + $0x108] sm:$0xff]
  %v55 = vld [vmem:[%s0 + $0x110] sm:$0xff]
  %v56 = vld [vmem:[%s0 + $0x118] sm:$0xff]
  %v57 = vld [vmem:[%s0 + $0x120] sm:$0xff]
  %v58 = vld [vmem:[%s0 + $0x128] sm:$0xff]
  %v59 = vld [vmem:[%s0 + $0x130] sm:$0xff]
  %v60 = vld [vmem:[%s0 + $0x138] sm:$0xff]
  %v61 = vld [vmem:[%s0 + $0x140] sm:$0xff]
  %v62 = vld [vmem:[%s0 + $0x148] sm:$0xff]
  %v63 = vld [vmem:[%s0 + $0x150] sm:$0xff]
  %v64 = vld [vmem:[%s0 + $0x158] sm:$0xff]
  %v65 = vld [vmem:[%s0 + $0x160] sm:$0xff]
  %v66 = vld [vmem:[%s0 + $0x168] sm:$0xff]
  %v67 = vld [vmem:[%s0 + $0x170] sm:$0xff]
  %v68 = vld [vmem:[%s0 + $0x178] sm:$0xff]
  %v69 = vld [vmem:[%s0 + $0x180] sm:$0xff]
  %v70 = vld [vmem:[%s0 + $0x188] sm:$0xff]
  %v71 = vld [vmem:[%s0 + $0x190] sm:$0xff]
  %v72 = vld [vmem:[%s0 + $0x198] sm:$0xff]
  %v73 = vld [vmem:[%s0 + $0x1a0] sm:$0xff]
  %v74 = vld [vmem:[%s0 + $0x1a8] sm:$0xff]
  %v75 = vld [vmem:[%s0 + $0x1b0] sm:$0xff]
  %v76 = vld [vmem:[%s0 + $0x1b8] sm:$0xff]
  %v77 = vld [vmem:[%s0 + $0x1c0] sm:$0xff]
  %v78 = vld [vmem:[%s0 + $0x1c8] sm:$0xff]
  %v79 = vld [vmem:[%s0 + $0x1d0] sm:$0xff]
  %v80 = vld [vmem:[%s0 + $0x1d8] sm:$0xff]
  %v81 = vld [vmem:[%s0 + $0x1e0] sm:$0xff]
  %v82 = vld [vmem:[%s0 + $0x1e8] sm:$0xff]
  %v83 = vld [vmem:[%s0 + $0x1f0] sm:$0xff]
  %v84 = vld [vmem:[%s0 + $0x1f8] sm:$0xff]
  %v85 = vpack.c.bf16 %v22, %v21
  %v86 = vpack.c.bf16 %v24, %v23
  %v87 = vpack.c.bf16 %v26, %v25
  %v88 = vpack.c.bf16 %v28, %v27
  %v89 = vpack.c.bf16 %v30, %v29
  %v90 = vpack.c.bf16 %v32, %v31
  %v91 = vpack.c.bf16 %v34, %v33
  %v92 = vpack.c.bf16 %v36, %v35
  %v93 = vpack.c.bf16 %v38, %v37
  %v94 = vpack.c.bf16 %v40, %v39
  %v95 = vpack.c.bf16 %v42, %v41
  %v96 = vpack.c.bf16 %v44, %v43
  %v97 = vpack.c.bf16 %v46, %v45
  %v98 = vpack.c.bf16 %v48, %v47
  %v99 = vpack.c.bf16 %v50, %v49
  %v100 = vpack.c.bf16 %v52, %v51
  %v101 = vpack.c.bf16 %v54, %v53
  %v102 = vpack.c.bf16 %v56, %v55
  %v103 = vpack.c.bf16 %v58, %v57
  %v104 = vpack.c.bf16 %v60, %v59
  %v105 = vpack.c.bf16 %v62, %v61
  %v106 = vpack.c.bf16 %v64, %v63
  %v107 = vpack.c.bf16 %v66, %v65
  %v108 = vpack.c.bf16 %v68, %v67
  %v109 = vpack.c.bf16 %v70, %v69
  %v110 = vpack.c.bf16 %v72, %v71
  %v111 = vpack.c.bf16 %v74, %v73
  %v112 = vpack.c.bf16 %v76, %v75
  %v113 = vpack.c.bf16 %v78, %v77
  %v114 = vpack.c.bf16 %v80, %v79
  %v115 = vpack.c.bf16 %v82, %v81
  %v116 = vpack.c.bf16 %v84, %v83
  %v117 = vld [vmem:[%s1] sm:$0xff]
  %v118 = vld [vmem:[%s1 + $0x8] sm:$0xff]
  %v119 = vld [vmem:[%s1 + $0x10] sm:$0xff]
  %v120 = vld [vmem:[%s1 + $0x18] sm:$0xff]
  %v121 = vld [vmem:[%s1 + $0x20] sm:$0xff]
  %v122 = vld [vmem:[%s1 + $0x28] sm:$0xff]
  %v123 = vld [vmem:[%s1 + $0x30] sm:$0xff]
  %v124 = vld [vmem:[%s1 + $0x38] sm:$0xff]
  %v125 = vld [vmem:[%s2] sm:$0x3]
  %v127 = vlaneseq
  %v128 = vshrl.u32 %v127, 7
  %v129 = vsub.s32 0, %v128
  %v130 = vrot.slane %v125, %v129
  %v131 = vlaneseq
  %v132 = vshrl.u32 %v131, 7
  %v133 = vsub.s32 1, %v132
  %v134 = vrot.slane %v125, %v133
  %v145 = vunpack.c.l.b16 %v117
  %v146 = vunpack.c.h.b16 %v117
  %v147 = vunpack.c.l.b16 %v118
  %v148 = vunpack.c.h.b16 %v118
  %v149 = vunpack.c.l.b16 %v119
  %v150 = vunpack.c.h.b16 %v119
  %v151 = vunpack.c.l.b16 %v120
  %v152 = vunpack.c.h.b16 %v120
  %v153 = vunpack.c.l.b16 %v121
  %v154 = vunpack.c.h.b16 %v121
  %v155 = vunpack.c.l.b16 %v122
  %v156 = vunpack.c.h.b16 %v122
  %v157 = vunpack.c.l.b16 %v123
  %v158 = vunpack.c.h.b16 %v123
  %v159 = vunpack.c.l.b16 %v124
  %v160 = vunpack.c.h.b16 %v124
  %v161 = vpack.c.b16 %v147, %v145
  %v162 = vpack.c.b16 %v148, %v146
  %v163 = vpack.c.b16 %v151, %v149
  %v164 = vpack.c.b16 %v152, %v150
  %v165 = vpack.c.b16 %v155, %v153
  %v166 = vpack.c.b16 %v156, %v154
  %v167 = vpack.c.b16 %v159, %v157
  %v168 = vpack.c.b16 %v160, %v158
  %vm177 = vcmask 523264
  %v179 = vsel %vm177, %v85, 0
  %v182 = vsel %vm177, %v86, 0
  %v185 = vsel %vm177, %v87, 0
  %v188 = vsel %vm177, %v88, 0
  %v191 = vsel %vm177, %v89, 0
  %v194 = vsel %vm177, %v90, 0
  %v197 = vsel %vm177, %v91, 0
  %v200 = vsel %vm177, %v92, 0
  %v203 = vsel %vm177, %v93, 0
  %v206 = vsel %vm177, %v94, 0
  %v209 = vsel %vm177, %v95, 0
  %v212 = vsel %vm177, %v96, 0
  %v215 = vsel %vm177, %v97, 0
  %v218 = vsel %vm177, %v98, 0
  %v221 = vsel %vm177, %v99, 0
  %v224 = vsel %vm177, %v100, 0
  %v227 = vsel %vm177, %v101, 0
  %v230 = vsel %vm177, %v102, 0
  %v233 = vsel %vm177, %v103, 0
  %v236 = vsel %vm177, %v104, 0
  %v239 = vsel %vm177, %v105, 0
  %v242 = vsel %vm177, %v106, 0
  %v245 = vsel %vm177, %v107, 0
  %v248 = vsel %vm177, %v108, 0
  %v251 = vsel %vm177, %v109, 0
  %v254 = vsel %vm177, %v110, 0
  %v257 = vsel %vm177, %v111, 0
  %v260 = vsel %vm177, %v112, 0
  %v263 = vsel %vm177, %v113, 0
  %v266 = vsel %vm177, %v114, 0
  %v269 = vsel %vm177, %v115, 0
  %v272 = vsel %vm177, %v116, 0
  %274 = vmatprep.subr.bf16.mxu0 %v162
  %275 = vmatpush1.bf16.msra.mxu0 %v161
  %276 = vmatprep.subr.bf16.mxu0 %v164
  %277 = vmatpush1.bf16.msra.mxu0 %v163
  %278 = vmatprep.subr.bf16.mxu0 %v166
  %279 = vmatpush1.bf16.msra.mxu0 %v165
  %280 = vmatprep.subr.bf16.mxu0 %v168
  %281 = vmatpush1.bf16.msra.mxu0 %v167
  %282 = vmatprep.subr.bf16.mxu0 0
  %283 = vmatpush1.bf16.msra.mxu0 0
  %284 = vmatprep.subr.bf16.mxu0 0
  %285 = vmatpush1.bf16.msra.mxu0 0
  %286 = vmatprep.subr.bf16.mxu0 0
  %287 = vmatpush1.bf16.msra.mxu0 0
  %288 = vmatprep.subr.bf16.mxu0 0
  %289 = vmatpush1.bf16.msra.mxu0 0
  %290 = vmatprep.subr.bf16.mxu0 0
  %291 = vmatpush1.bf16.msra.mxu0 0
  %292 = vmatprep.subr.bf16.mxu0 0
  %293 = vmatpush1.bf16.msra.mxu0 0
  %294 = vmatprep.subr.bf16.mxu0 0
  %295 = vmatpush1.bf16.msra.mxu0 0
  %296 = vmatprep.subr.bf16.mxu0 0
  %297 = vmatpush1.bf16.msra.mxu0 0
  %298 = vmatprep.subr.bf16.mxu0 0
  %299 = vmatpush1.bf16.msra.mxu0 0
  %300 = vmatprep.subr.bf16.mxu0 0
  %301 = vmatpush1.bf16.msra.mxu0 0
  %302 = vmatprep.subr.bf16.mxu0 0
  %303 = vmatpush1.bf16.msra.mxu0 0
  %304 = vmatprep.subr.bf16.mxu0 0
  %305 = vmatpush1.bf16.msra.mxu0 0
  %306 = vmatprep.mubr.bf16.mxu0 0
  %307 = vmatmul.mubr.bf16.gmra.mrb[0].mxu0 %v179
  %v308 = vpop.f32.mrb[0].mxu0
  %v309 = vadd.f32 %v130, %v308
  %v310 = vpop.f32.mrb[0].mxu0
  %v311 = vadd.f32 %v134, %v310
  %v312 = vpop.f32.mrb[0].mxu0
  %v313 = vadd.f32 %v130, %v312
  %v314 = vpop.f32.mrb[0].mxu0
  %v315 = vadd.f32 %v134, %v314
  %316 = vmatprep.mubr.bf16.mxu0 0
  %317 = vmatmul.mubr.bf16.gmra.mrb[0].mxu0 %v182
  %v318 = vpop.f32.mrb[0].mxu0
  %v319 = vadd.f32 %v130, %v318
  %v320 = vpop.f32.mrb[0].mxu0
  %v321 = vadd.f32 %v134, %v320
  %v322 = vpop.f32.mrb[0].mxu0
  %v323 = vadd.f32 %v130, %v322
  %v324 = vpop.f32.mrb[0].mxu0
  %v325 = vadd.f32 %v134, %v324
  %326 = vmatprep.mubr.bf16.mxu0 0
  %327 = vmatmul.mubr.bf16.gmra.mrb[0].mxu0 %v185
  %v328 = vpop.f32.mrb[0].mxu0
  %v329 = vadd.f32 %v130, %v328
  %v330 = vpop.f32.mrb[0].mxu0
  %v331 = vadd.f32 %v134, %v330
  %v332 = vpop.f32.mrb[0].mxu0
  %v333 = vadd.f32 %v130, %v332
  %v334 = vpop.f32.mrb[0].mxu0
  %v335 = vadd.f32 %v134, %v334
  %336 = vmatprep.mubr.bf16.mxu0 0
  %337 = vmatmul.mubr.bf16.gmra.mrb[0].mxu0 %v188
  %v338 = vpop.f32.mrb[0].mxu0
  %v339 = vadd.f32 %v130, %v338
  %v340 = vpop.f32.mrb[0].mxu0
  %v341 = vadd.f32 %v134, %v340
  %v342 = vpop.f32.mrb[0].mxu0
  %v343 = vadd.f32 %v130, %v342
  %v344 = vpop.f32.mrb[0].mxu0
  %v345 = vadd.f32 %v134, %v344
  %346 = vmatprep.mubr.bf16.mxu0 0
  %347 = vmatmul.mubr.bf16.gmra.mrb[0].mxu0 %v191
  %v348 = vpop.f32.mrb[0].mxu0
  %v349 = vadd.f32 %v130, %v348
  %v350 = vpop.f32.mrb[0].mxu0
  %v351 = vadd.f32 %v134, %v350
  %v352 = vpop.f32.mrb[0].mxu0
  %v353 = vadd.f32 %v130, %v352
  %v354 = vpop.f32.mrb[0].mxu0
  %v355 = vadd.f32 %v134, %v354
  %356 = vmatprep.mubr.bf16.mxu0 0
  %357 = vmatmul.mubr.bf16.gmra.mrb[0].mxu0 %v194
  %v358 = vpop.f32.mrb[0].mxu0
  %v359 = vadd.f32 %v130, %v358
  %v360 = vpop.f32.mrb[0].mxu0
  %v361 = vadd.f32 %v134, %v360
  %v362 = vpop.f32.mrb[0].mxu0
  %v363 = vadd.f32 %v130, %v362
  %v364 = vpop.f32.mrb[0].mxu0
  %v365 = vadd.f32 %v134, %v364
  %366 = vmatprep.mubr.bf16.mxu0 0
  %367 = vmatmul.mubr.bf16.gmra.mrb[0].mxu0 %v197
  %v368 = vpop.f32.mrb[0].mxu0
  %v369 = vadd.f32 %v130, %v368
  %v370 = vpop.f32.mrb[0].mxu0
  %v371 = vadd.f32 %v134, %v370
  %v372 = vpop.f32.mrb[0].mxu0
  %v373 = vadd.f32 %v130, %v372
  %v374 = vpop.f32.mrb[0].mxu0
  %v375 = vadd.f32 %v134, %v374
  %376 = vmatprep.mubr.bf16.mxu0 0
  %377 = vmatmul.mubr.bf16.gmra.mrb[0].mxu0 %v200
  %v378 = vpop.f32.mrb[0].mxu0
  %v379 = vadd.f32 %v130, %v378
  %v380 = vpop.f32.mrb[0].mxu0
  %v381 = vadd.f32 %v134, %v380
  %v382 = vpop.f32.mrb[0].mxu0
  %v383 = vadd.f32 %v130, %v382
  %v384 = vpop.f32.mrb[0].mxu0
  %v385 = vadd.f32 %v134, %v384
  %386 = vmatprep.mubr.bf16.mxu0 0
  %387 = vmatmul.mubr.bf16.gmra.mrb[0].mxu0 %v203
  %v388 = vpop.f32.mrb[0].mxu0
  %v389 = vadd.f32 %v130, %v388
  %v390 = vpop.f32.mrb[0].mxu0
  %v391 = vadd.f32 %v134, %v390
  %v392 = vpop.f32.mrb[0].mxu0
  %v393 = vadd.f32 %v130, %v392
  %v394 = vpop.f32.mrb[0].mxu0
  %v395 = vadd.f32 %v134, %v394
  %396 = vmatprep.mubr.bf16.mxu0 0
  %397 = vmatmul.mubr.bf16.gmra.mrb[0].mxu0 %v206
  %v398 = vpop.f32.mrb[0].mxu0
  %v399 = vadd.f32 %v130, %v398
  %v400 = vpop.f32.mrb[0].mxu0
  %v401 = vadd.f32 %v134, %v400
  %v402 = vpop.f32.mrb[0].mxu0
  %v403 = vadd.f32 %v130, %v402
  %v404 = vpop.f32.mrb[0].mxu0
  %v405 = vadd.f32 %v134, %v404
  %406 = vmatprep.mubr.bf16.mxu0 0
  %407 = vmatmul.mubr.bf16.gmra.mrb[0].mxu0 %v209
  %v408 = vpop.f32.mrb[0].mxu0
  %v409 = vadd.f32 %v130, %v408
  %v410 = vpop.f32.mrb[0].mxu0
  %v411 = vadd.f32 %v134, %v410
  %v412 = vpop.f32.mrb[0].mxu0
  %v413 = vadd.f32 %v130, %v412
  %v414 = vpop.f32.mrb[0].mxu0
  %v415 = vadd.f32 %v134, %v414
  %416 = vmatprep.mubr.bf16.mxu0 0
  %417 = vmatmul.mubr.bf16.gmra.mrb[0].mxu0 %v212
  %v418 = vpop.f32.mrb[0].mxu0
  %v419 = vadd.f32 %v130, %v418
  %v420 = vpop.f32.mrb[0].mxu0
  %v421 = vadd.f32 %v134, %v420
  %v422 = vpop.f32.mrb[0].mxu0
  %v423 = vadd.f32 %v130, %v422
  %v424 = vpop.f32.mrb[0].mxu0
  %v425 = vadd.f32 %v134, %v424
  %426 = vmatprep.mubr.bf16.mxu0 0
  %427 = vmatmul.mubr.bf16.gmra.mrb[0].mxu0 %v215
  %v428 = vpop.f32.mrb[0].mxu0
  %v429 = vadd.f32 %v130, %v428
  %v430 = vpop.f32.mrb[0].mxu0
  %v431 = vadd.f32 %v134, %v430
  %v432 = vpop.f32.mrb[0].mxu0
  %v433 = vadd.f32 %v130, %v432
  %v434 = vpop.f32.mrb[0].mxu0
  %v435 = vadd.f32 %v134, %v434
  %436 = vmatprep.mubr.bf16.mxu0 0
  %437 = vmatmul.mubr.bf16.gmra.mrb[0].mxu0 %v218
  %v438 = vpop.f32.mrb[0].mxu0
  %v439 = vadd.f32 %v130, %v438
  %v440 = vpop.f32.mrb[0].mxu0
  %v441 = vadd.f32 %v134, %v440
  %v442 = vpop.f32.mrb[0].mxu0
  %v443 = vadd.f32 %v130, %v442
  %v444 = vpop.f32.mrb[0].mxu0
  %v445 = vadd.f32 %v134, %v444
  %446 = vmatprep.mubr.bf16.mxu0 0
  %447 = vmatmul.mubr.bf16.gmra.mrb[0].mxu0 %v221
  %v448 = vpop.f32.mrb[0].mxu0
  %v449 = vadd.f32 %v130, %v448
  %v450 = vpop.f32.mrb[0].mxu0
  %v451 = vadd.f32 %v134, %v450
  %v452 = vpop.f32.mrb[0].mxu0
  %v453 = vadd.f32 %v130, %v452
  %v454 = vpop.f32.mrb[0].mxu0
  %v455 = vadd.f32 %v134, %v454
  %456 = vmatprep.mubr.bf16.mxu0 0
  %457 = vmatmul.mubr.bf16.gmra.mrb[0].mxu0 %v224
  %v458 = vpop.f32.mrb[0].mxu0
  %v459 = vadd.f32 %v130, %v458
  %v460 = vpop.f32.mrb[0].mxu0
  %v461 = vadd.f32 %v134, %v460
  %v462 = vpop.f32.mrb[0].mxu0
  %v463 = vadd.f32 %v130, %v462
  %v464 = vpop.f32.mrb[0].mxu0
  %v465 = vadd.f32 %v134, %v464
  %466 = vmatprep.mubr.bf16.mxu0 0
  %467 = vmatmul.mubr.bf16.gmra.mrb[0].mxu0 %v227
  %v468 = vpop.f32.mrb[0].mxu0
  %v469 = vadd.f32 %v130, %v468
  %v470 = vpop.f32.mrb[0].mxu0
  %v471 = vadd.f32 %v134, %v470
  %v472 = vpop.f32.mrb[0].mxu0
  %v473 = vadd.f32 %v130, %v472
  %v474 = vpop.f32.mrb[0].mxu0
  %v475 = vadd.f32 %v134, %v474
  %476 = vmatprep.mubr.bf16.mxu0 0
  %477 = vmatmul.mubr.bf16.gmra.mrb[0].mxu0 %v230
  %v478 = vpop.f32.mrb[0].mxu0
  %v479 = vadd.f32 %v130, %v478
  %v480 = vpop.f32.mrb[0].mxu0
  %v481 = vadd.f32 %v134, %v480
  %v482 = vpop.f32.mrb[0].mxu0
  %v483 = vadd.f32 %v130, %v482
  %v484 = vpop.f32.mrb[0].mxu0
  %v485 = vadd.f32 %v134, %v484
  %486 = vmatprep.mubr.bf16.mxu0 0
  %487 = vmatmul.mubr.bf16.gmra.mrb[0].mxu0 %v233
  %v488 = vpop.f32.mrb[0].mxu0
  %v489 = vadd.f32 %v130, %v488
  %v490 = vpop.f32.mrb[0].mxu0
  %v491 = vadd.f32 %v134, %v490
  %v492 = vpop.f32.mrb[0].mxu0
  %v493 = vadd.f32 %v130, %v492
  %v494 = vpop.f32.mrb[0].mxu0
  %v495 = vadd.f32 %v134, %v494
  %496 = vmatprep.mubr.bf16.mxu0 0
  %497 = vmatmul.mubr.bf16.gmra.mrb[0].mxu0 %v236
  %v498 = vpop.f32.mrb[0].mxu0
  %v499 = vadd.f32 %v130, %v498
  %v500 = vpop.f32.mrb[0].mxu0
  %v501 = vadd.f32 %v134, %v500
  %v502 = vpop.f32.mrb[0].mxu0
  %v503 = vadd.f32 %v130, %v502
  %v504 = vpop.f32.mrb[0].mxu0
  %v505 = vadd.f32 %v134, %v504
  %506 = vmatprep.mubr.bf16.mxu0 0
  %507 = vmatmul.mubr.bf16.gmra.mrb[0].mxu0 %v239
  %v508 = vpop.f32.mrb[0].mxu0
  %v509 = vadd.f32 %v130, %v508
  %v510 = vpop.f32.mrb[0].mxu0
  %v511 = vadd.f32 %v134, %v510
  %v512 = vpop.f32.mrb[0].mxu0
  %v513 = vadd.f32 %v130, %v512
  %v514 = vpop.f32.mrb[0].mxu0
  %v515 = vadd.f32 %v134, %v514
  %516 = vmatprep.mubr.bf16.mxu0 0
  %517 = vmatmul.mubr.bf16.gmra.mrb[0].mxu0 %v242
  %v518 = vpop.f32.mrb[0].mxu0
  %v519 = vadd.f32 %v130, %v518
  %v520 = vpop.f32.mrb[0].mxu0
  %v521 = vadd.f32 %v134, %v520
  %v522 = vpop.f32.mrb[0].mxu0
  %v523 = vadd.f32 %v130, %v522
  %v524 = vpop.f32.mrb[0].mxu0
  %v525 = vadd.f32 %v134, %v524
  %526 = vmatprep.mubr.bf16.mxu0 0
  %527 = vmatmul.mubr.bf16.gmra.mrb[0].mxu0 %v245
  %v528 = vpop.f32.mrb[0].mxu0
  %v529 = vadd.f32 %v130, %v528
  %v530 = vpop.f32.mrb[0].mxu0
  %v531 = vadd.f32 %v134, %v530
  %v532 = vpop.f32.mrb[0].mxu0
  %v533 = vadd.f32 %v130, %v532
  %v534 = vpop.f32.mrb[0].mxu0
  %v535 = vadd.f32 %v134, %v534
  %536 = vmatprep.mubr.bf16.mxu0 0
  %537 = vmatmul.mubr.bf16.gmra.mrb[0].mxu0 %v248
  %v538 = vpop.f32.mrb[0].mxu0
  %v539 = vadd.f32 %v130, %v538
  %v540 = vpop.f32.mrb[0].mxu0
  %v541 = vadd.f32 %v134, %v540
  %v542 = vpop.f32.mrb[0].mxu0
  %v543 = vadd.f32 %v130, %v542
  %v544 = vpop.f32.mrb[0].mxu0
  %v545 = vadd.f32 %v134, %v544
  %546 = vmatprep.mubr.bf16.mxu0 0
  %547 = vmatmul.mubr.bf16.gmra.mrb[0].mxu0 %v251
  %v548 = vpop.f32.mrb[0].mxu0
  %v549 = vadd.f32 %v130, %v548
  %v550 = vpop.f32.mrb[0].mxu0
  %v551 = vadd.f32 %v134, %v550
  %v552 = vpop.f32.mrb[0].mxu0
  %v553 = vadd.f32 %v130, %v552
  %v554 = vpop.f32.mrb[0].mxu0
  %v555 = vadd.f32 %v134, %v554
  %556 = vmatprep.mubr.bf16.mxu0 0
  %557 = vmatmul.mubr.bf16.gmra.mrb[0].mxu0 %v254
  %v558 = vpop.f32.mrb[0].mxu0
  %v559 = vadd.f32 %v130, %v558
  %v560 = vpop.f32.mrb[0].mxu0
  %v561 = vadd.f32 %v134, %v560
  %v562 = vpop.f32.mrb[0].mxu0
  %v563 = vadd.f32 %v130, %v562
  %v564 = vpop.f32.mrb[0].mxu0
  %v565 = vadd.f32 %v134, %v564
  %566 = vmatprep.mubr.bf16.mxu0 0
  %567 = vmatmul.mubr.bf16.gmra.mrb[0].mxu0 %v257
  %v568 = vpop.f32.mrb[0].mxu0
  %v569 = vadd.f32 %v130, %v568
  %v570 = vpop.f32.mrb[0].mxu0
  %v571 = vadd.f32 %v134, %v570
  %v572 = vpop.f32.mrb[0].mxu0
  %v573 = vadd.f32 %v130, %v572
  %v574 = vpop.f32.mrb[0].mxu0
  %v575 = vadd.f32 %v134, %v574
  %576 = vmatprep.mubr.bf16.mxu0 0
  %577 = vmatmul.mubr.bf16.gmra.mrb[0].mxu0 %v260
  %v578 = vpop.f32.mrb[0].mxu0
  %v579 = vadd.f32 %v130, %v578
  %v580 = vpop.f32.mrb[0].mxu0
  %v581 = vadd.f32 %v134, %v580
  %v582 = vpop.f32.mrb[0].mxu0
  %v583 = vadd.f32 %v130, %v582
  %v584 = vpop.f32.mrb[0].mxu0
  %v585 = vadd.f32 %v134, %v584
  %586 = vmatprep.mubr.bf16.mxu0 0
  %587 = vmatmul.mubr.bf16.gmra.mrb[0].mxu0 %v263
  %v588 = vpop.f32.mrb[0].mxu0
  %v589 = vadd.f32 %v130, %v588
  %v590 = vpop.f32.mrb[0].mxu0
  %v591 = vadd.f32 %v134, %v590
  %v592 = vpop.f32.mrb[0].mxu0
  %v593 = vadd.f32 %v130, %v592
  %v594 = vpop.f32.mrb[0].mxu0
  %v595 = vadd.f32 %v134, %v594
  %596 = vmatprep.mubr.bf16.mxu0 0
  %597 = vmatmul.mubr.bf16.gmra.mrb[0].mxu0 %v266
  %v598 = vpop.f32.mrb[0].mxu0
  %v599 = vadd.f32 %v130, %v598
  %v600 = vpop.f32.mrb[0].mxu0
  %v601 = vadd.f32 %v134, %v600
  %v602 = vpop.f32.mrb[0].mxu0
  %v603 = vadd.f32 %v130, %v602
  %v604 = vpop.f32.mrb[0].mxu0
  %v605 = vadd.f32 %v134, %v604
  %606 = vmatprep.mubr.bf16.mxu0 0
  %607 = vmatmul.mubr.bf16.gmra.mrb[0].mxu0 %v269
  %v608 = vpop.f32.mrb[0].mxu0
  %v609 = vadd.f32 %v130, %v608
  %v610 = vpop.f32.mrb[0].mxu0
  %v611 = vadd.f32 %v134, %v610
  %v612 = vpop.f32.mrb[0].mxu0
  %v613 = vadd.f32 %v130, %v612
  %v614 = vpop.f32.mrb[0].mxu0
  %v615 = vadd.f32 %v134, %v614
  %616 = vmatprep.mubr.bf16.mxu0 0
  %617 = vmatmul.mubr.bf16.gmra.mrb[0].mxu0 %v272
  %v618 = vpop.f32.mrb[0].mxu0
  %v619 = vadd.f32 %v130, %v618
  %v620 = vpop.f32.mrb[0].mxu0
  %v621 = vadd.f32 %v134, %v620
  %v622 = vpop.f32.mrb[0].mxu0
  %v623 = vadd.f32 %v130, %v622
  %v624 = vpop.f32.mrb[0].mxu0
  %v625 = vadd.f32 %v134, %v624
  %626 = vdwg.mxu0
  %v627 = vmul.f32 %v309, %v309
  %v628 = vmul.f32 %v311, %v311
  %v629 = vmul.f32 %v313, %v313
  %v630 = vmul.f32 %v315, %v315
  %v631 = vmul.f32 %v319, %v319
  %v632 = vmul.f32 %v321, %v321
  %v633 = vmul.f32 %v323, %v323
  %v634 = vmul.f32 %v325, %v325
  %v635 = vmul.f32 %v329, %v329
  %v636 = vmul.f32 %v331, %v331
  %v637 = vmul.f32 %v333, %v333
  %v638 = vmul.f32 %v335, %v335
  %v639 = vmul.f32 %v339, %v339
  %v640 = vmul.f32 %v341, %v341
  %v641 = vmul.f32 %v343, %v343
  %v642 = vmul.f32 %v345, %v345
  %v643 = vmul.f32 %v349, %v349
  %v644 = vmul.f32 %v351, %v351
  %v645 = vmul.f32 %v353, %v353
  %v646 = vmul.f32 %v355, %v355
  %v647 = vmul.f32 %v359, %v359
  %v648 = vmul.f32 %v361, %v361
  %v649 = vmul.f32 %v363, %v363
  %v650 = vmul.f32 %v365, %v365
  %v651 = vmul.f32 %v369, %v369
  %v652 = vmul.f32 %v371, %v371
  %v653 = vmul.f32 %v373, %v373
  %v654 = vmul.f32 %v375, %v375
  %v655 = vmul.f32 %v379, %v379
  %v656 = vmul.f32 %v381, %v381
  %v657 = vmul.f32 %v383, %v383
  %v658 = vmul.f32 %v385, %v385
  %v659 = vmul.f32 %v389, %v389
  %v660 = vmul.f32 %v391, %v391
  %v661 = vmul.f32 %v393, %v393
  %v662 = vmul.f32 %v395, %v395
  %v663 = vmul.f32 %v399, %v399
  %v664 = vmul.f32 %v401, %v401
  %v665 = vmul.f32 %v403, %v403
  %v666 = vmul.f32 %v405, %v405
  %v667 = vmul.f32 %v409, %v409
  %v668 = vmul.f32 %v411, %v411
  %v669 = vmul.f32 %v413, %v413
  %v670 = vmul.f32 %v415, %v415
  %v671 = vmul.f32 %v419, %v419
  %v672 = vmul.f32 %v421, %v421
  %v673 = vmul.f32 %v423, %v423
  %v674 = vmul.f32 %v425, %v425
  %v675 = vmul.f32 %v429, %v429
  %v676 = vmul.f32 %v431, %v431
  %v677 = vmul.f32 %v433, %v433
  %v678 = vmul.f32 %v435, %v435
  %v679 = vmul.f32 %v439, %v439
  %v680 = vmul.f32 %v441, %v441
  %v681 = vmul.f32 %v443, %v443
  %v682 = vmul.f32 %v445, %v445
  %v683 = vmul.f32 %v449, %v449
  %v684 = vmul.f32 %v451, %v451
  %v685 = vmul.f32 %v453, %v453
  %v686 = vmul.f32 %v455, %v455
  %v687 = vmul.f32 %v459, %v459
  %v688 = vmul.f32 %v461, %v461
  %v689 = vmul.f32 %v463, %v463
  %v690 = vmul.f32 %v465, %v465
  %v691 = vmul.f32 %v469, %v469
  %v692 = vmul.f32 %v471, %v471
  %v693 = vmul.f32 %v473, %v473
  %v694 = vmul.f32 %v475, %v475
  %v695 = vmul.f32 %v479, %v479
  %v696 = vmul.f32 %v481, %v481
  %v697 = vmul.f32 %v483, %v483
  %v698 = vmul.f32 %v485, %v485
  %v699 = vmul.f32 %v489, %v489
  %v700 = vmul.f32 %v491, %v491
  %v701 = vmul.f32 %v493, %v493
  %v702 = vmul.f32 %v495, %v495
  %v703 = vmul.f32 %v499, %v499
  %v704 = vmul.f32 %v501, %v501
  %v705 = vmul.f32 %v503, %v503
  %v706 = vmul.f32 %v505, %v505
  %v707 = vmul.f32 %v509, %v509
  %v708 = vmul.f32 %v511, %v511
  %v709 = vmul.f32 %v513, %v513
  %v710 = vmul.f32 %v515, %v515
  %v711 = vmul.f32 %v519, %v519
  %v712 = vmul.f32 %v521, %v521
  %v713 = vmul.f32 %v523, %v523
  %v714 = vmul.f32 %v525, %v525
  %v715 = vmul.f32 %v529, %v529
  %v716 = vmul.f32 %v531, %v531
  %v717 = vmul.f32 %v533, %v533
  %v718 = vmul.f32 %v535, %v535
  %v719 = vmul.f32 %v539, %v539
  %v720 = vmul.f32 %v541, %v541
  %v721 = vmul.f32 %v543, %v543
  %v722 = vmul.f32 %v545, %v545
  %v723 = vmul.f32 %v549, %v549
  %v724 = vmul.f32 %v551, %v551
  %v725 = vmul.f32 %v553, %v553
  %v726 = vmul.f32 %v555, %v555
  %v727 = vmul.f32 %v559, %v559
  %v728 = vmul.f32 %v561, %v561
  %v729 = vmul.f32 %v563, %v563
  %v730 = vmul.f32 %v565, %v565
  %v731 = vmul.f32 %v569, %v569
  %v732 = vmul.f32 %v571, %v571
  %v733 = vmul.f32 %v573, %v573
  %v734 = vmul.f32 %v575, %v575
  %v735 = vmul.f32 %v579, %v579
  %v736 = vmul.f32 %v581, %v581
  %v737 = vmul.f32 %v583, %v583
  %v738 = vmul.f32 %v585, %v585
  %v739 = vmul.f32 %v589, %v589
  %v740 = vmul.f32 %v591, %v591
  %v741 = vmul.f32 %v593, %v593
  %v742 = vmul.f32 %v595, %v595
  %v743 = vmul.f32 %v599, %v599
  %v744 = vmul.f32 %v601, %v601
  %v745 = vmul.f32 %v603, %v603
  %v746 = vmul.f32 %v605, %v605
  %v747 = vmul.f32 %v609, %v609
  %v748 = vmul.f32 %v611, %v611
  %v749 = vmul.f32 %v613, %v613
  %v750 = vmul.f32 %v615, %v615
  %v751 = vmul.f32 %v619, %v619
  %v752 = vmul.f32 %v621, %v621
  %v753 = vmul.f32 %v623, %v623
  %v754 = vmul.f32 %v625, %v625
  %v755 = vmul.f32 %v309, %v627
  %v756 = vmul.f32 %v311, %v628
  %v757 = vmul.f32 %v313, %v629
  %v758 = vmul.f32 %v315, %v630
  %v759 = vmul.f32 %v319, %v631
  %v760 = vmul.f32 %v321, %v632
  %v761 = vmul.f32 %v323, %v633
  %v762 = vmul.f32 %v325, %v634
  %v763 = vmul.f32 %v329, %v635
  %v764 = vmul.f32 %v331, %v636
  %v765 = vmul.f32 %v333, %v637
  %v766 = vmul.f32 %v335, %v638
  %v767 = vmul.f32 %v339, %v639
  %v768 = vmul.f32 %v341, %v640
  %v769 = vmul.f32 %v343, %v641
  %v770 = vmul.f32 %v345, %v642
  %v771 = vmul.f32 %v349, %v643
  %v772 = vmul.f32 %v351, %v644
  %v773 = vmul.f32 %v353, %v645
  %v774 = vmul.f32 %v355, %v646
  %v775 = vmul.f32 %v359, %v647
  %v776 = vmul.f32 %v361, %v648
  %v777 = vmul.f32 %v363, %v649
  %v778 = vmul.f32 %v365, %v650
  %v779 = vmul.f32 %v369, %v651
  %v780 = vmul.f32 %v371, %v652
  %v781 = vmul.f32 %v373, %v653
  %v782 = vmul.f32 %v375, %v654
  %v783 = vmul.f32 %v379, %v655
  %v784 = vmul.f32 %v381, %v656
  %v785 = vmul.f32 %v383, %v657
  %v786 = vmul.f32 %v385, %v658
  %v787 = vmul.f32 %v389, %v659
  %v788 = vmul.f32 %v391, %v660
  %v789 = vmul.f32 %v393, %v661
  %v790 = vmul.f32 %v395, %v662
  %v791 = vmul.f32 %v399, %v663
  %v792 = vmul.f32 %v401, %v664
  %v793 = vmul.f32 %v403, %v665
  %v794 = vmul.f32 %v405, %v666
  %v795 = vmul.f32 %v409, %v667
  %v796 = vmul.f32 %v411, %v668
  %v797 = vmul.f32 %v413, %v669
  %v798 = vmul.f32 %v415, %v670
  %v799 = vmul.f32 %v419, %v671
  %v800 = vmul.f32 %v421, %v672
  %v801 = vmul.f32 %v423, %v673
  %v802 = vmul.f32 %v425, %v674
  %v803 = vmul.f32 %v429, %v675
  %v804 = vmul.f32 %v431, %v676
  %v805 = vmul.f32 %v433, %v677
  %v806 = vmul.f32 %v435, %v678
  %v807 = vmul.f32 %v439, %v679
  %v808 = vmul.f32 %v441, %v680
  %v809 = vmul.f32 %v443, %v681
  %v810 = vmul.f32 %v445, %v682
  %v811 = vmul.f32 %v449, %v683
  %v812 = vmul.f32 %v451, %v684
  %v813 = vmul.f32 %v453, %v685
  %v814 = vmul.f32 %v455, %v686
  %v815 = vmul.f32 %v459, %v687
  %v816 = vmul.f32 %v461, %v688
  %v817 = vmul.f32 %v463, %v689
  %v818 = vmul.f32 %v465, %v690
  %v819 = vmul.f32 %v469, %v691
  %v820 = vmul.f32 %v471, %v692
  %v821 = vmul.f32 %v473, %v693
  %v822 = vmul.f32 %v475, %v694
  %v823 = vmul.f32 %v479, %v695
  %v824 = vmul.f32 %v481, %v696
  %v825 = vmul.f32 %v483, %v697
  %v826 = vmul.f32 %v485, %v698
  %v827 = vmul.f32 %v489, %v699
  %v828 = vmul.f32 %v491, %v700
  %v829 = vmul.f32 %v493, %v701
  %v830 = vmul.f32 %v495, %v702
  %v831 = vmul.f32 %v499, %v703
  %v832 = vmul.f32 %v501, %v704
  %v833 = vmul.f32 %v503, %v705
  %v834 = vmul.f32 %v505, %v706
  %v835 = vmul.f32 %v509, %v707
  %v836 = vmul.f32 %v511, %v708
  %v837 = vmul.f32 %v513, %v709
  %v838 = vmul.f32 %v515, %v710
  %v839 = vmul.f32 %v519, %v711
  %v840 = vmul.f32 %v521, %v712
  %v841 = vmul.f32 %v523, %v713
  %v842 = vmul.f32 %v525, %v714
  %v843 = vmul.f32 %v529, %v715
  %v844 = vmul.f32 %v531, %v716
  %v845 = vmul.f32 %v533, %v717
  %v846 = vmul.f32 %v535, %v718
  %v847 = vmul.f32 %v539, %v719
  %v848 = vmul.f32 %v541, %v720
  %v849 = vmul.f32 %v543, %v721
  %v850 = vmul.f32 %v545, %v722
  %v851 = vmul.f32 %v549, %v723
  %v852 = vmul.f32 %v551, %v724
  %v853 = vmul.f32 %v553, %v725
  %v854 = vmul.f32 %v555, %v726
  %v855 = vmul.f32 %v559, %v727
  %v856 = vmul.f32 %v561, %v728
  %v857 = vmul.f32 %v563, %v729
  %v858 = vmul.f32 %v565, %v730
  %v859 = vmul.f32 %v569, %v731
  %v860 = vmul.f32 %v571, %v732
  %v861 = vmul.f32 %v573, %v733
  %v862 = vmul.f32 %v575, %v734
  %v863 = vmul.f32 %v579, %v735
  %v864 = vmul.f32 %v581, %v736
  %v865 = vmul.f32 %v583, %v737
  %v866 = vmul.f32 %v585, %v738
  %v867 = vmul.f32 %v589, %v739
  %v868 = vmul.f32 %v591, %v740
  %v869 = vmul.f32 %v593, %v741
  %v870 = vmul.f32 %v595, %v742
  %v871 = vmul.f32 %v599, %v743
  %v872 = vmul.f32 %v601, %v744
  %v873 = vmul.f32 %v603, %v745
  %v874 = vmul.f32 %v605, %v746
  %v875 = vmul.f32 %v609, %v747
  %v876 = vmul.f32 %v611, %v748
  %v877 = vmul.f32 %v613, %v749
  %v878 = vmul.f32 %v615, %v750
  %v879 = vmul.f32 %v619, %v751
  %v880 = vmul.f32 %v621, %v752
  %v881 = vmul.f32 %v623, %v753
  %v882 = vmul.f32 %v625, %v754
  %v883 = vmul.f32 %v755, 0.044715
  %v884 = vmul.f32 %v756, 0.044715
  %v885 = vmul.f32 %v757, 0.044715
  %v886 = vmul.f32 %v758, 0.044715
  %v887 = vmul.f32 %v759, 0.044715
  %v888 = vmul.f32 %v760, 0.044715
  %v889 = vmul.f32 %v761, 0.044715
  %v890 = vmul.f32 %v762, 0.044715
  %v891 = vmul.f32 %v763, 0.044715
  %v892 = vmul.f32 %v764, 0.044715
  %v893 = vmul.f32 %v765, 0.044715
  %v894 = vmul.f32 %v766, 0.044715
  %v895 = vmul.f32 %v767, 0.044715
  %v896 = vmul.f32 %v768, 0.044715
  %v897 = vmul.f32 %v769, 0.044715
  %v898 = vmul.f32 %v770, 0.044715
  %v899 = vmul.f32 %v771, 0.044715
  %v900 = vmul.f32 %v772, 0.044715
  %v901 = vmul.f32 %v773, 0.044715
  %v902 = vmul.f32 %v774, 0.044715
  %v903 = vmul.f32 %v775, 0.044715
  %v904 = vmul.f32 %v776, 0.044715
  %v905 = vmul.f32 %v777, 0.044715
  %v906 = vmul.f32 %v778, 0.044715
  %v907 = vmul.f32 %v779, 0.044715
  %v908 = vmul.f32 %v780, 0.044715
  %v909 = vmul.f32 %v781, 0.044715
  %v910 = vmul.f32 %v782, 0.044715
  %v911 = vmul.f32 %v783, 0.044715
  %v912 = vmul.f32 %v784, 0.044715
  %v913 = vmul.f32 %v785, 0.044715
  %v914 = vmul.f32 %v786, 0.044715
  %v915 = vmul.f32 %v787, 0.044715
  %v916 = vmul.f32 %v788, 0.044715
  %v917 = vmul.f32 %v789, 0.044715
  %v918 = vmul.f32 %v790, 0.044715
  %v919 = vmul.f32 %v791, 0.044715
  %v920 = vmul.f32 %v792, 0.044715
  %v921 = vmul.f32 %v793, 0.044715
  %v922 = vmul.f32 %v794, 0.044715
  %v923 = vmul.f32 %v795, 0.044715
  %v924 = vmul.f32 %v796, 0.044715
  %v925 = vmul.f32 %v797, 0.044715
  %v926 = vmul.f32 %v798, 0.044715
  %v927 = vmul.f32 %v799, 0.044715
  %v928 = vmul.f32 %v800, 0.044715
  %v929 = vmul.f32 %v801, 0.044715
  %v930 = vmul.f32 %v802, 0.044715
  %v931 = vmul.f32 %v803, 0.044715
  %v932 = vmul.f32 %v804, 0.044715
  %v933 = vmul.f32 %v805, 0.044715
  %v934 = vmul.f32 %v806, 0.044715
  %v935 = vmul.f32 %v807, 0.044715
  %v936 = vmul.f32 %v808, 0.044715
  %v937 = vmul.f32 %v809, 0.044715
  %v938 = vmul.f32 %v810, 0.044715
  %v939 = vmul.f32 %v811, 0.044715
  %v940 = vmul.f32 %v812, 0.044715
  %v941 = vmul.f32 %v813, 0.044715
  %v942 = vmul.f32 %v814, 0.044715
  %v943 = vmul.f32 %v815, 0.044715
  %v944 = vmul.f32 %v816, 0.044715
  %v945 = vmul.f32 %v817, 0.044715
  %v946 = vmul.f32 %v818, 0.044715
  %v947 = vmul.f32 %v819, 0.044715
  %v948 = vmul.f32 %v820, 0.044715
  %v949 = vmul.f32 %v821, 0.044715
  %v950 = vmul.f32 %v822, 0.044715
  %v951 = vmul.f32 %v823, 0.044715
  %v952 = vmul.f32 %v824, 0.044715
  %v953 = vmul.f32 %v825, 0.044715
  %v954 = vmul.f32 %v826, 0.044715
  %v955 = vmul.f32 %v827, 0.044715
  %v956 = vmul.f32 %v828, 0.044715
  %v957 = vmul.f32 %v829, 0.044715
  %v958 = vmul.f32 %v830, 0.044715
  %v959 = vmul.f32 %v831, 0.044715
  %v960 = vmul.f32 %v832, 0.044715
  %v961 = vmul.f32 %v833, 0.044715
  %v962 = vmul.f32 %v834, 0.044715
  %v963 = vmul.f32 %v835, 0.044715
  %v964 = vmul.f32 %v836, 0.044715
  %v965 = vmul.f32 %v837, 0.044715
  %v966 = vmul.f32 %v838, 0.044715
  %v967 = vmul.f32 %v839, 0.044715
  %v968 = vmul.f32 %v840, 0.044715
  %v969 = vmul.f32 %v841, 0.044715
  %v970 = vmul.f32 %v842, 0.044715
  %v971 = vmul.f32 %v843, 0.044715
  %v972 = vmul.f32 %v844, 0.044715
  %v973 = vmul.f32 %v845, 0.044715
  %v974 = vmul.f32 %v846, 0.044715
  %v975 = vmul.f32 %v847, 0.044715
  %v976 = vmul.f32 %v848, 0.044715
  %v977 = vmul.f32 %v849, 0.044715
  %v978 = vmul.f32 %v850, 0.044715
  %v979 = vmul.f32 %v851, 0.044715
  %v980 = vmul.f32 %v852, 0.044715
  %v981 = vmul.f32 %v853, 0.044715
  %v982 = vmul.f32 %v854, 0.044715
  %v983 = vmul.f32 %v855, 0.044715
  %v984 = vmul.f32 %v856, 0.044715
  %v985 = vmul.f32 %v857, 0.044715
  %v986 = vmul.f32 %v858, 0.044715
  %v987 = vmul.f32 %v859, 0.044715
  %v988 = vmul.f32 %v860, 0.044715
  %v989 = vmul.f32 %v861, 0.044715
  %v990 = vmul.f32 %v862, 0.044715
  %v991 = vmul.f32 %v863, 0.044715
  %v992 = vmul.f32 %v864, 0.044715
  %v993 = vmul.f32 %v865, 0.044715
  %v994 = vmul.f32 %v866, 0.044715
  %v995 = vmul.f32 %v867, 0.044715
  %v996 = vmul.f32 %v868, 0.044715
  %v997 = vmul.f32 %v869, 0.044715
  %v998 = vmul.f32 %v870, 0.044715
  %v999 = vmul.f32 %v871, 0.044715
  %v1000 = vmul.f32 %v872, 0.044715
  %v1001 = vmul.f32 %v873, 0.044715
  %v1002 = vmul.f32 %v874, 0.044715
  %v1003 = vmul.f32 %v875, 0.044715
  %v1004 = vmul.f32 %v876, 0.044715
  %v1005 = vmul.f32 %v877, 0.044715
  %v1006 = vmul.f32 %v878, 0.044715
  %v1007 = vmul.f32 %v879, 0.044715
  %v1008 = vmul.f32 %v880, 0.044715
  %v1009 = vmul.f32 %v881, 0.044715
  %v1010 = vmul.f32 %v882, 0.044715
  %v1011 = vadd.f32 %v309, %v883
  %v1012 = vadd.f32 %v311, %v884
  %v1013 = vadd.f32 %v313, %v885
  %v1014 = vadd.f32 %v315, %v886
  %v1015 = vadd.f32 %v319, %v887
  %v1016 = vadd.f32 %v321, %v888
  %v1017 = vadd.f32 %v323, %v889
  %v1018 = vadd.f32 %v325, %v890
  %v1019 = vadd.f32 %v329, %v891
  %v1020 = vadd.f32 %v331, %v892
  %v1021 = vadd.f32 %v333, %v893
  %v1022 = vadd.f32 %v335, %v894
  %v1023 = vadd.f32 %v339, %v895
  %v1024 = vadd.f32 %v341, %v896
  %v1025 = vadd.f32 %v343, %v897
  %v1026 = vadd.f32 %v345, %v898
  %v1027 = vadd.f32 %v349, %v899
  %v1028 = vadd.f32 %v351, %v900
  %v1029 = vadd.f32 %v353, %v901
  %v1030 = vadd.f32 %v355, %v902
  %v1031 = vadd.f32 %v359, %v903
  %v1032 = vadd.f32 %v361, %v904
  %v1033 = vadd.f32 %v363, %v905
  %v1034 = vadd.f32 %v365, %v906
  %v1035 = vadd.f32 %v369, %v907
  %v1036 = vadd.f32 %v371, %v908
  %v1037 = vadd.f32 %v373, %v909
  %v1038 = vadd.f32 %v375, %v910
  %v1039 = vadd.f32 %v379, %v911
  %v1040 = vadd.f32 %v381, %v912
  %v1041 = vadd.f32 %v383, %v913
  %v1042 = vadd.f32 %v385, %v914
  %v1043 = vadd.f32 %v389, %v915
  %v1044 = vadd.f32 %v391, %v916
  %v1045 = vadd.f32 %v393, %v917
  %v1046 = vadd.f32 %v395, %v918
  %v1047 = vadd.f32 %v399, %v919
  %v1048 = vadd.f32 %v401, %v920
  %v1049 = vadd.f32 %v403, %v921
  %v1050 = vadd.f32 %v405, %v922
  %v1051 = vadd.f32 %v409, %v923
  %v1052 = vadd.f32 %v411, %v924
  %v1053 = vadd.f32 %v413, %v925
  %v1054 = vadd.f32 %v415, %v926
  %v1055 = vadd.f32 %v419, %v927
  %v1056 = vadd.f32 %v421, %v928
  %v1057 = vadd.f32 %v423, %v929
  %v1058 = vadd.f32 %v425, %v930
  %v1059 = vadd.f32 %v429, %v931
  %v1060 = vadd.f32 %v431, %v932
  %v1061 = vadd.f32 %v433, %v933
  %v1062 = vadd.f32 %v435, %v934
  %v1063 = vadd.f32 %v439, %v935
  %v1064 = vadd.f32 %v441, %v936
  %v1065 = vadd.f32 %v443, %v937
  %v1066 = vadd.f32 %v445, %v938
  %v1067 = vadd.f32 %v449, %v939
  %v1068 = vadd.f32 %v451, %v940
  %v1069 = vadd.f32 %v453, %v941
  %v1070 = vadd.f32 %v455, %v942
  %v1071 = vadd.f32 %v459, %v943
  %v1072 = vadd.f32 %v461, %v944
  %v1073 = vadd.f32 %v463, %v945
  %v1074 = vadd.f32 %v465, %v946
  %v1075 = vadd.f32 %v469, %v947
  %v1076 = vadd.f32 %v471, %v948
  %v1077 = vadd.f32 %v473, %v949
  %v1078 = vadd.f32 %v475, %v950
  %v1079 = vadd.f32 %v479, %v951
  %v1080 = vadd.f32 %v481, %v952
  %v1081 = vadd.f32 %v483, %v953
  %v1082 = vadd.f32 %v485, %v954
  %v1083 = vadd.f32 %v489, %v955
  %v1084 = vadd.f32 %v491, %v956
  %v1085 = vadd.f32 %v493, %v957
  %v1086 = vadd.f32 %v495, %v958
  %v1087 = vadd.f32 %v499, %v959
  %v1088 = vadd.f32 %v501, %v960
  %v1089 = vadd.f32 %v503, %v961
  %v1090 = vadd.f32 %v505, %v962
  %v1091 = vadd.f32 %v509, %v963
  %v1092 = vadd.f32 %v511, %v964
  %v1093 = vadd.f32 %v513, %v965
  %v1094 = vadd.f32 %v515, %v966
  %v1095 = vadd.f32 %v519, %v967
  %v1096 = vadd.f32 %v521, %v968
  %v1097 = vadd.f32 %v523, %v969
  %v1098 = vadd.f32 %v525, %v970
  %v1099 = vadd.f32 %v529, %v971
  %v1100 = vadd.f32 %v531, %v972
  %v1101 = vadd.f32 %v533, %v973
  %v1102 = vadd.f32 %v535, %v974
  %v1103 = vadd.f32 %v539, %v975
  %v1104 = vadd.f32 %v541, %v976
  %v1105 = vadd.f32 %v543, %v977
  %v1106 = vadd.f32 %v545, %v978
  %v1107 = vadd.f32 %v549, %v979
  %v1108 = vadd.f32 %v551, %v980
  %v1109 = vadd.f32 %v553, %v981
  %v1110 = vadd.f32 %v555, %v982
  %v1111 = vadd.f32 %v559, %v983
  %v1112 = vadd.f32 %v561, %v984
  %v1113 = vadd.f32 %v563, %v985
  %v1114 = vadd.f32 %v565, %v986
  %v1115 = vadd.f32 %v569, %v987
  %v1116 = vadd.f32 %v571, %v988
  %v1117 = vadd.f32 %v573, %v989
  %v1118 = vadd.f32 %v575, %v990
  %v1119 = vadd.f32 %v579, %v991
  %v1120 = vadd.f32 %v581, %v992
  %v1121 = vadd.f32 %v583, %v993
  %v1122 = vadd.f32 %v585, %v994
  %v1123 = vadd.f32 %v589, %v995
  %v1124 = vadd.f32 %v591, %v996
  %v1125 = vadd.f32 %v593, %v997
  %v1126 = vadd.f32 %v595, %v998
  %v1127 = vadd.f32 %v599, %v999
  %v1128 = vadd.f32 %v601, %v1000
  %v1129 = vadd.f32 %v603, %v1001
  %v1130 = vadd.f32 %v605, %v1002
  %v1131 = vadd.f32 %v609, %v1003
  %v1132 = vadd.f32 %v611, %v1004
  %v1133 = vadd.f32 %v613, %v1005
  %v1134 = vadd.f32 %v615, %v1006
  %v1135 = vadd.f32 %v619, %v1007
  %v1136 = vadd.f32 %v621, %v1008
  %v1137 = vadd.f32 %v623, %v1009
  %v1138 = vadd.f32 %v625, %v1010
  %v1139 = vmul.f32 %v1011, 0.7978846
  %v1140 = vmul.f32 %v1012, 0.7978846
  %v1141 = vmul.f32 %v1013, 0.7978846
  %v1142 = vmul.f32 %v1014, 0.7978846
  %v1143 = vmul.f32 %v1015, 0.7978846
  %v1144 = vmul.f32 %v1016, 0.7978846
  %v1145 = vmul.f32 %v1017, 0.7978846
  %v1146 = vmul.f32 %v1018, 0.7978846
  %v1147 = vmul.f32 %v1019, 0.7978846
  %v1148 = vmul.f32 %v1020, 0.7978846
  %v1149 = vmul.f32 %v1021, 0.7978846
  %v1150 = vmul.f32 %v1022, 0.7978846
  %v1151 = vmul.f32 %v1023, 0.7978846
  %v1152 = vmul.f32 %v1024, 0.7978846
  %v1153 = vmul.f32 %v1025, 0.7978846
  %v1154 = vmul.f32 %v1026, 0.7978846
  %v1155 = vmul.f32 %v1027, 0.7978846
  %v1156 = vmul.f32 %v1028, 0.7978846
  %v1157 = vmul.f32 %v1029, 0.7978846
  %v1158 = vmul.f32 %v1030, 0.7978846
  %v1159 = vmul.f32 %v1031, 0.7978846
  %v1160 = vmul.f32 %v1032, 0.7978846
  %v1161 = vmul.f32 %v1033, 0.7978846
  %v1162 = vmul.f32 %v1034, 0.7978846
  %v1163 = vmul.f32 %v1035, 0.7978846
  %v1164 = vmul.f32 %v1036, 0.7978846
  %v1165 = vmul.f32 %v1037, 0.7978846
  %v1166 = vmul.f32 %v1038, 0.7978846
  %v1167 = vmul.f32 %v1039, 0.7978846
  %v1168 = vmul.f32 %v1040, 0.7978846
  %v1169 = vmul.f32 %v1041, 0.7978846
  %v1170 = vmul.f32 %v1042, 0.7978846
  %v1171 = vmul.f32 %v1043, 0.7978846
  %v1172 = vmul.f32 %v1044, 0.7978846
  %v1173 = vmul.f32 %v1045, 0.7978846
  %v1174 = vmul.f32 %v1046, 0.7978846
  %v1175 = vmul.f32 %v1047, 0.7978846
  %v1176 = vmul.f32 %v1048, 0.7978846
  %v1177 = vmul.f32 %v1049, 0.7978846
  %v1178 = vmul.f32 %v1050, 0.7978846
  %v1179 = vmul.f32 %v1051, 0.7978846
  %v1180 = vmul.f32 %v1052, 0.7978846
  %v1181 = vmul.f32 %v1053, 0.7978846
  %v1182 = vmul.f32 %v1054, 0.7978846
  %v1183 = vmul.f32 %v1055, 0.7978846
  %v1184 = vmul.f32 %v1056, 0.7978846
  %v1185 = vmul.f32 %v1057, 0.7978846
  %v1186 = vmul.f32 %v1058, 0.7978846
  %v1187 = vmul.f32 %v1059, 0.7978846
  %v1188 = vmul.f32 %v1060, 0.7978846
  %v1189 = vmul.f32 %v1061, 0.7978846
  %v1190 = vmul.f32 %v1062, 0.7978846
  %v1191 = vmul.f32 %v1063, 0.7978846
  %v1192 = vmul.f32 %v1064, 0.7978846
  %v1193 = vmul.f32 %v1065, 0.7978846
  %v1194 = vmul.f32 %v1066, 0.7978846
  %v1195 = vmul.f32 %v1067, 0.7978846
  %v1196 = vmul.f32 %v1068, 0.7978846
  %v1197 = vmul.f32 %v1069, 0.7978846
  %v1198 = vmul.f32 %v1070, 0.7978846
  %v1199 = vmul.f32 %v1071, 0.7978846
  %v1200 = vmul.f32 %v1072, 0.7978846
  %v1201 = vmul.f32 %v1073, 0.7978846
  %v1202 = vmul.f32 %v1074, 0.7978846
  %v1203 = vmul.f32 %v1075, 0.7978846
  %v1204 = vmul.f32 %v1076, 0.7978846
  %v1205 = vmul.f32 %v1077, 0.7978846
  %v1206 = vmul.f32 %v1078, 0.7978846
  %v1207 = vmul.f32 %v1079, 0.7978846
  %v1208 = vmul.f32 %v1080, 0.7978846
  %v1209 = vmul.f32 %v1081, 0.7978846
  %v1210 = vmul.f32 %v1082, 0.7978846
  %v1211 = vmul.f32 %v1083, 0.7978846
  %v1212 = vmul.f32 %v1084, 0.7978846
  %v1213 = vmul.f32 %v1085, 0.7978846
  %v1214 = vmul.f32 %v1086, 0.7978846
  %v1215 = vmul.f32 %v1087, 0.7978846
  %v1216 = vmul.f32 %v1088, 0.7978846
  %v1217 = vmul.f32 %v1089, 0.7978846
  %v1218 = vmul.f32 %v1090, 0.7978846
  %v1219 = vmul.f32 %v1091, 0.7978846
  %v1220 = vmul.f32 %v1092, 0.7978846
  %v1221 = vmul.f32 %v1093, 0.7978846
  %v1222 = vmul.f32 %v1094, 0.7978846
  %v1223 = vmul.f32 %v1095, 0.7978846
  %v1224 = vmul.f32 %v1096, 0.7978846
  %v1225 = vmul.f32 %v1097, 0.7978846
  %v1226 = vmul.f32 %v1098, 0.7978846
  %v1227 = vmul.f32 %v1099, 0.7978846
  %v1228 = vmul.f32 %v1100, 0.7978846
  %v1229 = vmul.f32 %v1101, 0.7978846
  %v1230 = vmul.f32 %v1102, 0.7978846
  %v1231 = vmul.f32 %v1103, 0.7978846
  %v1232 = vmul.f32 %v1104, 0.7978846
  %v1233 = vmul.f32 %v1105, 0.7978846
  %v1234 = vmul.f32 %v1106, 0.7978846
  %v1235 = vmul.f32 %v1107, 0.7978846
  %v1236 = vmul.f32 %v1108, 0.7978846
  %v1237 = vmul.f32 %v1109, 0.7978846
  %v1238 = vmul.f32 %v1110, 0.7978846
  %v1239 = vmul.f32 %v1111, 0.7978846
  %v1240 = vmul.f32 %v1112, 0.7978846
  %v1241 = vmul.f32 %v1113, 0.7978846
  %v1242 = vmul.f32 %v1114, 0.7978846
  %v1243 = vmul.f32 %v1115, 0.7978846
  %v1244 = vmul.f32 %v1116, 0.7978846
  %v1245 = vmul.f32 %v1117, 0.7978846
  %v1246 = vmul.f32 %v1118, 0.7978846
  %v1247 = vmul.f32 %v1119, 0.7978846
  %v1248 = vmul.f32 %v1120, 0.7978846
  %v1249 = vmul.f32 %v1121, 0.7978846
  %v1250 = vmul.f32 %v1122, 0.7978846
  %v1251 = vmul.f32 %v1123, 0.7978846
  %v1252 = vmul.f32 %v1124, 0.7978846
  %v1253 = vmul.f32 %v1125, 0.7978846
  %v1254 = vmul.f32 %v1126, 0.7978846
  %v1255 = vmul.f32 %v1127, 0.7978846
  %v1256 = vmul.f32 %v1128, 0.7978846
  %v1257 = vmul.f32 %v1129, 0.7978846
  %v1258 = vmul.f32 %v1130, 0.7978846
  %v1259 = vmul.f32 %v1131, 0.7978846
  %v1260 = vmul.f32 %v1132, 0.7978846
  %v1261 = vmul.f32 %v1133, 0.7978846
  %v1262 = vmul.f32 %v1134, 0.7978846
  %v1263 = vmul.f32 %v1135, 0.7978846
  %v1264 = vmul.f32 %v1136, 0.7978846
  %v1265 = vmul.f32 %v1137, 0.7978846
  %v1266 = vmul.f32 %v1138, 0.7978846
  %v1267 = vtanh.pop %v1139
  %v1268 = vtanh.pop %v1140
  %v1269 = vtanh.pop %v1141
  %v1270 = vtanh.pop %v1142
  %v1271 = vtanh.pop %v1143
  %v1272 = vtanh.pop %v1144
  %v1273 = vtanh.pop %v1145
  %v1274 = vtanh.pop %v1146
  %v1275 = vtanh.pop %v1147
  %v1276 = vtanh.pop %v1148
  %v1277 = vtanh.pop %v1149
  %v1278 = vtanh.pop %v1150
  %v1279 = vtanh.pop %v1151
  %v1280 = vtanh.pop %v1152
  %v1281 = vtanh.pop %v1153
  %v1282 = vtanh.pop %v1154
  %v1283 = vtanh.pop %v1155
  %v1284 = vtanh.pop %v1156
  %v1285 = vtanh.pop %v1157
  %v1286 = vtanh.pop %v1158
  %v1287 = vtanh.pop %v1159
  %v1288 = vtanh.pop %v1160
  %v1289 = vtanh.pop %v1161
  %v1290 = vtanh.pop %v1162
  %v1291 = vtanh.pop %v1163
  %v1292 = vtanh.pop %v1164
  %v1293 = vtanh.pop %v1165
  %v1294 = vtanh.pop %v1166
  %v1295 = vtanh.pop %v1167
  %v1296 = vtanh.pop %v1168
  %v1297 = vtanh.pop %v1169
  %v1298 = vtanh.pop %v1170
  %v1299 = vtanh.pop %v1171
  %v1300 = vtanh.pop %v1172
  %v1301 = vtanh.pop %v1173
  %v1302 = vtanh.pop %v1174
  %v1303 = vtanh.pop %v1175
  %v1304 = vtanh.pop %v1176
  %v1305 = vtanh.pop %v1177
  %v1306 = vtanh.pop %v1178
  %v1307 = vtanh.pop %v1179
  %v1308 = vtanh.pop %v1180
  %v1309 = vtanh.pop %v1181
  %v1310 = vtanh.pop %v1182
  %v1311 = vtanh.pop %v1183
  %v1312 = vtanh.pop %v1184
  %v1313 = vtanh.pop %v1185
  %v1314 = vtanh.pop %v1186
  %v1315 = vtanh.pop %v1187
  %v1316 = vtanh.pop %v1188
  %v1317 = vtanh.pop %v1189
  %v1318 = vtanh.pop %v1190
  %v1319 = vtanh.pop %v1191
  %v1320 = vtanh.pop %v1192
  %v1321 = vtanh.pop %v1193
  %v1322 = vtanh.pop %v1194
  %v1323 = vtanh.pop %v1195
  %v1324 = vtanh.pop %v1196
  %v1325 = vtanh.pop %v1197
  %v1326 = vtanh.pop %v1198
  %v1327 = vtanh.pop %v1199
  %v1328 = vtanh.pop %v1200
  %v1329 = vtanh.pop %v1201
  %v1330 = vtanh.pop %v1202
  %v1331 = vtanh.pop %v1203
  %v1332 = vtanh.pop %v1204
  %v1333 = vtanh.pop %v1205
  %v1334 = vtanh.pop %v1206
  %v1335 = vtanh.pop %v1207
  %v1336 = vtanh.pop %v1208
  %v1337 = vtanh.pop %v1209
  %v1338 = vtanh.pop %v1210
  %v1339 = vtanh.pop %v1211
  %v1340 = vtanh.pop %v1212
  %v1341 = vtanh.pop %v1213
  %v1342 = vtanh.pop %v1214
  %v1343 = vtanh.pop %v1215
  %v1344 = vtanh.pop %v1216
  %v1345 = vtanh.pop %v1217
  %v1346 = vtanh.pop %v1218
  %v1347 = vtanh.pop %v1219
  %v1348 = vtanh.pop %v1220
  %v1349 = vtanh.pop %v1221
  %v1350 = vtanh.pop %v1222
  %v1351 = vtanh.pop %v1223
  %v1352 = vtanh.pop %v1224
  %v1353 = vtanh.pop %v1225
  %v1354 = vtanh.pop %v1226
  %v1355 = vtanh.pop %v1227
  %v1356 = vtanh.pop %v1228
  %v1357 = vtanh.pop %v1229
  %v1358 = vtanh.pop %v1230
  %v1359 = vtanh.pop %v1231
  %v1360 = vtanh.pop %v1232
  %v1361 = vtanh.pop %v1233
  %v1362 = vtanh.pop %v1234
  %v1363 = vtanh.pop %v1235
  %v1364 = vtanh.pop %v1236
  %v1365 = vtanh.pop %v1237
  %v1366 = vtanh.pop %v1238
  %v1367 = vtanh.pop %v1239
  %v1368 = vtanh.pop %v1240
  %v1369 = vtanh.pop %v1241
  %v1370 = vtanh.pop %v1242
  %v1371 = vtanh.pop %v1243
  %v1372 = vtanh.pop %v1244
  %v1373 = vtanh.pop %v1245
  %v1374 = vtanh.pop %v1246
  %v1375 = vtanh.pop %v1247
  %v1376 = vtanh.pop %v1248
  %v1377 = vtanh.pop %v1249
  %v1378 = vtanh.pop %v1250
  %v1379 = vtanh.pop %v1251
  %v1380 = vtanh.pop %v1252
  %v1381 = vtanh.pop %v1253
  %v1382 = vtanh.pop %v1254
  %v1383 = vtanh.pop %v1255
  %v1384 = vtanh.pop %v1256
  %v1385 = vtanh.pop %v1257
  %v1386 = vtanh.pop %v1258
  %v1387 = vtanh.pop %v1259
  %v1388 = vtanh.pop %v1260
  %v1389 = vtanh.pop %v1261
  %v1390 = vtanh.pop %v1262
  %v1391 = vtanh.pop %v1263
  %v1392 = vtanh.pop %v1264
  %v1393 = vtanh.pop %v1265
  %v1394 = vtanh.pop %v1266
  %v1395 = vadd.f32 %v1267, 1.0
  %v1396 = vadd.f32 %v1268, 1.0
  %v1397 = vadd.f32 %v1269, 1.0
  %v1398 = vadd.f32 %v1270, 1.0
  %v1399 = vadd.f32 %v1271, 1.0
  %v1400 = vadd.f32 %v1272, 1.0
  %v1401 = vadd.f32 %v1273, 1.0
  %v1402 = vadd.f32 %v1274, 1.0
  %v1403 = vadd.f32 %v1275, 1.0
  %v1404 = vadd.f32 %v1276, 1.0
  %v1405 = vadd.f32 %v1277, 1.0
  %v1406 = vadd.f32 %v1278, 1.0
  %v1407 = vadd.f32 %v1279, 1.0
  %v1408 = vadd.f32 %v1280, 1.0
  %v1409 = vadd.f32 %v1281, 1.0
  %v1410 = vadd.f32 %v1282, 1.0
  %v1411 = vadd.f32 %v1283, 1.0
  %v1412 = vadd.f32 %v1284, 1.0
  %v1413 = vadd.f32 %v1285, 1.0
  %v1414 = vadd.f32 %v1286, 1.0
  %v1415 = vadd.f32 %v1287, 1.0
  %v1416 = vadd.f32 %v1288, 1.0
  %v1417 = vadd.f32 %v1289, 1.0
  %v1418 = vadd.f32 %v1290, 1.0
  %v1419 = vadd.f32 %v1291, 1.0
  %v1420 = vadd.f32 %v1292, 1.0
  %v1421 = vadd.f32 %v1293, 1.0
  %v1422 = vadd.f32 %v1294, 1.0
  %v1423 = vadd.f32 %v1295, 1.0
  %v1424 = vadd.f32 %v1296, 1.0
  %v1425 = vadd.f32 %v1297, 1.0
  %v1426 = vadd.f32 %v1298, 1.0
  %v1427 = vadd.f32 %v1299, 1.0
  %v1428 = vadd.f32 %v1300, 1.0
  %v1429 = vadd.f32 %v1301, 1.0
  %v1430 = vadd.f32 %v1302, 1.0
  %v1431 = vadd.f32 %v1303, 1.0
  %v1432 = vadd.f32 %v1304, 1.0
  %v1433 = vadd.f32 %v1305, 1.0
  %v1434 = vadd.f32 %v1306, 1.0
  %v1435 = vadd.f32 %v1307, 1.0
  %v1436 = vadd.f32 %v1308, 1.0
  %v1437 = vadd.f32 %v1309, 1.0
  %v1438 = vadd.f32 %v1310, 1.0
  %v1439 = vadd.f32 %v1311, 1.0
  %v1440 = vadd.f32 %v1312, 1.0
  %v1441 = vadd.f32 %v1313, 1.0
  %v1442 = vadd.f32 %v1314, 1.0
  %v1443 = vadd.f32 %v1315, 1.0
  %v1444 = vadd.f32 %v1316, 1.0
  %v1445 = vadd.f32 %v1317, 1.0
  %v1446 = vadd.f32 %v1318, 1.0
  %v1447 = vadd.f32 %v1319, 1.0
  %v1448 = vadd.f32 %v1320, 1.0
  %v1449 = vadd.f32 %v1321, 1.0
  %v1450 = vadd.f32 %v1322, 1.0
  %v1451 = vadd.f32 %v1323, 1.0
  %v1452 = vadd.f32 %v1324, 1.0
  %v1453 = vadd.f32 %v1325, 1.0
  %v1454 = vadd.f32 %v1326, 1.0
  %v1455 = vadd.f32 %v1327, 1.0
  %v1456 = vadd.f32 %v1328, 1.0
  %v1457 = vadd.f32 %v1329, 1.0
  %v1458 = vadd.f32 %v1330, 1.0
  %v1459 = vadd.f32 %v1331, 1.0
  %v1460 = vadd.f32 %v1332, 1.0
  %v1461 = vadd.f32 %v1333, 1.0
  %v1462 = vadd.f32 %v1334, 1.0
  %v1463 = vadd.f32 %v1335, 1.0
  %v1464 = vadd.f32 %v1336, 1.0
  %v1465 = vadd.f32 %v1337, 1.0
  %v1466 = vadd.f32 %v1338, 1.0
  %v1467 = vadd.f32 %v1339, 1.0
  %v1468 = vadd.f32 %v1340, 1.0
  %v1469 = vadd.f32 %v1341, 1.0
  %v1470 = vadd.f32 %v1342, 1.0
  %v1471 = vadd.f32 %v1343, 1.0
  %v1472 = vadd.f32 %v1344, 1.0
  %v1473 = vadd.f32 %v1345, 1.0
  %v1474 = vadd.f32 %v1346, 1.0
  %v1475 = vadd.f32 %v1347, 1.0
  %v1476 = vadd.f32 %v1348, 1.0
  %v1477 = vadd.f32 %v1349, 1.0
  %v1478 = vadd.f32 %v1350, 1.0
  %v1479 = vadd.f32 %v1351, 1.0
  %v1480 = vadd.f32 %v1352, 1.0
  %v1481 = vadd.f32 %v1353, 1.0
  %v1482 = vadd.f32 %v1354, 1.0
  %v1483 = vadd.f32 %v1355, 1.0
  %v1484 = vadd.f32 %v1356, 1.0
  %v1485 = vadd.f32 %v1357, 1.0
  %v1486 = vadd.f32 %v1358, 1.0
  %v1487 = vadd.f32 %v1359, 1.0
  %v1488 = vadd.f32 %v1360, 1.0
  %v1489 = vadd.f32 %v1361, 1.0
  %v1490 = vadd.f32 %v1362, 1.0
  %v1491 = vadd.f32 %v1363, 1.0
  %v1492 = vadd.f32 %v1364, 1.0
  %v1493 = vadd.f32 %v1365, 1.0
  %v1494 = vadd.f32 %v1366, 1.0
  %v1495 = vadd.f32 %v1367, 1.0
  %v1496 = vadd.f32 %v1368, 1.0
  %v1497 = vadd.f32 %v1369, 1.0
  %v1498 = vadd.f32 %v1370, 1.0
  %v1499 = vadd.f32 %v1371, 1.0
  %v1500 = vadd.f32 %v1372, 1.0
  %v1501 = vadd.f32 %v1373, 1.0
  %v1502 = vadd.f32 %v1374, 1.0
  %v1503 = vadd.f32 %v1375, 1.0
  %v1504 = vadd.f32 %v1376, 1.0
  %v1505 = vadd.f32 %v1377, 1.0
  %v1506 = vadd.f32 %v1378, 1.0
  %v1507 = vadd.f32 %v1379, 1.0
  %v1508 = vadd.f32 %v1380, 1.0
  %v1509 = vadd.f32 %v1381, 1.0
  %v1510 = vadd.f32 %v1382, 1.0
  %v1511 = vadd.f32 %v1383, 1.0
  %v1512 = vadd.f32 %v1384, 1.0
  %v1513 = vadd.f32 %v1385, 1.0
  %v1514 = vadd.f32 %v1386, 1.0
  %v1515 = vadd.f32 %v1387, 1.0
  %v1516 = vadd.f32 %v1388, 1.0
  %v1517 = vadd.f32 %v1389, 1.0
  %v1518 = vadd.f32 %v1390, 1.0
  %v1519 = vadd.f32 %v1391, 1.0
  %v1520 = vadd.f32 %v1392, 1.0
  %v1521 = vadd.f32 %v1393, 1.0
  %v1522 = vadd.f32 %v1394, 1.0
  %v1523 = vmul.f32 %v1395, 0.5
  %v1524 = vmul.f32 %v1396, 0.5
  %v1525 = vmul.f32 %v1397, 0.5
  %v1526 = vmul.f32 %v1398, 0.5
  %v1527 = vmul.f32 %v1399, 0.5
  %v1528 = vmul.f32 %v1400, 0.5
  %v1529 = vmul.f32 %v1401, 0.5
  %v1530 = vmul.f32 %v1402, 0.5
  %v1531 = vmul.f32 %v1403, 0.5
  %v1532 = vmul.f32 %v1404, 0.5
  %v1533 = vmul.f32 %v1405, 0.5
  %v1534 = vmul.f32 %v1406, 0.5
  %v1535 = vmul.f32 %v1407, 0.5
  %v1536 = vmul.f32 %v1408, 0.5
  %v1537 = vmul.f32 %v1409, 0.5
  %v1538 = vmul.f32 %v1410, 0.5
  %v1539 = vmul.f32 %v1411, 0.5
  %v1540 = vmul.f32 %v1412, 0.5
  %v1541 = vmul.f32 %v1413, 0.5
  %v1542 = vmul.f32 %v1414, 0.5
  %v1543 = vmul.f32 %v1415, 0.5
  %v1544 = vmul.f32 %v1416, 0.5
  %v1545 = vmul.f32 %v1417, 0.5
  %v1546 = vmul.f32 %v1418, 0.5
  %v1547 = vmul.f32 %v1419, 0.5
  %v1548 = vmul.f32 %v1420, 0.5
  %v1549 = vmul.f32 %v1421, 0.5
  %v1550 = vmul.f32 %v1422, 0.5
  %v1551 = vmul.f32 %v1423, 0.5
  %v1552 = vmul.f32 %v1424, 0.5
  %v1553 = vmul.f32 %v1425, 0.5
  %v1554 = vmul.f32 %v1426, 0.5
  %v1555 = vmul.f32 %v1427, 0.5
  %v1556 = vmul.f32 %v1428, 0.5
  %v1557 = vmul.f32 %v1429, 0.5
  %v1558 = vmul.f32 %v1430, 0.5
  %v1559 = vmul.f32 %v1431, 0.5
  %v1560 = vmul.f32 %v1432, 0.5
  %v1561 = vmul.f32 %v1433, 0.5
  %v1562 = vmul.f32 %v1434, 0.5
  %v1563 = vmul.f32 %v1435, 0.5
  %v1564 = vmul.f32 %v1436, 0.5
  %v1565 = vmul.f32 %v1437, 0.5
  %v1566 = vmul.f32 %v1438, 0.5
  %v1567 = vmul.f32 %v1439, 0.5
  %v1568 = vmul.f32 %v1440, 0.5
  %v1569 = vmul.f32 %v1441, 0.5
  %v1570 = vmul.f32 %v1442, 0.5
  %v1571 = vmul.f32 %v1443, 0.5
  %v1572 = vmul.f32 %v1444, 0.5
  %v1573 = vmul.f32 %v1445, 0.5
  %v1574 = vmul.f32 %v1446, 0.5
  %v1575 = vmul.f32 %v1447, 0.5
  %v1576 = vmul.f32 %v1448, 0.5
  %v1577 = vmul.f32 %v1449, 0.5
  %v1578 = vmul.f32 %v1450, 0.5
  %v1579 = vmul.f32 %v1451, 0.5
  %v1580 = vmul.f32 %v1452, 0.5
  %v1581 = vmul.f32 %v1453, 0.5
  %v1582 = vmul.f32 %v1454, 0.5
  %v1583 = vmul.f32 %v1455, 0.5
  %v1584 = vmul.f32 %v1456, 0.5
  %v1585 = vmul.f32 %v1457, 0.5
  %v1586 = vmul.f32 %v1458, 0.5
  %v1587 = vmul.f32 %v1459, 0.5
  %v1588 = vmul.f32 %v1460, 0.5
  %v1589 = vmul.f32 %v1461, 0.5
  %v1590 = vmul.f32 %v1462, 0.5
  %v1591 = vmul.f32 %v1463, 0.5
  %v1592 = vmul.f32 %v1464, 0.5
  %v1593 = vmul.f32 %v1465, 0.5
  %v1594 = vmul.f32 %v1466, 0.5
  %v1595 = vmul.f32 %v1467, 0.5
  %v1596 = vmul.f32 %v1468, 0.5
  %v1597 = vmul.f32 %v1469, 0.5
  %v1598 = vmul.f32 %v1470, 0.5
  %v1599 = vmul.f32 %v1471, 0.5
  %v1600 = vmul.f32 %v1472, 0.5
  %v1601 = vmul.f32 %v1473, 0.5
  %v1602 = vmul.f32 %v1474, 0.5
  %v1603 = vmul.f32 %v1475, 0.5
  %v1604 = vmul.f32 %v1476, 0.5
  %v1605 = vmul.f32 %v1477, 0.5
  %v1606 = vmul.f32 %v1478, 0.5
  %v1607 = vmul.f32 %v1479, 0.5
  %v1608 = vmul.f32 %v1480, 0.5
  %v1609 = vmul.f32 %v1481, 0.5
  %v1610 = vmul.f32 %v1482, 0.5
  %v1611 = vmul.f32 %v1483, 0.5
  %v1612 = vmul.f32 %v1484, 0.5
  %v1613 = vmul.f32 %v1485, 0.5
  %v1614 = vmul.f32 %v1486, 0.5
  %v1615 = vmul.f32 %v1487, 0.5
  %v1616 = vmul.f32 %v1488, 0.5
  %v1617 = vmul.f32 %v1489, 0.5
  %v1618 = vmul.f32 %v1490, 0.5
  %v1619 = vmul.f32 %v1491, 0.5
  %v1620 = vmul.f32 %v1492, 0.5
  %v1621 = vmul.f32 %v1493, 0.5
  %v1622 = vmul.f32 %v1494, 0.5
  %v1623 = vmul.f32 %v1495, 0.5
  %v1624 = vmul.f32 %v1496, 0.5
  %v1625 = vmul.f32 %v1497, 0.5
  %v1626 = vmul.f32 %v1498, 0.5
  %v1627 = vmul.f32 %v1499, 0.5
  %v1628 = vmul.f32 %v1500, 0.5
  %v1629 = vmul.f32 %v1501, 0.5
  %v1630 = vmul.f32 %v1502, 0.5
  %v1631 = vmul.f32 %v1503, 0.5
  %v1632 = vmul.f32 %v1504, 0.5
  %v1633 = vmul.f32 %v1505, 0.5
  %v1634 = vmul.f32 %v1506, 0.5
  %v1635 = vmul.f32 %v1507, 0.5
  %v1636 = vmul.f32 %v1508, 0.5
  %v1637 = vmul.f32 %v1509, 0.5
  %v1638 = vmul.f32 %v1510, 0.5
  %v1639 = vmul.f32 %v1511, 0.5
  %v1640 = vmul.f32 %v1512, 0.5
  %v1641 = vmul.f32 %v1513, 0.5
  %v1642 = vmul.f32 %v1514, 0.5
  %v1643 = vmul.f32 %v1515, 0.5
  %v1644 = vmul.f32 %v1516, 0.5
  %v1645 = vmul.f32 %v1517, 0.5
  %v1646 = vmul.f32 %v1518, 0.5
  %v1647 = vmul.f32 %v1519, 0.5
  %v1648 = vmul.f32 %v1520, 0.5
  %v1649 = vmul.f32 %v1521, 0.5
  %v1650 = vmul.f32 %v1522, 0.5
  %v1651 = vmul.f32 %v309, %v1523
  %v1652 = vmul.f32 %v311, %v1524
  %v1653 = vmul.f32 %v313, %v1525
  %v1654 = vmul.f32 %v315, %v1526
  %v1655 = vmul.f32 %v319, %v1527
  %v1656 = vmul.f32 %v321, %v1528
  %v1657 = vmul.f32 %v323, %v1529
  %v1658 = vmul.f32 %v325, %v1530
  %v1659 = vmul.f32 %v329, %v1531
  %v1660 = vmul.f32 %v331, %v1532
  %v1661 = vmul.f32 %v333, %v1533
  %v1662 = vmul.f32 %v335, %v1534
  %v1663 = vmul.f32 %v339, %v1535
  %v1664 = vmul.f32 %v341, %v1536
  %v1665 = vmul.f32 %v343, %v1537
  %v1666 = vmul.f32 %v345, %v1538
  %v1667 = vmul.f32 %v349, %v1539
  %v1668 = vmul.f32 %v351, %v1540
  %v1669 = vmul.f32 %v353, %v1541
  %v1670 = vmul.f32 %v355, %v1542
  %v1671 = vmul.f32 %v359, %v1543
  %v1672 = vmul.f32 %v361, %v1544
  %v1673 = vmul.f32 %v363, %v1545
  %v1674 = vmul.f32 %v365, %v1546
  %v1675 = vmul.f32 %v369, %v1547
  %v1676 = vmul.f32 %v371, %v1548
  %v1677 = vmul.f32 %v373, %v1549
  %v1678 = vmul.f32 %v375, %v1550
  %v1679 = vmul.f32 %v379, %v1551
  %v1680 = vmul.f32 %v381, %v1552
  %v1681 = vmul.f32 %v383, %v1553
  %v1682 = vmul.f32 %v385, %v1554
  %v1683 = vmul.f32 %v389, %v1555
  %v1684 = vmul.f32 %v391, %v1556
  %v1685 = vmul.f32 %v393, %v1557
  %v1686 = vmul.f32 %v395, %v1558
  %v1687 = vmul.f32 %v399, %v1559
  %v1688 = vmul.f32 %v401, %v1560
  %v1689 = vmul.f32 %v403, %v1561
  %v1690 = vmul.f32 %v405, %v1562
  %v1691 = vmul.f32 %v409, %v1563
  %v1692 = vmul.f32 %v411, %v1564
  %v1693 = vmul.f32 %v413, %v1565
  %v1694 = vmul.f32 %v415, %v1566
  %v1695 = vmul.f32 %v419, %v1567
  %v1696 = vmul.f32 %v421, %v1568
  %v1697 = vmul.f32 %v423, %v1569
  %v1698 = vmul.f32 %v425, %v1570
  %v1699 = vmul.f32 %v429, %v1571
  %v1700 = vmul.f32 %v431, %v1572
  %v1701 = vmul.f32 %v433, %v1573
  %v1702 = vmul.f32 %v435, %v1574
  %v1703 = vmul.f32 %v439, %v1575
  %v1704 = vmul.f32 %v441, %v1576
  %v1705 = vmul.f32 %v443, %v1577
  %v1706 = vmul.f32 %v445, %v1578
  %v1707 = vmul.f32 %v449, %v1579
  %v1708 = vmul.f32 %v451, %v1580
  %v1709 = vmul.f32 %v453, %v1581
  %v1710 = vmul.f32 %v455, %v1582
  %v1711 = vmul.f32 %v459, %v1583
  %v1712 = vmul.f32 %v461, %v1584
  %v1713 = vmul.f32 %v463, %v1585
  %v1714 = vmul.f32 %v465, %v1586
  %v1715 = vmul.f32 %v469, %v1587
  %v1716 = vmul.f32 %v471, %v1588
  %v1717 = vmul.f32 %v473, %v1589
  %v1718 = vmul.f32 %v475, %v1590
  %v1719 = vmul.f32 %v479, %v1591
  %v1720 = vmul.f32 %v481, %v1592
  %v1721 = vmul.f32 %v483, %v1593
  %v1722 = vmul.f32 %v485, %v1594
  %v1723 = vmul.f32 %v489, %v1595
  %v1724 = vmul.f32 %v491, %v1596
  %v1725 = vmul.f32 %v493, %v1597
  %v1726 = vmul.f32 %v495, %v1598
  %v1727 = vmul.f32 %v499, %v1599
  %v1728 = vmul.f32 %v501, %v1600
  %v1729 = vmul.f32 %v503, %v1601
  %v1730 = vmul.f32 %v505, %v1602
  %v1731 = vmul.f32 %v509, %v1603
  %v1732 = vmul.f32 %v511, %v1604
  %v1733 = vmul.f32 %v513, %v1605
  %v1734 = vmul.f32 %v515, %v1606
  %v1735 = vmul.f32 %v519, %v1607
  %v1736 = vmul.f32 %v521, %v1608
  %v1737 = vmul.f32 %v523, %v1609
  %v1738 = vmul.f32 %v525, %v1610
  %v1739 = vmul.f32 %v529, %v1611
  %v1740 = vmul.f32 %v531, %v1612
  %v1741 = vmul.f32 %v533, %v1613
  %v1742 = vmul.f32 %v535, %v1614
  %v1743 = vmul.f32 %v539, %v1615
  %v1744 = vmul.f32 %v541, %v1616
  %v1745 = vmul.f32 %v543, %v1617
  %v1746 = vmul.f32 %v545, %v1618
  %v1747 = vmul.f32 %v549, %v1619
  %v1748 = vmul.f32 %v551, %v1620
  %v1749 = vmul.f32 %v553, %v1621
  %v1750 = vmul.f32 %v555, %v1622
  %v1751 = vmul.f32 %v559, %v1623
  %v1752 = vmul.f32 %v561, %v1624
  %v1753 = vmul.f32 %v563, %v1625
  %v1754 = vmul.f32 %v565, %v1626
  %v1755 = vmul.f32 %v569, %v1627
  %v1756 = vmul.f32 %v571, %v1628
  %v1757 = vmul.f32 %v573, %v1629
  %v1758 = vmul.f32 %v575, %v1630
  %v1759 = vmul.f32 %v579, %v1631
  %v1760 = vmul.f32 %v581, %v1632
  %v1761 = vmul.f32 %v583, %v1633
  %v1762 = vmul.f32 %v585, %v1634
  %v1763 = vmul.f32 %v589, %v1635
  %v1764 = vmul.f32 %v591, %v1636
  %v1765 = vmul.f32 %v593, %v1637
  %v1766 = vmul.f32 %v595, %v1638
  %v1767 = vmul.f32 %v599, %v1639
  %v1768 = vmul.f32 %v601, %v1640
  %v1769 = vmul.f32 %v603, %v1641
  %v1770 = vmul.f32 %v605, %v1642
  %v1771 = vmul.f32 %v609, %v1643
  %v1772 = vmul.f32 %v611, %v1644
  %v1773 = vmul.f32 %v613, %v1645
  %v1774 = vmul.f32 %v615, %v1646
  %v1775 = vmul.f32 %v619, %v1647
  %v1776 = vmul.f32 %v621, %v1648
  %v1777 = vmul.f32 %v623, %v1649
  %v1778 = vmul.f32 %v625, %v1650
  %v1779 = vpack.c.bf16 %v1653, %v1651
  %v1780 = vpack.c.bf16 %v1654, %v1652
  %v1781 = vpack.c.bf16 %v1657, %v1655
  %v1782 = vpack.c.bf16 %v1658, %v1656
  %v1783 = vpack.c.bf16 %v1661, %v1659
  %v1784 = vpack.c.bf16 %v1662, %v1660
  %v1785 = vpack.c.bf16 %v1665, %v1663
  %v1786 = vpack.c.bf16 %v1666, %v1664
  %v1787 = vpack.c.bf16 %v1669, %v1667
  %v1788 = vpack.c.bf16 %v1670, %v1668
  %v1789 = vpack.c.bf16 %v1673, %v1671
  %v1790 = vpack.c.bf16 %v1674, %v1672
  %v1791 = vpack.c.bf16 %v1677, %v1675
  %v1792 = vpack.c.bf16 %v1678, %v1676
  %v1793 = vpack.c.bf16 %v1681, %v1679
  %v1794 = vpack.c.bf16 %v1682, %v1680
  %v1795 = vpack.c.bf16 %v1685, %v1683
  %v1796 = vpack.c.bf16 %v1686, %v1684
  %v1797 = vpack.c.bf16 %v1689, %v1687
  %v1798 = vpack.c.bf16 %v1690, %v1688
  %v1799 = vpack.c.bf16 %v1693, %v1691
  %v1800 = vpack.c.bf16 %v1694, %v1692
  %v1801 = vpack.c.bf16 %v1697, %v1695
  %v1802 = vpack.c.bf16 %v1698, %v1696
  %v1803 = vpack.c.bf16 %v1701, %v1699
  %v1804 = vpack.c.bf16 %v1702, %v1700
  %v1805 = vpack.c.bf16 %v1705, %v1703
  %v1806 = vpack.c.bf16 %v1706, %v1704
  %v1807 = vpack.c.bf16 %v1709, %v1707
  %v1808 = vpack.c.bf16 %v1710, %v1708
  %v1809 = vpack.c.bf16 %v1713, %v1711
  %v1810 = vpack.c.bf16 %v1714, %v1712
  %v1811 = vpack.c.bf16 %v1717, %v1715
  %v1812 = vpack.c.bf16 %v1718, %v1716
  %v1813 = vpack.c.bf16 %v1721, %v1719
  %v1814 = vpack.c.bf16 %v1722, %v1720
  %v1815 = vpack.c.bf16 %v1725, %v1723
  %v1816 = vpack.c.bf16 %v1726, %v1724
  %v1817 = vpack.c.bf16 %v1729, %v1727
  %v1818 = vpack.c.bf16 %v1730, %v1728
  %v1819 = vpack.c.bf16 %v1733, %v1731
  %v1820 = vpack.c.bf16 %v1734, %v1732
  %v1821 = vpack.c.bf16 %v1737, %v1735
  %v1822 = vpack.c.bf16 %v1738, %v1736
  %v1823 = vpack.c.bf16 %v1741, %v1739
  %v1824 = vpack.c.bf16 %v1742, %v1740
  %v1825 = vpack.c.bf16 %v1745, %v1743
  %v1826 = vpack.c.bf16 %v1746, %v1744
  %v1827 = vpack.c.bf16 %v1749, %v1747
  %v1828 = vpack.c.bf16 %v1750, %v1748
  %v1829 = vpack.c.bf16 %v1753, %v1751
  %v1830 = vpack.c.bf16 %v1754, %v1752
  %v1831 = vpack.c.bf16 %v1757, %v1755
  %v1832 = vpack.c.bf16 %v1758, %v1756
  %v1833 = vpack.c.bf16 %v1761, %v1759
  %v1834 = vpack.c.bf16 %v1762, %v1760
  %v1835 = vpack.c.bf16 %v1765, %v1763
  %v1836 = vpack.c.bf16 %v1766, %v1764
  %v1837 = vpack.c.bf16 %v1769, %v1767
  %v1838 = vpack.c.bf16 %v1770, %v1768
  %v1839 = vpack.c.bf16 %v1773, %v1771
  %v1840 = vpack.c.bf16 %v1774, %v1772
  %v1841 = vpack.c.bf16 %v1777, %v1775
  %v1842 = vpack.c.bf16 %v1778, %v1776
  %v1843 = vld [vmem:[%s3] sm:$0xf]
  %v1844 = vld [vmem:[%s3 + $0x4] sm:$0xf]
  %v1845 = vld [vmem:[%s3 + $0x8] sm:$0xf]
  %v1846 = vld [vmem:[%s3 + $0xc] sm:$0xf]
  %v1847 = vld [vmem:[%s3 + $0x10] sm:$0xf]
  %v1848 = vld [vmem:[%s3 + $0x14] sm:$0xf]
  %v1849 = vld [vmem:[%s3 + $0x18] sm:$0xf]
  %v1850 = vld [vmem:[%s3 + $0x1c] sm:$0xf]
  %v1851 = vld [vmem:[%s3 + $0x20] sm:$0xf]
  %v1852 = vld [vmem:[%s3 + $0x24] sm:$0xf]
  %v1853 = vld [vmem:[%s3 + $0x28] sm:$0xf]
  %v1854 = vld [vmem:[%s3 + $0x2c] sm:$0xf]
  %v1855 = vld [vmem:[%s3 + $0x30] sm:$0xf]
  %v1856 = vld [vmem:[%s3 + $0x34] sm:$0xf]
  %v1857 = vld [vmem:[%s3 + $0x38] sm:$0xf]
  %v1858 = vld [vmem:[%s3 + $0x3c] sm:$0xf]
  %v1859 = vld [vmem:[%s3 + $0x40] sm:$0xf]
  %v1860 = vld [vmem:[%s3 + $0x44] sm:$0xf]
  %v1861 = vld [vmem:[%s3 + $0x48] sm:$0xf]
  %v1862 = vld [vmem:[%s3 + $0x4c] sm:$0xf]
  %v1863 = vld [vmem:[%s3 + $0x50] sm:$0xf]
  %v1864 = vld [vmem:[%s3 + $0x54] sm:$0xf]
  %v1865 = vld [vmem:[%s3 + $0x58] sm:$0xf]
  %v1866 = vld [vmem:[%s3 + $0x5c] sm:$0xf]
  %v1867 = vld [vmem:[%s3 + $0x60] sm:$0xf]
  %v1868 = vld [vmem:[%s3 + $0x64] sm:$0xf]
  %v1869 = vld [vmem:[%s3 + $0x68] sm:$0xf]
  %v1870 = vld [vmem:[%s3 + $0x6c] sm:$0xf]
  %v1871 = vld [vmem:[%s3 + $0x70] sm:$0xf]
  %v1872 = vld [vmem:[%s3 + $0x74] sm:$0xf]
  %v1873 = vld [vmem:[%s3 + $0x78] sm:$0xf]
  %v1874 = vld [vmem:[%s3 + $0x7c] sm:$0xf]
  %v1875 = vld [vmem:[%s4] sm:$0x1]
  %v1877 = vlaneseq
  %v1878 = vshrl.u32 %v1877, 7
  %v1879 = vsub.s32 0, %v1878
  %v1880 = vrot.slane %v1875, %v1879
  %v1914 = vunpack.c.l.b16 %v1843
  %v1915 = vunpack.c.l.b16 %v1844
  %v1916 = vunpack.c.l.b16 %v1845
  %v1917 = vunpack.c.l.b16 %v1846
  %v1918 = vunpack.c.l.b16 %v1847
  %v1919 = vunpack.c.l.b16 %v1848
  %v1920 = vunpack.c.l.b16 %v1849
  %v1921 = vunpack.c.l.b16 %v1850
  %v1922 = vunpack.c.l.b16 %v1851
  %v1923 = vunpack.c.l.b16 %v1852
  %v1924 = vunpack.c.l.b16 %v1853
  %v1925 = vunpack.c.l.b16 %v1854
  %v1926 = vunpack.c.l.b16 %v1855
  %v1927 = vunpack.c.l.b16 %v1856
  %v1928 = vunpack.c.l.b16 %v1857
  %v1929 = vunpack.c.l.b16 %v1858
  %v1930 = vunpack.c.l.b16 %v1859
  %v1931 = vunpack.c.l.b16 %v1860
  %v1932 = vunpack.c.l.b16 %v1861
  %v1933 = vunpack.c.l.b16 %v1862
  %v1934 = vunpack.c.l.b16 %v1863
  %v1935 = vunpack.c.l.b16 %v1864
  %v1936 = vunpack.c.l.b16 %v1865
  %v1937 = vunpack.c.l.b16 %v1866
  %v1938 = vunpack.c.l.b16 %v1867
  %v1939 = vunpack.c.l.b16 %v1868
  %v1940 = vunpack.c.l.b16 %v1869
  %v1941 = vunpack.c.l.b16 %v1870
  %v1942 = vunpack.c.l.b16 %v1871
  %v1943 = vunpack.c.l.b16 %v1872
  %v1944 = vunpack.c.l.b16 %v1873
  %v1945 = vunpack.c.l.b16 %v1874
  %v1946 = vpack.c.b16 %v1915, %v1914
  %v1947 = vpack.c.b16 %v1917, %v1916
  %v1948 = vpack.c.b16 %v1919, %v1918
  %v1949 = vpack.c.b16 %v1921, %v1920
  %v1950 = vpack.c.b16 %v1923, %v1922
  %v1951 = vpack.c.b16 %v1925, %v1924
  %v1952 = vpack.c.b16 %v1927, %v1926
  %v1953 = vpack.c.b16 %v1929, %v1928
  %v1954 = vpack.c.b16 %v1931, %v1930
  %v1955 = vpack.c.b16 %v1933, %v1932
  %v1956 = vpack.c.b16 %v1935, %v1934
  %v1957 = vpack.c.b16 %v1937, %v1936
  %v1958 = vpack.c.b16 %v1939, %v1938
  %v1959 = vpack.c.b16 %v1941, %v1940
  %v1960 = vpack.c.b16 %v1943, %v1942
  %v1961 = vpack.c.b16 %v1945, %v1944
  %1978 = vmatprep.subr.bf16.mxu0 0
  %1979 = vmatpush1.bf16.msra.mxu0 %v1946
  %1980 = vmatprep.subr.bf16.mxu0 0
  %1981 = vmatpush1.bf16.msra.mxu0 %v1947
  %1982 = vmatprep.subr.bf16.mxu0 0
  %1983 = vmatpush1.bf16.msra.mxu0 %v1948
  %1984 = vmatprep.subr.bf16.mxu0 0
  %1985 = vmatpush1.bf16.msra.mxu0 %v1949
  %1986 = vmatprep.subr.bf16.mxu0 0
  %1987 = vmatpush1.bf16.msra.mxu0 %v1950
  %1988 = vmatprep.subr.bf16.mxu0 0
  %1989 = vmatpush1.bf16.msra.mxu0 %v1951
  %1990 = vmatprep.subr.bf16.mxu0 0
  %1991 = vmatpush1.bf16.msra.mxu0 %v1952
  %1992 = vmatprep.subr.bf16.mxu0 0
  %1993 = vmatpush1.bf16.msra.mxu0 %v1953
  %1994 = vmatprep.subr.bf16.mxu0 0
  %1995 = vmatpush1.bf16.msra.mxu0 %v1954
  %1996 = vmatprep.subr.bf16.mxu0 0
  %1997 = vmatpush1.bf16.msra.mxu0 %v1955
  %1998 = vmatprep.subr.bf16.mxu0 0
  %1999 = vmatpush1.bf16.msra.mxu0 %v1956
  %2000 = vmatprep.subr.bf16.mxu0 0
  %2001 = vmatpush1.bf16.msra.mxu0 %v1957
  %2002 = vmatprep.subr.bf16.mxu0 0
  %2003 = vmatpush1.bf16.msra.mxu0 %v1958
  %2004 = vmatprep.subr.bf16.mxu0 0
  %2005 = vmatpush1.bf16.msra.mxu0 %v1959
  %2006 = vmatprep.subr.bf16.mxu0 0
  %2007 = vmatpush1.bf16.msra.mxu0 %v1960
  %2008 = vmatprep.subr.bf16.mxu0 0
  %2009 = vmatpush1.bf16.msra.mxu0 %v1961
  %2010 = vmatprep.mubr.bf16.mxu0 %v1780
  %2011 = vmatmul.mubr.bf16.gmra.mrb[0].mxu0 %v1779
  %v2012 = vpop.f32.mrb[0].mxu0
  %v2013 = vadd.f32 %v1880, %v2012
  %v2014 = vpop.f32.mrb[0].mxu0
  %v2015 = vpop.f32.mrb[0].mxu0
  %v2016 = vadd.f32 %v1880, %v2015
  %v2017 = vpop.f32.mrb[0].mxu0
  %2018 = vmatprep.mubr.bf16.mxu0 %v1782
  %2019 = vmatmul.mubr.bf16.gmra.mrb[0].mxu0 %v1781
  %v2020 = vpop.f32.mrb[0].mxu0
  %v2021 = vadd.f32 %v1880, %v2020
  %v2022 = vpop.f32.mrb[0].mxu0
  %v2023 = vpop.f32.mrb[0].mxu0
  %v2024 = vadd.f32 %v1880, %v2023
  %v2025 = vpop.f32.mrb[0].mxu0
  %2026 = vmatprep.mubr.bf16.mxu0 %v1784
  %2027 = vmatmul.mubr.bf16.gmra.mrb[0].mxu0 %v1783
  %v2028 = vpop.f32.mrb[0].mxu0
  %v2029 = vadd.f32 %v1880, %v2028
  %v2030 = vpop.f32.mrb[0].mxu0
  %v2031 = vpop.f32.mrb[0].mxu0
  %v2032 = vadd.f32 %v1880, %v2031
  %v2033 = vpop.f32.mrb[0].mxu0
  %2034 = vmatprep.mubr.bf16.mxu0 %v1786
  %2035 = vmatmul.mubr.bf16.gmra.mrb[0].mxu0 %v1785
  %v2036 = vpop.f32.mrb[0].mxu0
  %v2037 = vadd.f32 %v1880, %v2036
  %v2038 = vpop.f32.mrb[0].mxu0
  %v2039 = vpop.f32.mrb[0].mxu0
  %v2040 = vadd.f32 %v1880, %v2039
  %v2041 = vpop.f32.mrb[0].mxu0
  %2042 = vmatprep.mubr.bf16.mxu0 %v1788
  %2043 = vmatmul.mubr.bf16.gmra.mrb[0].mxu0 %v1787
  %v2044 = vpop.f32.mrb[0].mxu0
  %v2045 = vadd.f32 %v1880, %v2044
  %v2046 = vpop.f32.mrb[0].mxu0
  %v2047 = vpop.f32.mrb[0].mxu0
  %v2048 = vadd.f32 %v1880, %v2047
  %v2049 = vpop.f32.mrb[0].mxu0
  %2050 = vmatprep.mubr.bf16.mxu0 %v1790
  %2051 = vmatmul.mubr.bf16.gmra.mrb[0].mxu0 %v1789
  %v2052 = vpop.f32.mrb[0].mxu0
  %v2053 = vadd.f32 %v1880, %v2052
  %v2054 = vpop.f32.mrb[0].mxu0
  %v2055 = vpop.f32.mrb[0].mxu0
  %v2056 = vadd.f32 %v1880, %v2055
  %v2057 = vpop.f32.mrb[0].mxu0
  %2058 = vmatprep.mubr.bf16.mxu0 %v1792
  %2059 = vmatmul.mubr.bf16.gmra.mrb[0].mxu0 %v1791
  %v2060 = vpop.f32.mrb[0].mxu0
  %v2061 = vadd.f32 %v1880, %v2060
  %v2062 = vpop.f32.mrb[0].mxu0
  %v2063 = vpop.f32.mrb[0].mxu0
  %v2064 = vadd.f32 %v1880, %v2063
  %v2065 = vpop.f32.mrb[0].mxu0
  %2066 = vmatprep.mubr.bf16.mxu0 %v1794
  %2067 = vmatmul.mubr.bf16.gmra.mrb[0].mxu0 %v1793
  %v2068 = vpop.f32.mrb[0].mxu0
  %v2069 = vadd.f32 %v1880, %v2068
  %v2070 = vpop.f32.mrb[0].mxu0
  %v2071 = vpop.f32.mrb[0].mxu0
  %v2072 = vadd.f32 %v1880, %v2071
  %v2073 = vpop.f32.mrb[0].mxu0
  %2074 = vmatprep.mubr.bf16.mxu0 %v1796
  %2075 = vmatmul.mubr.bf16.gmra.mrb[0].mxu0 %v1795
  %v2076 = vpop.f32.mrb[0].mxu0
  %v2077 = vadd.f32 %v1880, %v2076
  %v2078 = vpop.f32.mrb[0].mxu0
  %v2079 = vpop.f32.mrb[0].mxu0
  %v2080 = vadd.f32 %v1880, %v2079
  %v2081 = vpop.f32.mrb[0].mxu0
  %2082 = vmatprep.mubr.bf16.mxu0 %v1798
  %2083 = vmatmul.mubr.bf16.gmra.mrb[0].mxu0 %v1797
  %v2084 = vpop.f32.mrb[0].mxu0
  %v2085 = vadd.f32 %v1880, %v2084
  %v2086 = vpop.f32.mrb[0].mxu0
  %v2087 = vpop.f32.mrb[0].mxu0
  %v2088 = vadd.f32 %v1880, %v2087
  %v2089 = vpop.f32.mrb[0].mxu0
  %2090 = vmatprep.mubr.bf16.mxu0 %v1800
  %2091 = vmatmul.mubr.bf16.gmra.mrb[0].mxu0 %v1799
  %v2092 = vpop.f32.mrb[0].mxu0
  %v2093 = vadd.f32 %v1880, %v2092
  %v2094 = vpop.f32.mrb[0].mxu0
  %v2095 = vpop.f32.mrb[0].mxu0
  %v2096 = vadd.f32 %v1880, %v2095
  %v2097 = vpop.f32.mrb[0].mxu0
  %2098 = vmatprep.mubr.bf16.mxu0 %v1802
  %2099 = vmatmul.mubr.bf16.gmra.mrb[0].mxu0 %v1801
  %v2100 = vpop.f32.mrb[0].mxu0
  %v2101 = vadd.f32 %v1880, %v2100
  %v2102 = vpop.f32.mrb[0].mxu0
  %v2103 = vpop.f32.mrb[0].mxu0
  %v2104 = vadd.f32 %v1880, %v2103
  %v2105 = vpop.f32.mrb[0].mxu0
  %2106 = vmatprep.mubr.bf16.mxu0 %v1804
  %2107 = vmatmul.mubr.bf16.gmra.mrb[0].mxu0 %v1803
  %v2108 = vpop.f32.mrb[0].mxu0
  %v2109 = vadd.f32 %v1880, %v2108
  %v2110 = vpop.f32.mrb[0].mxu0
  %v2111 = vpop.f32.mrb[0].mxu0
  %v2112 = vadd.f32 %v1880, %v2111
  %v2113 = vpop.f32.mrb[0].mxu0
  %2114 = vmatprep.mubr.bf16.mxu0 %v1806
  %2115 = vmatmul.mubr.bf16.gmra.mrb[0].mxu0 %v1805
  %v2116 = vpop.f32.mrb[0].mxu0
  %v2117 = vadd.f32 %v1880, %v2116
  %v2118 = vpop.f32.mrb[0].mxu0
  %v2119 = vpop.f32.mrb[0].mxu0
  %v2120 = vadd.f32 %v1880, %v2119
  %v2121 = vpop.f32.mrb[0].mxu0
  %2122 = vmatprep.mubr.bf16.mxu0 %v1808
  %2123 = vmatmul.mubr.bf16.gmra.mrb[0].mxu0 %v1807
  %v2124 = vpop.f32.mrb[0].mxu0
  %v2125 = vadd.f32 %v1880, %v2124
  %v2126 = vpop.f32.mrb[0].mxu0
  %v2127 = vpop.f32.mrb[0].mxu0
  %v2128 = vadd.f32 %v1880, %v2127
  %v2129 = vpop.f32.mrb[0].mxu0
  %2130 = vmatprep.mubr.bf16.mxu0 %v1810
  %2131 = vmatmul.mubr.bf16.gmra.mrb[0].mxu0 %v1809
  %v2132 = vpop.f32.mrb[0].mxu0
  %v2133 = vadd.f32 %v1880, %v2132
  %v2134 = vpop.f32.mrb[0].mxu0
  %v2135 = vpop.f32.mrb[0].mxu0
  %v2136 = vadd.f32 %v1880, %v2135
  %v2137 = vpop.f32.mrb[0].mxu0
  %2138 = vmatprep.mubr.bf16.mxu0 %v1812
  %2139 = vmatmul.mubr.bf16.gmra.mrb[0].mxu0 %v1811
  %v2140 = vpop.f32.mrb[0].mxu0
  %v2141 = vadd.f32 %v1880, %v2140
  %v2142 = vpop.f32.mrb[0].mxu0
  %v2143 = vpop.f32.mrb[0].mxu0
  %v2144 = vadd.f32 %v1880, %v2143
  %v2145 = vpop.f32.mrb[0].mxu0
  %2146 = vmatprep.mubr.bf16.mxu0 %v1814
  %2147 = vmatmul.mubr.bf16.gmra.mrb[0].mxu0 %v1813
  %v2148 = vpop.f32.mrb[0].mxu0
  %v2149 = vadd.f32 %v1880, %v2148
  %v2150 = vpop.f32.mrb[0].mxu0
  %v2151 = vpop.f32.mrb[0].mxu0
  %v2152 = vadd.f32 %v1880, %v2151
  %v2153 = vpop.f32.mrb[0].mxu0
  %2154 = vmatprep.mubr.bf16.mxu0 %v1816
  %2155 = vmatmul.mubr.bf16.gmra.mrb[0].mxu0 %v1815
  %v2156 = vpop.f32.mrb[0].mxu0
  %v2157 = vadd.f32 %v1880, %v2156
  %v2158 = vpop.f32.mrb[0].mxu0
  %v2159 = vpop.f32.mrb[0].mxu0
  %v2160 = vadd.f32 %v1880, %v2159
  %v2161 = vpop.f32.mrb[0].mxu0
  %2162 = vmatprep.mubr.bf16.mxu0 %v1818
  %2163 = vmatmul.mubr.bf16.gmra.mrb[0].mxu0 %v1817
  %v2164 = vpop.f32.mrb[0].mxu0
  %v2165 = vadd.f32 %v1880, %v2164
  %v2166 = vpop.f32.mrb[0].mxu0
  %v2167 = vpop.f32.mrb[0].mxu0
  %v2168 = vadd.f32 %v1880, %v2167
  %v2169 = vpop.f32.mrb[0].mxu0
  %2170 = vmatprep.mubr.bf16.mxu0 %v1820
  %2171 = vmatmul.mubr.bf16.gmra.mrb[0].mxu0 %v1819
  %v2172 = vpop.f32.mrb[0].mxu0
  %v2173 = vadd.f32 %v1880, %v2172
  %v2174 = vpop.f32.mrb[0].mxu0
  %v2175 = vpop.f32.mrb[0].mxu0
  %v2176 = vadd.f32 %v1880, %v2175
  %v2177 = vpop.f32.mrb[0].mxu0
  %2178 = vmatprep.mubr.bf16.mxu0 %v1822
  %2179 = vmatmul.mubr.bf16.gmra.mrb[0].mxu0 %v1821
  %v2180 = vpop.f32.mrb[0].mxu0
  %v2181 = vadd.f32 %v1880, %v2180
  %v2182 = vpop.f32.mrb[0].mxu0
  %v2183 = vpop.f32.mrb[0].mxu0
  %v2184 = vadd.f32 %v1880, %v2183
  %v2185 = vpop.f32.mrb[0].mxu0
  %2186 = vmatprep.mubr.bf16.mxu0 %v1824
  %2187 = vmatmul.mubr.bf16.gmra.mrb[0].mxu0 %v1823
  %v2188 = vpop.f32.mrb[0].mxu0
  %v2189 = vadd.f32 %v1880, %v2188
  %v2190 = vpop.f32.mrb[0].mxu0
  %v2191 = vpop.f32.mrb[0].mxu0
  %v2192 = vadd.f32 %v1880, %v2191
  %v2193 = vpop.f32.mrb[0].mxu0
  %2194 = vmatprep.mubr.bf16.mxu0 %v1826
  %2195 = vmatmul.mubr.bf16.gmra.mrb[0].mxu0 %v1825
  %v2196 = vpop.f32.mrb[0].mxu0
  %v2197 = vadd.f32 %v1880, %v2196
  %v2198 = vpop.f32.mrb[0].mxu0
  %v2199 = vpop.f32.mrb[0].mxu0
  %v2200 = vadd.f32 %v1880, %v2199
  %v2201 = vpop.f32.mrb[0].mxu0
  %2202 = vmatprep.mubr.bf16.mxu0 %v1828
  %2203 = vmatmul.mubr.bf16.gmra.mrb[0].mxu0 %v1827
  %v2204 = vpop.f32.mrb[0].mxu0
  %v2205 = vadd.f32 %v1880, %v2204
  %v2206 = vpop.f32.mrb[0].mxu0
  %v2207 = vpop.f32.mrb[0].mxu0
  %v2208 = vadd.f32 %v1880, %v2207
  %v2209 = vpop.f32.mrb[0].mxu0
  %2210 = vmatprep.mubr.bf16.mxu0 %v1830
  %2211 = vmatmul.mubr.bf16.gmra.mrb[0].mxu0 %v1829
  %v2212 = vpop.f32.mrb[0].mxu0
  %v2213 = vadd.f32 %v1880, %v2212
  %v2214 = vpop.f32.mrb[0].mxu0
  %v2215 = vpop.f32.mrb[0].mxu0
  %v2216 = vadd.f32 %v1880, %v2215
  %v2217 = vpop.f32.mrb[0].mxu0
  %2218 = vmatprep.mubr.bf16.mxu0 %v1832
  %2219 = vmatmul.mubr.bf16.gmra.mrb[0].mxu0 %v1831
  %v2220 = vpop.f32.mrb[0].mxu0
  %v2221 = vadd.f32 %v1880, %v2220
  %v2222 = vpop.f32.mrb[0].mxu0
  %v2223 = vpop.f32.mrb[0].mxu0
  %v2224 = vadd.f32 %v1880, %v2223
  %v2225 = vpop.f32.mrb[0].mxu0
  %2226 = vmatprep.mubr.bf16.mxu0 %v1834
  %2227 = vmatmul.mubr.bf16.gmra.mrb[0].mxu0 %v1833
  %v2228 = vpop.f32.mrb[0].mxu0
  %v2229 = vadd.f32 %v1880, %v2228
  %v2230 = vpop.f32.mrb[0].mxu0
  %v2231 = vpop.f32.mrb[0].mxu0
  %v2232 = vadd.f32 %v1880, %v2231
  %v2233 = vpop.f32.mrb[0].mxu0
  %2234 = vmatprep.mubr.bf16.mxu0 %v1836
  %2235 = vmatmul.mubr.bf16.gmra.mrb[0].mxu0 %v1835
  %v2236 = vpop.f32.mrb[0].mxu0
  %v2237 = vadd.f32 %v1880, %v2236
  %v2238 = vpop.f32.mrb[0].mxu0
  %v2239 = vpop.f32.mrb[0].mxu0
  %v2240 = vadd.f32 %v1880, %v2239
  %v2241 = vpop.f32.mrb[0].mxu0
  %2242 = vmatprep.mubr.bf16.mxu0 %v1838
  %2243 = vmatmul.mubr.bf16.gmra.mrb[0].mxu0 %v1837
  %v2244 = vpop.f32.mrb[0].mxu0
  %v2245 = vadd.f32 %v1880, %v2244
  %v2246 = vpop.f32.mrb[0].mxu0
  %v2247 = vpop.f32.mrb[0].mxu0
  %v2248 = vadd.f32 %v1880, %v2247
  %v2249 = vpop.f32.mrb[0].mxu0
  %2250 = vmatprep.mubr.bf16.mxu0 %v1840
  %2251 = vmatmul.mubr.bf16.gmra.mrb[0].mxu0 %v1839
  %v2252 = vpop.f32.mrb[0].mxu0
  %v2253 = vadd.f32 %v1880, %v2252
  %v2254 = vpop.f32.mrb[0].mxu0
  %v2255 = vpop.f32.mrb[0].mxu0
  %v2256 = vadd.f32 %v1880, %v2255
  %v2257 = vpop.f32.mrb[0].mxu0
  %2258 = vmatprep.mubr.bf16.mxu0 %v1842
  %2259 = vmatmul.mubr.bf16.gmra.mrb[0].mxu0 %v1841
  %v2260 = vpop.f32.mrb[0].mxu0
  %v2261 = vadd.f32 %v1880, %v2260
  %v2262 = vpop.f32.mrb[0].mxu0
  %v2263 = vpop.f32.mrb[0].mxu0
  %v2264 = vadd.f32 %v1880, %v2263
  %v2265 = vpop.f32.mrb[0].mxu0
  %2266 = vdwg.mxu0
  %v2267 = vadd.f32 %v2013, %v21
  %v2268 = vadd.f32 %v2016, %v22
  %v2269 = vadd.f32 %v2021, %v23
  %v2270 = vadd.f32 %v2024, %v24
  %v2271 = vadd.f32 %v2029, %v25
  %v2272 = vadd.f32 %v2032, %v26
  %v2273 = vadd.f32 %v2037, %v27
  %v2274 = vadd.f32 %v2040, %v28
  %v2275 = vadd.f32 %v2045, %v29
  %v2276 = vadd.f32 %v2048, %v30
  %v2277 = vadd.f32 %v2053, %v31
  %v2278 = vadd.f32 %v2056, %v32
  %v2279 = vadd.f32 %v2061, %v33
  %v2280 = vadd.f32 %v2064, %v34
  %v2281 = vadd.f32 %v2069, %v35
  %v2282 = vadd.f32 %v2072, %v36
  %v2283 = vadd.f32 %v2077, %v37
  %v2284 = vadd.f32 %v2080, %v38
  %v2285 = vadd.f32 %v2085, %v39
  %v2286 = vadd.f32 %v2088, %v40
  %v2287 = vadd.f32 %v2093, %v41
  %v2288 = vadd.f32 %v2096, %v42
  %v2289 = vadd.f32 %v2101, %v43
  %v2290 = vadd.f32 %v2104, %v44
  %v2291 = vadd.f32 %v2109, %v45
  %v2292 = vadd.f32 %v2112, %v46
  %v2293 = vadd.f32 %v2117, %v47
  %v2294 = vadd.f32 %v2120, %v48
  %v2295 = vadd.f32 %v2125, %v49
  %v2296 = vadd.f32 %v2128, %v50
  %v2297 = vadd.f32 %v2133, %v51
  %v2298 = vadd.f32 %v2136, %v52
  %v2299 = vadd.f32 %v2141, %v53
  %v2300 = vadd.f32 %v2144, %v54
  %v2301 = vadd.f32 %v2149, %v55
  %v2302 = vadd.f32 %v2152, %v56
  %v2303 = vadd.f32 %v2157, %v57
  %v2304 = vadd.f32 %v2160, %v58
  %v2305 = vadd.f32 %v2165, %v59
  %v2306 = vadd.f32 %v2168, %v60
  %v2307 = vadd.f32 %v2173, %v61
  %v2308 = vadd.f32 %v2176, %v62
  %v2309 = vadd.f32 %v2181, %v63
  %v2310 = vadd.f32 %v2184, %v64
  %v2311 = vadd.f32 %v2189, %v65
  %v2312 = vadd.f32 %v2192, %v66
  %v2313 = vadd.f32 %v2197, %v67
  %v2314 = vadd.f32 %v2200, %v68
  %v2315 = vadd.f32 %v2205, %v69
  %v2316 = vadd.f32 %v2208, %v70
  %v2317 = vadd.f32 %v2213, %v71
  %v2318 = vadd.f32 %v2216, %v72
  %v2319 = vadd.f32 %v2221, %v73
  %v2320 = vadd.f32 %v2224, %v74
  %v2321 = vadd.f32 %v2229, %v75
  %v2322 = vadd.f32 %v2232, %v76
  %v2323 = vadd.f32 %v2237, %v77
  %v2324 = vadd.f32 %v2240, %v78
  %v2325 = vadd.f32 %v2245, %v79
  %v2326 = vadd.f32 %v2248, %v80
  %v2327 = vadd.f32 %v2253, %v81
  %v2328 = vadd.f32 %v2256, %v82
  %v2329 = vadd.f32 %v2261, %v83
  %v2330 = vadd.f32 %v2264, %v84
  %2331 = vst.msk [vmem:[%s5] sm:$0xff] %vm177, %v2267
  %2332 = vst.msk [vmem:[%s5 + $0x8] sm:$0xff] %vm177, %v2268
  %2333 = vst.msk [vmem:[%s5 + $0x10] sm:$0xff] %vm177, %v2269
  %2334 = vst.msk [vmem:[%s5 + $0x18] sm:$0xff] %vm177, %v2270
  %2335 = vst.msk [vmem:[%s5 + $0x20] sm:$0xff] %vm177, %v2271
  %2336 = vst.msk [vmem:[%s5 + $0x28] sm:$0xff] %vm177, %v2272
  %2337 = vst.msk [vmem:[%s5 + $0x30] sm:$0xff] %vm177, %v2273
  %2338 = vst.msk [vmem:[%s5 + $0x38] sm:$0xff] %vm177, %v2274
  %2339 = vst.msk [vmem:[%s5 + $0x40] sm:$0xff] %vm177, %v2275
  %2340 = vst.msk [vmem:[%s5 + $0x48] sm:$0xff] %vm177, %v2276
  %2341 = vst.msk [vmem:[%s5 + $0x50] sm:$0xff] %vm177, %v2277
  %2342 = vst.msk [vmem:[%s5 + $0x58] sm:$0xff] %vm177, %v2278
  %2343 = vst.msk [vmem:[%s5 + $0x60] sm:$0xff] %vm177, %v2279
  %2344 = vst.msk [vmem:[%s5 + $0x68] sm:$0xff] %vm177, %v2280
  %2345 = vst.msk [vmem:[%s5 + $0x70] sm:$0xff] %vm177, %v2281
  %2346 = vst.msk [vmem:[%s5 + $0x78] sm:$0xff] %vm177, %v2282
  %2347 = vst.msk [vmem:[%s5 + $0x80] sm:$0xff] %vm177, %v2283
  %2348 = vst.msk [vmem:[%s5 + $0x88] sm:$0xff] %vm177, %v2284
  %2349 = vst.msk [vmem:[%s5 + $0x90] sm:$0xff] %vm177, %v2285
  %2350 = vst.msk [vmem:[%s5 + $0x98] sm:$0xff] %vm177, %v2286
  %2351 = vst.msk [vmem:[%s5 + $0xa0] sm:$0xff] %vm177, %v2287
  %2352 = vst.msk [vmem:[%s5 + $0xa8] sm:$0xff] %vm177, %v2288
  %2353 = vst.msk [vmem:[%s5 + $0xb0] sm:$0xff] %vm177, %v2289
  %2354 = vst.msk [vmem:[%s5 + $0xb8] sm:$0xff] %vm177, %v2290
  %2355 = vst.msk [vmem:[%s5 + $0xc0] sm:$0xff] %vm177, %v2291
  %2356 = vst.msk [vmem:[%s5 + $0xc8] sm:$0xff] %vm177, %v2292
  %2357 = vst.msk [vmem:[%s5 + $0xd0] sm:$0xff] %vm177, %v2293
  %2358 = vst.msk [vmem:[%s5 + $0xd8] sm:$0xff] %vm177, %v2294
  %2359 = vst.msk [vmem:[%s5 + $0xe0] sm:$0xff] %vm177, %v2295
  %2360 = vst.msk [vmem:[%s5 + $0xe8] sm:$0xff] %vm177, %v2296
  %2361 = vst.msk [vmem:[%s5 + $0xf0] sm:$0xff] %vm177, %v2297
  %2362 = vst.msk [vmem:[%s5 + $0xf8] sm:$0xff] %vm177, %v2298
  %2363 = vst.msk [vmem:[%s5 + $0x100] sm:$0xff] %vm177, %v2299
  %2364 = vst.msk [vmem:[%s5 + $0x108] sm:$0xff] %vm177, %v2300
  %2365 = vst.msk [vmem:[%s5 + $0x110] sm:$0xff] %vm177, %v2301
  %2366 = vst.msk [vmem:[%s5 + $0x118] sm:$0xff] %vm177, %v2302
  %2367 = vst.msk [vmem:[%s5 + $0x120] sm:$0xff] %vm177, %v2303
  %2368 = vst.msk [vmem:[%s5 + $0x128] sm:$0xff] %vm177, %v2304
  %2369 = vst.msk [vmem:[%s5 + $0x130] sm:$0xff] %vm177, %v2305
  %2370 = vst.msk [vmem:[%s5 + $0x138] sm:$0xff] %vm177, %v2306
  %2371 = vst.msk [vmem:[%s5 + $0x140] sm:$0xff] %vm177, %v2307
  %2372 = vst.msk [vmem:[%s5 + $0x148] sm:$0xff] %vm177, %v2308
  %2373 = vst.msk [vmem:[%s5 + $0x150] sm:$0xff] %vm177, %v2309
  %2374 = vst.msk [vmem:[%s5 + $0x158] sm:$0xff] %vm177, %v2310
  %2375 = vst.msk [vmem:[%s5 + $0x160] sm:$0xff] %vm177, %v2311
  %2376 = vst.msk [vmem:[%s5 + $0x168] sm:$0xff] %vm177, %v2312
  %2377 = vst.msk [vmem:[%s5 + $0x170] sm:$0xff] %vm177, %v2313
  %2378 = vst.msk [vmem:[%s5 + $0x178] sm:$0xff] %vm177, %v2314
  %2379 = vst.msk [vmem:[%s5 + $0x180] sm:$0xff] %vm177, %v2315
  %2380 = vst.msk [vmem:[%s5 + $0x188] sm:$0xff] %vm177, %v2316
  %2381 = vst.msk [vmem:[%s5 + $0x190] sm:$0xff] %vm177, %v2317
  %2382 = vst.msk [vmem:[%s5 + $0x198] sm:$0xff] %vm177, %v2318
  %2383 = vst.msk [vmem:[%s5 + $0x1a0] sm:$0xff] %vm177, %v2319
  %2384 = vst.msk [vmem:[%s5 + $0x1a8] sm:$0xff] %vm177, %v2320
  %2385 = vst.msk [vmem:[%s5 + $0x1b0] sm:$0xff] %vm177, %v2321
  %2386 = vst.msk [vmem:[%s5 + $0x1b8] sm:$0xff] %vm177, %v2322
  %2387 = vst.msk [vmem:[%s5 + $0x1c0] sm:$0xff] %vm177, %v2323
  %2388 = vst.msk [vmem:[%s5 + $0x1c8] sm:$0xff] %vm177, %v2324
  %2389 = vst.msk [vmem:[%s5 + $0x1d0] sm:$0xff] %vm177, %v2325
  %2390 = vst.msk [vmem:[%s5 + $0x1d8] sm:$0xff] %vm177, %v2326
  %2391 = vst.msk [vmem:[%s5 + $0x1e0] sm:$0xff] %vm177, %v2327
  %2392 = vst.msk [vmem:[%s5 + $0x1e8] sm:$0xff] %vm177, %v2328
  %2393 = vst.msk [vmem:[%s5 + $0x1f0] sm:$0xff] %vm177, %v2329
  %2394 = vst.msk [vmem:[%s5 + $0x1f8] sm:$0xff] %vm177, %v2330
  // Predicated region
  $region22: #{tpu_custom_call.1} parent=0 // pred_check
    _
  $region23: #{tpu_custom_call.1} parent=0 // pred_check_branch
    %2396 = sbr.rel (0) target = $region25
  $region24: #{tpu_custom_call.1} parent=0 // pred_region
    _
  $region25: #{tpu_custom_call.1} parent=0 // pred_fallthru
    _
  // Predicated region
  $region26: #{tpu_custom_call.1} parent=0 // pred_check
    _
  $region27: #{tpu_custom_call.1} parent=0 // pred_check_branch
    %2398 = sbr.rel (0) target = $region29
  $region28: #{tpu_custom_call.1} parent=0 // pred_region
    _
  $region29: #{tpu_custom_call.1} parent=0 // pred_fallthru
    _

// kernel: tpu_custom_call.1
$region0: #{tpu_custom_call.1}
  #allocation0 [shape = 'u32[]', space=smem, size = 0x4, offset = 0x4, fixed_abs, tag = 'smem constant byte address 0x4 - core index']
  #allocation1 [shape = 'u32[144,128]{1,0:T(1,128)}', space=vmem, size = 0x12000, scoped, tag = 'internal scratch']
  %s0 = inlined_call_operand.vmem [shape: f32[512,64], index: 0, kind: input, shape index: {}]
  %s1 = inlined_call_operand.vmem [shape: bf16[64,256], index: 1, kind: input, shape index: {}]
  %s2 = inlined_call_operand.vmem [shape: f32[1,256], index: 2, kind: input, shape index: {}]
  %s3 = inlined_call_operand.vmem [shape: bf16[256,64], index: 3, kind: input, shape index: {}]
  %s4 = inlined_call_operand.vmem [shape: f32[1,64], index: 4, kind: input, shape index: {}]
  %s5 = inlined_call_operand.vmem [shape: f32[512,64], index: 5, kind: output, shape index: {}]
  %s6 = sld [smem:[#allocation0]]
  $region30: #{tpu_custom_call.1} parent=0
    _
  %s8 = ssub.s32 1, %s6
  %s9 = scalar_select 0, %s8, %s6
  // Predicated region
  $region2: #{tpu_custom_call.1} parent=0 // pred_check
    _
  $region3: #{tpu_custom_call.1} parent=0 // pred_check_branch
    %11 = sbr.rel (0) target = $region5
  $region4: #{tpu_custom_call.1} parent=0 // pred_region
    _
  $region5: #{tpu_custom_call.1} parent=0 // pred_fallthru
    _
  // Predicated region
  $region6: #{tpu_custom_call.1} parent=0 // pred_check
    _
  $region7: #{tpu_custom_call.1} parent=0 // pred_check_branch
    %13 = sbr.rel (0) target = $region9
  $region8: #{tpu_custom_call.1} parent=0 // pred_region
    _
  $region9: #{tpu_custom_call.1} parent=0 // pred_fallthru
    _
  // Predicated region
  $region10: #{tpu_custom_call.1} parent=0 // pred_check
    _
  $region11: #{tpu_custom_call.1} parent=0 // pred_check_branch
    %15 = sbr.rel (0) target = $region13
  $region12: #{tpu_custom_call.1} parent=0 // pred_region
    _
  $region13: #{tpu_custom_call.1} parent=0 // pred_fallthru
    _
  // Predicated region
  $region14: #{tpu_custom_call.1} parent=0 // pred_check
    _
  $region15: #{tpu_custom_call.1} parent=0 // pred_check_branch
    %17 = sbr.rel (0) target = $region17
  $region16: #{tpu_custom_call.1} parent=0 // pred_region
    _
  $region17: #{tpu_custom_call.1} parent=0 // pred_fallthru
    _
  // Predicated region
  $region18: #{tpu_custom_call.1} parent=0 // pred_check
    _
  $region19: #{tpu_custom_call.1} parent=0 // pred_check_branch
    %19 = sbr.rel (0) target = $region21
  $region20: #{tpu_custom_call.1} parent=0 // pred_region
    _
  $region21: #{tpu_custom_call.1} parent=0 // pred_fallthru
    _
  %v21 = vld [vmem:[%s0] sm:$0xff]
  %v22 = vld [vmem:[%s0 + $0x8] sm:$0xff]
  %v23 = vld [vmem:[%s0 + $0x10] sm:$0xff]
  %v24 = vld [vmem:[%s0 + $0x18] sm:$0xff]
  %v25 = vld [vmem:[%s0 + $0x20] sm:$0xff]
  %v26 = vld [vmem:[%s0 + $0x28] sm:$0xff]
  %v27 = vld [vmem:[%s0 + $0x30] sm:$0xff]
  %v28 = vld [vmem:[%s0 + $0x38] sm:$0xff]
  %v29 = vld [vmem:[%s0 + $0x40] sm:$0xff]
  %v30 = vld [vmem:[%s0 + $0x48] sm:$0xff]
  %v31 = vld [vmem:[%s0 + $0x50] sm:$0xff]
  %v32 = vld [vmem:[%s0 + $0x58] sm:$0xff]
  %v33 = vld [vmem:[%s0 + $0x60] sm:$0xff]
  %v34 = vld [vmem:[%s0 + $0x68] sm:$0xff]
  %v35 = vld [vmem:[%s0 + $0x70] sm:$0xff]
  %v36 = vld [vmem:[%s0 + $0x78] sm:$0xff]
  %v37 = vld [vmem:[%s0 + $0x80] sm:$0xff]
  %v38 = vld [vmem:[%s0 + $0x88] sm:$0xff]
  %v39 = vld [vmem:[%s0 + $0x90] sm:$0xff]
  %v40 = vld [vmem:[%s0 + $0x98] sm:$0xff]
  %v41 = vld [vmem:[%s0 + $0xa0] sm:$0xff]
  %v42 = vld [vmem:[%s0 + $0xa8] sm:$0xff]
  %v43 = vld [vmem:[%s0 + $0xb0] sm:$0xff]
  %v44 = vld [vmem:[%s0 + $0xb8] sm:$0xff]
  %v45 = vld [vmem:[%s0 + $0xc0] sm:$0xff]
  %v46 = vld [vmem:[%s0 + $0xc8] sm:$0xff]
  %v47 = vld [vmem:[%s0 + $0xd0] sm:$0xff]
  %v48 = vld [vmem:[%s0 + $0xd8] sm:$0xff]
  %v49 = vld [vmem:[%s0 + $0xe0] sm:$0xff]
  %v50 = vld [vmem:[%s0 + $0xe8] sm:$0xff]
  %v51 = vld [vmem:[%s0 + $0xf0] sm:$0xff]
  %v52 = vld [vmem:[%s0 + $0xf8] sm:$0xff]
  %v53 = vld [vmem:[%s0 + $0x100] sm:$0xff]
  %v54 = vld [vmem:[%s0 + $0x108] sm:$0xff]
  %v55 = vld [vmem:[%s0 + $0x110] sm:$0xff]
  %v56 = vld [vmem:[%s0 + $0x118] sm:$0xff]
  %v57 = vld [vmem:[%s0 + $0x120] sm:$0xff]
  %v58 = vld [vmem:[%s0 + $0x128] sm:$0xff]
  %v59 = vld [vmem:[%s0 + $0x130] sm:$0xff]
  %v60 = vld [vmem:[%s0 + $0x138] sm:$0xff]
  %v61 = vld [vmem:[%s0 + $0x140] sm:$0xff]
  %v62 = vld [vmem:[%s0 + $0x148] sm:$0xff]
  %v63 = vld [vmem:[%s0 + $0x150] sm:$0xff]
  %v64 = vld [vmem:[%s0 + $0x158] sm:$0xff]
  %v65 = vld [vmem:[%s0 + $0x160] sm:$0xff]
  %v66 = vld [vmem:[%s0 + $0x168] sm:$0xff]
  %v67 = vld [vmem:[%s0 + $0x170] sm:$0xff]
  %v68 = vld [vmem:[%s0 + $0x178] sm:$0xff]
  %v69 = vld [vmem:[%s0 + $0x180] sm:$0xff]
  %v70 = vld [vmem:[%s0 + $0x188] sm:$0xff]
  %v71 = vld [vmem:[%s0 + $0x190] sm:$0xff]
  %v72 = vld [vmem:[%s0 + $0x198] sm:$0xff]
  %v73 = vld [vmem:[%s0 + $0x1a0] sm:$0xff]
  %v74 = vld [vmem:[%s0 + $0x1a8] sm:$0xff]
  %v75 = vld [vmem:[%s0 + $0x1b0] sm:$0xff]
  %v76 = vld [vmem:[%s0 + $0x1b8] sm:$0xff]
  %v77 = vld [vmem:[%s0 + $0x1c0] sm:$0xff]
  %v78 = vld [vmem:[%s0 + $0x1c8] sm:$0xff]
  %v79 = vld [vmem:[%s0 + $0x1d0] sm:$0xff]
  %v80 = vld [vmem:[%s0 + $0x1d8] sm:$0xff]
  %v81 = vld [vmem:[%s0 + $0x1e0] sm:$0xff]
  %v82 = vld [vmem:[%s0 + $0x1e8] sm:$0xff]
  %v83 = vld [vmem:[%s0 + $0x1f0] sm:$0xff]
  %v84 = vld [vmem:[%s0 + $0x1f8] sm:$0xff]
  %v85 = vpack.c.bf16 %v22, %v21
  %v86 = vpack.c.bf16 %v24, %v23
  %v87 = vpack.c.bf16 %v26, %v25
  %v88 = vpack.c.bf16 %v28, %v27
  %v89 = vpack.c.bf16 %v30, %v29
  %v90 = vpack.c.bf16 %v32, %v31
  %v91 = vpack.c.bf16 %v34, %v33
  %v92 = vpack.c.bf16 %v36, %v35
  %v93 = vpack.c.bf16 %v38, %v37
  %v94 = vpack.c.bf16 %v40, %v39
  %v95 = vpack.c.bf16 %v42, %v41
  %v96 = vpack.c.bf16 %v44, %v43
  %v97 = vpack.c.bf16 %v46, %v45
  %v98 = vpack.c.bf16 %v48, %v47
  %v99 = vpack.c.bf16 %v50, %v49
  %v100 = vpack.c.bf16 %v52, %v51
  %v101 = vpack.c.bf16 %v54, %v53
  %v102 = vpack.c.bf16 %v56, %v55
  %v103 = vpack.c.bf16 %v58, %v57
  %v104 = vpack.c.bf16 %v60, %v59
  %v105 = vpack.c.bf16 %v62, %v61
  %v106 = vpack.c.bf16 %v64, %v63
  %v107 = vpack.c.bf16 %v66, %v65
  %v108 = vpack.c.bf16 %v68, %v67
  %v109 = vpack.c.bf16 %v70, %v69
  %v110 = vpack.c.bf16 %v72, %v71
  %v111 = vpack.c.bf16 %v74, %v73
  %v112 = vpack.c.bf16 %v76, %v75
  %v113 = vpack.c.bf16 %v78, %v77
  %v114 = vpack.c.bf16 %v80, %v79
  %v115 = vpack.c.bf16 %v82, %v81
  %v116 = vpack.c.bf16 %v84, %v83
  %v117 = vld [vmem:[%s1] sm:$0xff]
  %v118 = vld [vmem:[%s1 + $0x8] sm:$0xff]
  %v119 = vld [vmem:[%s1 + $0x10] sm:$0xff]
  %v120 = vld [vmem:[%s1 + $0x18] sm:$0xff]
  %v121 = vld [vmem:[%s1 + $0x20] sm:$0xff]
  %v122 = vld [vmem:[%s1 + $0x28] sm:$0xff]
  %v123 = vld [vmem:[%s1 + $0x30] sm:$0xff]
  %v124 = vld [vmem:[%s1 + $0x38] sm:$0xff]
  %v125 = vld [vmem:[%s2] sm:$0x3]
  %v127 = vlaneseq
  %v128 = vshrl.u32 %v127, 7
  %v129 = vsub.s32 0, %v128
  %v130 = vrot.slane %v125, %v129
  %v131 = vlaneseq
  %v132 = vshrl.u32 %v131, 7
  %v133 = vsub.s32 1, %v132
  %v134 = vrot.slane %v125, %v133
  %v145 = vunpack.c.l.b16 %v117
  %v146 = vunpack.c.h.b16 %v117
  %v147 = vunpack.c.l.b16 %v118
  %v148 = vunpack.c.h.b16 %v118
  %v149 = vunpack.c.l.b16 %v119
  %v150 = vunpack.c.h.b16 %v119
  %v151 = vunpack.c.l.b16 %v120
  %v152 = vunpack.c.h.b16 %v120
  %v153 = vunpack.c.l.b16 %v121
  %v154 = vunpack.c.h.b16 %v121
  %v155 = vunpack.c.l.b16 %v122
  %v156 = vunpack.c.h.b16 %v122
  %v157 = vunpack.c.l.b16 %v123
  %v158 = vunpack.c.h.b16 %v123
  %v159 = vunpack.c.l.b16 %v124
  %v160 = vunpack.c.h.b16 %v124
  %v161 = vpack.c.b16 %v147, %v145
  %v162 = vpack.c.b16 %v148, %v146
  %v163 = vpack.c.b16 %v151, %v149
  %v164 = vpack.c.b16 %v152, %v150
  %v165 = vpack.c.b16 %v155, %v153
  %v166 = vpack.c.b16 %v156, %v154
  %v167 = vpack.c.b16 %v159, %v157
  %v168 = vpack.c.b16 %v160, %v158
  %vm177 = vcmask 523264
  %v179 = vsel %vm177, %v85, 0
  %v182 = vsel %vm177, %v86, 0
  %v185 = vsel %vm177, %v87, 0
  %v188 = vsel %vm177, %v88, 0
  %v191 = vsel %vm177, %v89, 0
  %v194 = vsel %vm177, %v90, 0
  %v197 = vsel %vm177, %v91, 0
  %v200 = vsel %vm177, %v92, 0
  %v203 = vsel %vm177, %v93, 0
  %v206 = vsel %vm177, %v94, 0
  %v209 = vsel %vm177, %v95, 0
  %v212 = vsel %vm177, %v96, 0
  %v215 = vsel %vm177, %v97, 0
  %v218 = vsel %vm177, %v98, 0
  %v221 = vsel %vm177, %v99, 0
  %v224 = vsel %vm177, %v100, 0
  %v227 = vsel %vm177, %v101, 0
  %v230 = vsel %vm177, %v102, 0
  %v233 = vsel %vm177, %v103, 0
  %v236 = vsel %vm177, %v104, 0
  %v239 = vsel %vm177, %v105, 0
  %v242 = vsel %vm177, %v106, 0
  %v245 = vsel %vm177, %v107, 0
  %v248 = vsel %vm177, %v108, 0
  %v251 = vsel %vm177, %v109, 0
  %v254 = vsel %vm177, %v110, 0
  %v257 = vsel %vm177, %v111, 0
  %v260 = vsel %vm177, %v112, 0
  %v263 = vsel %vm177, %v113, 0
  %v266 = vsel %vm177, %v114, 0
  %v269 = vsel %vm177, %v115, 0
  %v272 = vsel %vm177, %v116, 0
  %274 = vmatprep.subr.bf16.mxu0 %v162
  %275 = vmatpush1.bf16.msra.mxu0 %v161
  %276 = vmatprep.subr.bf16.mxu0 %v164
  %277 = vmatpush1.bf16.msra.mxu0 %v163
  %278 = vmatprep.subr.bf16.mxu0 %v166
  %279 = vmatpush1.bf16.msra.mxu0 %v165
  %280 = vmatprep.subr.bf16.mxu0 %v168
  %281 = vmatpush1.bf16.msra.mxu0 %v167
  %282 = vmatprep.subr.bf16.mxu0 0
  %283 = vmatpush1.bf16.msra.mxu0 0
  %284 = vmatprep.subr.bf16.mxu0 0
  %285 = vmatpush1.bf16.msra.mxu0 0
  %286 = vmatprep.subr.bf16.mxu0 0
  %287 = vmatpush1.bf16.msra.mxu0 0
  %288 = vmatprep.subr.bf16.mxu0 0
  %289 = vmatpush1.bf16.msra.mxu0 0
  %290 = vmatprep.subr.bf16.mxu0 0
  %291 = vmatpush1.bf16.msra.mxu0 0
  %292 = vmatprep.subr.bf16.mxu0 0
  %293 = vmatpush1.bf16.msra.mxu0 0
  %294 = vmatprep.subr.bf16.mxu0 0
  %295 = vmatpush1.bf16.msra.mxu0 0
  %296 = vmatprep.subr.bf16.mxu0 0
  %297 = vmatpush1.bf16.msra.mxu0 0
  %298 = vmatprep.subr.bf16.mxu0 0
  %299 = vmatpush1.bf16.msra.mxu0 0
  %300 = vmatprep.subr.bf16.mxu0 0
  %301 = vmatpush1.bf16.msra.mxu0 0
  %302 = vmatprep.subr.bf16.mxu0 0
  %303 = vmatpush1.bf16.msra.mxu0 0
  %304 = vmatprep.subr.bf16.mxu0 0
  %305 = vmatpush1.bf16.msra.mxu0 0
  %306 = vmatprep.mubr.bf16.mxu0 0
  %307 = vmatmul.mubr.bf16.gmra.mrb[0].mxu0 %v179
  %v308 = vpop.f32.mrb[0].mxu0
  %v309 = vadd.f32 %v130, %v308
  %v310 = vpop.f32.mrb[0].mxu0
  %v311 = vadd.f32 %v134, %v310
  %v312 = vpop.f32.mrb[0].mxu0
  %v313 = vadd.f32 %v130, %v312
  %v314 = vpop.f32.mrb[0].mxu0
  %v315 = vadd.f32 %v134, %v314
  %316 = vmatprep.mubr.bf16.mxu0 0
  %317 = vmatmul.mubr.bf16.gmra.mrb[0].mxu0 %v182
  %v318 = vpop.f32.mrb[0].mxu0
  %v319 = vadd.f32 %v130, %v318
  %v320 = vpop.f32.mrb[0].mxu0
  %v321 = vadd.f32 %v134, %v320
  %v322 = vpop.f32.mrb[0].mxu0
  %v323 = vadd.f32 %v130, %v322
  %v324 = vpop.f32.mrb[0].mxu0
  %v325 = vadd.f32 %v134, %v324
  %326 = vmatprep.mubr.bf16.mxu0 0
  %327 = vmatmul.mubr.bf16.gmra.mrb[0].mxu0 %v185
  %v328 = vpop.f32.mrb[0].mxu0
  %v329 = vadd.f32 %v130, %v328
  %v330 = vpop.f32.mrb[0].mxu0
  %v331 = vadd.f32 %v134, %v330
  %v332 = vpop.f32.mrb[0].mxu0
  %v333 = vadd.f32 %v130, %v332
  %v334 = vpop.f32.mrb[0].mxu0
  %v335 = vadd.f32 %v134, %v334
  %336 = vmatprep.mubr.bf16.mxu0 0
  %337 = vmatmul.mubr.bf16.gmra.mrb[0].mxu0 %v188
  %v338 = vpop.f32.mrb[0].mxu0
  %v339 = vadd.f32 %v130, %v338
  %v340 = vpop.f32.mrb[0].mxu0
  %v341 = vadd.f32 %v134, %v340
  %v342 = vpop.f32.mrb[0].mxu0
  %v343 = vadd.f32 %v130, %v342
  %v344 = vpop.f32.mrb[0].mxu0
  %v345 = vadd.f32 %v134, %v344
  %346 = vmatprep.mubr.bf16.mxu0 0
  %347 = vmatmul.mubr.bf16.gmra.mrb[0].mxu0 %v191
  %v348 = vpop.f32.mrb[0].mxu0
  %v349 = vadd.f32 %v130, %v348
  %v350 = vpop.f32.mrb[0].mxu0
  %v351 = vadd.f32 %v134, %v350
  %v352 = vpop.f32.mrb[0].mxu0
  %v353 = vadd.f32 %v130, %v352
  %v354 = vpop.f32.mrb[0].mxu0
  %v355 = vadd.f32 %v134, %v354
  %356 = vmatprep.mubr.bf16.mxu0 0
  %357 = vmatmul.mubr.bf16.gmra.mrb[0].mxu0 %v194
  %v358 = vpop.f32.mrb[0].mxu0
  %v359 = vadd.f32 %v130, %v358
  %v360 = vpop.f32.mrb[0].mxu0
  %v361 = vadd.f32 %v134, %v360
  %v362 = vpop.f32.mrb[0].mxu0
  %v363 = vadd.f32 %v130, %v362
  %v364 = vpop.f32.mrb[0].mxu0
  %v365 = vadd.f32 %v134, %v364
  %366 = vmatprep.mubr.bf16.mxu0 0
  %367 = vmatmul.mubr.bf16.gmra.mrb[0].mxu0 %v197
  %v368 = vpop.f32.mrb[0].mxu0
  %v369 = vadd.f32 %v130, %v368
  %v370 = vpop.f32.mrb[0].mxu0
  %v371 = vadd.f32 %v134, %v370
  %v372 = vpop.f32.mrb[0].mxu0
  %v373 = vadd.f32 %v130, %v372
  %v374 = vpop.f32.mrb[0].mxu0
  %v375 = vadd.f32 %v134, %v374
  %376 = vmatprep.mubr.bf16.mxu0 0
  %377 = vmatmul.mubr.bf16.gmra.mrb[0].mxu0 %v200
  %v378 = vpop.f32.mrb[0].mxu0
  %v379 = vadd.f32 %v130, %v378
  %v380 = vpop.f32.mrb[0].mxu0
  %v381 = vadd.f32 %v134, %v380
  %v382 = vpop.f32.mrb[0].mxu0
  %v383 = vadd.f32 %v130, %v382
  %v384 = vpop.f32.mrb[0].mxu0
  %v385 = vadd.f32 %v134, %v384
  %386 = vmatprep.mubr.bf16.mxu0 0
  %387 = vmatmul.mubr.bf16.gmra.mrb[0].mxu0 %v203
  %v388 = vpop.f32.mrb[0].mxu0
  %v389 = vadd.f32 %v130, %v388
  %v390 = vpop.f32.mrb[0].mxu0
  %v391 = vadd.f32 %v134, %v390
  %v392 = vpop.f32.mrb[0].mxu0
  %v393 = vadd.f32 %v130, %v392
  %v394 = vpop.f32.mrb[0].mxu0
  %v395 = vadd.f32 %v134, %v394
  %396 = vmatprep.mubr.bf16.mxu0 0
  %397 = vmatmul.mubr.bf16.gmra.mrb[0].mxu0 %v206
  %v398 = vpop.f32.mrb[0].mxu0
  %v399 = vadd.f32 %v130, %v398
  %v400 = vpop.f32.mrb[0].mxu0
  %v401 = vadd.f32 %v134, %v400
  %v402 = vpop.f32.mrb[0].mxu0
  %v403 = vadd.f32 %v130, %v402
  %v404 = vpop.f32.mrb[0].mxu0
  %v405 = vadd.f32 %v134, %v404
  %406 = vmatprep.mubr.bf16.mxu0 0
  %407 = vmatmul.mubr.bf16.gmra.mrb[0].mxu0 %v209
  %v408 = vpop.f32.mrb[0].mxu0
  %v409 = vadd.f32 %v130, %v408
  %v410 = vpop.f32.mrb[0].mxu0
  %v411 = vadd.f32 %v134, %v410
  %v412 = vpop.f32.mrb[0].mxu0
  %v413 = vadd.f32 %v130, %v412
  %v414 = vpop.f32.mrb[0].mxu0
  %v415 = vadd.f32 %v134, %v414
  %416 = vmatprep.mubr.bf16.mxu0 0
  %417 = vmatmul.mubr.bf16.gmra.mrb[0].mxu0 %v212
  %v418 = vpop.f32.mrb[0].mxu0
  %v419 = vadd.f32 %v130, %v418
  %v420 = vpop.f32.mrb[0].mxu0
  %v421 = vadd.f32 %v134, %v420
  %v422 = vpop.f32.mrb[0].mxu0
  %v423 = vadd.f32 %v130, %v422
  %v424 = vpop.f32.mrb[0].mxu0
  %v425 = vadd.f32 %v134, %v424
  %426 = vmatprep.mubr.bf16.mxu0 0
  %427 = vmatmul.mubr.bf16.gmra.mrb[0].mxu0 %v215
  %v428 = vpop.f32.mrb[0].mxu0
  %v429 = vadd.f32 %v130, %v428
  %v430 = vpop.f32.mrb[0].mxu0
  %v431 = vadd.f32 %v134, %v430
  %v432 = vpop.f32.mrb[0].mxu0
  %v433 = vadd.f32 %v130, %v432
  %v434 = vpop.f32.mrb[0].mxu0
  %v435 = vadd.f32 %v134, %v434
  %436 = vmatprep.mubr.bf16.mxu0 0
  %437 = vmatmul.mubr.bf16.gmra.mrb[0].mxu0 %v218
  %v438 = vpop.f32.mrb[0].mxu0
  %v439 = vadd.f32 %v130, %v438
  %v440 = vpop.f32.mrb[0].mxu0
  %v441 = vadd.f32 %v134, %v440
  %v442 = vpop.f32.mrb[0].mxu0
  %v443 = vadd.f32 %v130, %v442
  %v444 = vpop.f32.mrb[0].mxu0
  %v445 = vadd.f32 %v134, %v444
  %446 = vmatprep.mubr.bf16.mxu0 0
  %447 = vmatmul.mubr.bf16.gmra.mrb[0].mxu0 %v221
  %v448 = vpop.f32.mrb[0].mxu0
  %v449 = vadd.f32 %v130, %v448
  %v450 = vpop.f32.mrb[0].mxu0
  %v451 = vadd.f32 %v134, %v450
  %v452 = vpop.f32.mrb[0].mxu0
  %v453 = vadd.f32 %v130, %v452
  %v454 = vpop.f32.mrb[0].mxu0
  %v455 = vadd.f32 %v134, %v454
  %456 = vmatprep.mubr.bf16.mxu0 0
  %457 = vmatmul.mubr.bf16.gmra.mrb[0].mxu0 %v224
  %v458 = vpop.f32.mrb[0].mxu0
  %v459 = vadd.f32 %v130, %v458
  %v460 = vpop.f32.mrb[0].mxu0
  %v461 = vadd.f32 %v134, %v460
  %v462 = vpop.f32.mrb[0].mxu0
  %v463 = vadd.f32 %v130, %v462
  %v464 = vpop.f32.mrb[0].mxu0
  %v465 = vadd.f32 %v134, %v464
  %466 = vmatprep.mubr.bf16.mxu0 0
  %467 = vmatmul.mubr.bf16.gmra.mrb[0].mxu0 %v227
  %v468 = vpop.f32.mrb[0].mxu0
  %v469 = vadd.f32 %v130, %v468
  %v470 = vpop.f32.mrb[0].mxu0
  %v471 = vadd.f32 %v134, %v470
  %v472 = vpop.f32.mrb[0].mxu0
  %v473 = vadd.f32 %v130, %v472
  %v474 = vpop.f32.mrb[0].mxu0
  %v475 = vadd.f32 %v134, %v474
  %476 = vmatprep.mubr.bf16.mxu0 0
  %477 = vmatmul.mubr.bf16.gmra.mrb[0].mxu0 %v230
  %v478 = vpop.f32.mrb[0].mxu0
  %v479 = vadd.f32 %v130, %v478
  %v480 = vpop.f32.mrb[0].mxu0
  %v481 = vadd.f32 %v134, %v480
  %v482 = vpop.f32.mrb[0].mxu0
  %v483 = vadd.f32 %v130, %v482
  %v484 = vpop.f32.mrb[0].mxu0
  %v485 = vadd.f32 %v134, %v484
  %486 = vmatprep.mubr.bf16.mxu0 0
  %487 = vmatmul.mubr.bf16.gmra.mrb[0].mxu0 %v233
  %v488 = vpop.f32.mrb[0].mxu0
  %v489 = vadd.f32 %v130, %v488
  %v490 = vpop.f32.mrb[0].mxu0
  %v491 = vadd.f32 %v134, %v490
  %v492 = vpop.f32.mrb[0].mxu0
  %v493 = vadd.f32 %v130, %v492
  %v494 = vpop.f32.mrb[0].mxu0
  %v495 = vadd.f32 %v134, %v494
  %496 = vmatprep.mubr.bf16.mxu0 0
  %497 = vmatmul.mubr.bf16.gmra.mrb[0].mxu0 %v236
  %v498 = vpop.f32.mrb[0].mxu0
  %v499 = vadd.f32 %v130, %v498
  %v500 = vpop.f32.mrb[0].mxu0
  %v501 = vadd.f32 %v134, %v500
  %v502 = vpop.f32.mrb[0].mxu0
  %v503 = vadd.f32 %v130, %v502
  %v504 = vpop.f32.mrb[0].mxu0
  %v505 = vadd.f32 %v134, %v504
  %506 = vmatprep.mubr.bf16.mxu0 0
  %507 = vmatmul.mubr.bf16.gmra.mrb[0].mxu0 %v239
  %v508 = vpop.f32.mrb[0].mxu0
  %v509 = vadd.f32 %v130, %v508
  %v510 = vpop.f32.mrb[0].mxu0
  %v511 = vadd.f32 %v134, %v510
  %v512 = vpop.f32.mrb[0].mxu0
  %v513 = vadd.f32 %v130, %v512
  %v514 = vpop.f32.mrb[0].mxu0
  %v515 = vadd.f32 %v134, %v514
  %516 = vmatprep.mubr.bf16.mxu0 0
  %517 = vmatmul.mubr.bf16.gmra.mrb[0].mxu0 %v242
  %v518 = vpop.f32.mrb[0].mxu0
  %v519 = vadd.f32 %v130, %v518
  %v520 = vpop.f32.mrb[0].mxu0
  %v521 = vadd.f32 %v134, %v520
  %v522 = vpop.f32.mrb[0].mxu0
  %v523 = vadd.f32 %v130, %v522
  %v524 = vpop.f32.mrb[0].mxu0
  %v525 = vadd.f32 %v134, %v524
  %526 = vmatprep.mubr.bf16.mxu0 0
  %527 = vmatmul.mubr.bf16.gmra.mrb[0].mxu0 %v245
  %v528 = vpop.f32.mrb[0].mxu0
  %v529 = vadd.f32 %v130, %v528
  %v530 = vpop.f32.mrb[0].mxu0
  %v531 = vadd.f32 %v134, %v530
  %v532 = vpop.f32.mrb[0].mxu0
  %v533 = vadd.f32 %v130, %v532
  %v534 = vpop.f32.mrb[0].mxu0
  %v535 = vadd.f32 %v134, %v534
  %536 = vmatprep.mubr.bf16.mxu0 0
  %537 = vmatmul.mubr.bf16.gmra.mrb[0].mxu0 %v248
  %v538 = vpop.f32.mrb[0].mxu0
  %v539 = vadd.f32 %v130, %v538
  %v540 = vpop.f32.mrb[0].mxu0
  %v541 = vadd.f32 %v134, %v540
  %v542 = vpop.f32.mrb[0].mxu0
  %v543 = vadd.f32 %v130, %v542
  %v544 = vpop.f32.mrb[0].mxu0
  %v545 = vadd.f32 %v134, %v544
  %546 = vmatprep.mubr.bf16.mxu0 0
  %547 = vmatmul.mubr.bf16.gmra.mrb[0].mxu0 %v251
  %v548 = vpop.f32.mrb[0].mxu0
  %v549 = vadd.f32 %v130, %v548
  %v550 = vpop.f32.mrb[0].mxu0
  %v551 = vadd.f32 %v134, %v550
  %v552 = vpop.f32.mrb[0].mxu0
  %v553 = vadd.f32 %v130, %v552
  %v554 = vpop.f32.mrb[0].mxu0
  %v555 = vadd.f32 %v134, %v554
  %556 = vmatprep.mubr.bf16.mxu0 0
  %557 = vmatmul.mubr.bf16.gmra.mrb[0].mxu0 %v254
  %v558 = vpop.f32.mrb[0].mxu0
  %v559 = vadd.f32 %v130, %v558
  %v560 = vpop.f32.mrb[0].mxu0
  %v561 = vadd.f32 %v134, %v560
  %v562 = vpop.f32.mrb[0].mxu0
  %v563 = vadd.f32 %v130, %v562
  %v564 = vpop.f32.mrb[0].mxu0
  %v565 = vadd.f32 %v134, %v564
  %566 = vmatprep.mubr.bf16.mxu0 0
  %567 = vmatmul.mubr.bf16.gmra.mrb[0].mxu0 %v257
  %v568 = vpop.f32.mrb[0].mxu0
  %v569 = vadd.f32 %v130, %v568
  %v570 = vpop.f32.mrb[0].mxu0
  %v571 = vadd.f32 %v134, %v570
  %v572 = vpop.f32.mrb[0].mxu0
  %v573 = vadd.f32 %v130, %v572
  %v574 = vpop.f32.mrb[0].mxu0
  %v575 = vadd.f32 %v134, %v574
  %576 = vmatprep.mubr.bf16.mxu0 0
  %577 = vmatmul.mubr.bf16.gmra.mrb[0].mxu0 %v260
  %v578 = vpop.f32.mrb[0].mxu0
  %v579 = vadd.f32 %v130, %v578
  %v580 = vpop.f32.mrb[0].mxu0
  %v581 = vadd.f32 %v134, %v580
  %v582 = vpop.f32.mrb[0].mxu0
  %v583 = vadd.f32 %v130, %v582
  %v584 = vpop.f32.mrb[0].mxu0
  %v585 = vadd.f32 %v134, %v584
  %586 = vmatprep.mubr.bf16.mxu0 0
  %587 = vmatmul.mubr.bf16.gmra.mrb[0].mxu0 %v263
  %v588 = vpop.f32.mrb[0].mxu0
  %v589 = vadd.f32 %v130, %v588
  %v590 = vpop.f32.mrb[0].mxu0
  %v591 = vadd.f32 %v134, %v590
  %v592 = vpop.f32.mrb[0].mxu0
  %v593 = vadd.f32 %v130, %v592
  %v594 = vpop.f32.mrb[0].mxu0
  %v595 = vadd.f32 %v134, %v594
  %596 = vmatprep.mubr.bf16.mxu0 0
  %597 = vmatmul.mubr.bf16.gmra.mrb[0].mxu0 %v266
  %v598 = vpop.f32.mrb[0].mxu0
  %v599 = vadd.f32 %v130, %v598
  %v600 = vpop.f32.mrb[0].mxu0
  %v601 = vadd.f32 %v134, %v600
  %v602 = vpop.f32.mrb[0].mxu0
  %v603 = vadd.f32 %v130, %v602
  %v604 = vpop.f32.mrb[0].mxu0
  %v605 = vadd.f32 %v134, %v604
  %606 = vmatprep.mubr.bf16.mxu0 0
  %607 = vmatmul.mubr.bf16.gmra.mrb[0].mxu0 %v269
  %v608 = vpop.f32.mrb[0].mxu0
  %v609 = vadd.f32 %v130, %v608
  %v610 = vpop.f32.mrb[0].mxu0
  %v611 = vadd.f32 %v134, %v610
  %v612 = vpop.f32.mrb[0].mxu0
  %v613 = vadd.f32 %v130, %v612
  %v614 = vpop.f32.mrb[0].mxu0
  %v615 = vadd.f32 %v134, %v614
  %616 = vmatprep.mubr.bf16.mxu0 0
  %617 = vmatmul.mubr.bf16.gmra.mrb[0].mxu0 %v272
  %v618 = vpop.f32.mrb[0].mxu0
  %v619 = vadd.f32 %v130, %v618
  %v620 = vpop.f32.mrb[0].mxu0
  %v621 = vadd.f32 %v134, %v620
  %v622 = vpop.f32.mrb[0].mxu0
  %v623 = vadd.f32 %v130, %v622
  %v624 = vpop.f32.mrb[0].mxu0
  %v625 = vadd.f32 %v134, %v624
  %626 = vdwg.mxu0
  %v627 = vmul.f32 %v309, %v309
  %v628 = vmul.f32 %v311, %v311
  %v629 = vmul.f32 %v313, %v313
  %v630 = vmul.f32 %v315, %v315
  %v631 = vmul.f32 %v319, %v319
  %v632 = vmul.f32 %v321, %v321
  %v633 = vmul.f32 %v323, %v323
  %v634 = vmul.f32 %v325, %v325
  %v635 = vmul.f32 %v329, %v329
  %v636 = vmul.f32 %v331, %v331
  %v637 = vmul.f32 %v333, %v333
  %v638 = vmul.f32 %v335, %v335
  %v639 = vmul.f32 %v339, %v339
  %v640 = vmul.f32 %v341, %v341
  %v641 = vmul.f32 %v343, %v343
  %v642 = vmul.f32 %v345, %v345
  %v643 = vmul.f32 %v349, %v349
  %v644 = vmul.f32 %v351, %v351
  %v645 = vmul.f32 %v353, %v353
  %v646 = vmul.f32 %v355, %v355
  %v647 = vmul.f32 %v359, %v359
  %v648 = vmul.f32 %v361, %v361
  %v649 = vmul.f32 %v363, %v363
  %v650 = vmul.f32 %v365, %v365
  %v651 = vmul.f32 %v369, %v369
  %v652 = vmul.f32 %v371, %v371
  %v653 = vmul.f32 %v373, %v373
  %v654 = vmul.f32 %v375, %v375
  %v655 = vmul.f32 %v379, %v379
  %v656 = vmul.f32 %v381, %v381
  %v657 = vmul.f32 %v383, %v383
  %v658 = vmul.f32 %v385, %v385
  %v659 = vmul.f32 %v389, %v389
  %v660 = vmul.f32 %v391, %v391
  %v661 = vmul.f32 %v393, %v393
  %v662 = vmul.f32 %v395, %v395
  %v663 = vmul.f32 %v399, %v399
  %v664 = vmul.f32 %v401, %v401
  %v665 = vmul.f32 %v403, %v403
  %v666 = vmul.f32 %v405, %v405
  %v667 = vmul.f32 %v409, %v409
  %v668 = vmul.f32 %v411, %v411
  %v669 = vmul.f32 %v413, %v413
  %v670 = vmul.f32 %v415, %v415
  %v671 = vmul.f32 %v419, %v419
  %v672 = vmul.f32 %v421, %v421
  %v673 = vmul.f32 %v423, %v423
  %v674 = vmul.f32 %v425, %v425
  %v675 = vmul.f32 %v429, %v429
  %v676 = vmul.f32 %v431, %v431
  %v677 = vmul.f32 %v433, %v433
  %v678 = vmul.f32 %v435, %v435
  %v679 = vmul.f32 %v439, %v439
  %v680 = vmul.f32 %v441, %v441
  %v681 = vmul.f32 %v443, %v443
  %v682 = vmul.f32 %v445, %v445
  %v683 = vmul.f32 %v449, %v449
  %v684 = vmul.f32 %v451, %v451
  %v685 = vmul.f32 %v453, %v453
  %v686 = vmul.f32 %v455, %v455
  %v687 = vmul.f32 %v459, %v459
  %v688 = vmul.f32 %v461, %v461
  %v689 = vmul.f32 %v463, %v463
  %v690 = vmul.f32 %v465, %v465
  %v691 = vmul.f32 %v469, %v469
  %v692 = vmul.f32 %v471, %v471
  %v693 = vmul.f32 %v473, %v473
  %v694 = vmul.f32 %v475, %v475
  %v695 = vmul.f32 %v479, %v479
  %v696 = vmul.f32 %v481, %v481
  %v697 = vmul.f32 %v483, %v483
  %v698 = vmul.f32 %v485, %v485
  %v699 = vmul.f32 %v489, %v489
  %v700 = vmul.f32 %v491, %v491
  %v701 = vmul.f32 %v493, %v493
  %v702 = vmul.f32 %v495, %v495
  %v703 = vmul.f32 %v499, %v499
  %v704 = vmul.f32 %v501, %v501
  %v705 = vmul.f32 %v503, %v503
  %v706 = vmul.f32 %v505, %v505
  %v707 = vmul.f32 %v509, %v509
  %v708 = vmul.f32 %v511, %v511
  %v709 = vmul.f32 %v513, %v513
  %v710 = vmul.f32 %v515, %v515
  %v711 = vmul.f32 %v519, %v519
  %v712 = vmul.f32 %v521, %v521
  %v713 = vmul.f32 %v523, %v523
  %v714 = vmul.f32 %v525, %v525
  %v715 = vmul.f32 %v529, %v529
  %v716 = vmul.f32 %v531, %v531
  %v717 = vmul.f32 %v533, %v533
  %v718 = vmul.f32 %v535, %v535
  %v719 = vmul.f32 %v539, %v539
  %v720 = vmul.f32 %v541, %v541
  %v721 = vmul.f32 %v543, %v543
  %v722 = vmul.f32 %v545, %v545
  %v723 = vmul.f32 %v549, %v549
  %v724 = vmul.f32 %v551, %v551
  %v725 = vmul.f32 %v553, %v553
  %v726 = vmul.f32 %v555, %v555
  %v727 = vmul.f32 %v559, %v559
  %v728 = vmul.f32 %v561, %v561
  %v729 = vmul.f32 %v563, %v563
  %v730 = vmul.f32 %v565, %v565
  %v731 = vmul.f32 %v569, %v569
  %v732 = vmul.f32 %v571, %v571
  %v733 = vmul.f32 %v573, %v573
  %v734 = vmul.f32 %v575, %v575
  %v735 = vmul.f32 %v579, %v579
  %v736 = vmul.f32 %v581, %v581
  %v737 = vmul.f32 %v583, %v583
  %v738 = vmul.f32 %v585, %v585
  %v739 = vmul.f32 %v589, %v589
  %v740 = vmul.f32 %v591, %v591
  %v741 = vmul.f32 %v593, %v593
  %v742 = vmul.f32 %v595, %v595
  %v743 = vmul.f32 %v599, %v599
  %v744 = vmul.f32 %v601, %v601
  %v745 = vmul.f32 %v603, %v603
  %v746 = vmul.f32 %v605, %v605
  %v747 = vmul.f32 %v609, %v609
  %v748 = vmul.f32 %v611, %v611
  %v749 = vmul.f32 %v613, %v613
  %v750 = vmul.f32 %v615, %v615
  %v751 = vmul.f32 %v619, %v619
  %v752 = vmul.f32 %v621, %v621
  %v753 = vmul.f32 %v623, %v623
  %v754 = vmul.f32 %v625, %v625
  %v755 = vmul.f32 %v309, %v627
  %v756 = vmul.f32 %v311, %v628
  %v757 = vmul.f32 %v313, %v629
  %v758 = vmul.f32 %v315, %v630
  %v759 = vmul.f32 %v319, %v631
  %v760 = vmul.f32 %v321, %v632
  %v761 = vmul.f32 %v323, %v633
  %v762 = vmul.f32 %v325, %v634
  %v763 = vmul.f32 %v329, %v635
  %v764 = vmul.f32 %v331, %v636
  %v765 = vmul.f32 %v333, %v637
  %v766 = vmul.f32 %v335, %v638
  %v767 = vmul.f32 %v339, %v639
  %v768 = vmul.f32 %v341, %v640
  %v769 = vmul.f32 %v343, %v641
  %v770 = vmul.f32 %v345, %v642
  %v771 = vmul.f32 %v349, %v643
  %v772 = vmul.f32 %v351, %v644
  %v773 = vmul.f32 %v353, %v645
  %v774 = vmul.f32 %v355, %v646
  %v775 = vmul.f32 %v359, %v647
  %v776 = vmul.f32 %v361, %v648
  %v777 = vmul.f32 %v363, %v649
  %v778 = vmul.f32 %v365, %v650
  %v779 = vmul.f32 %v369, %v651
  %v780 = vmul.f32 %v371, %v652
  %v781 = vmul.f32 %v373, %v653
  %v782 = vmul.f32 %v375, %v654
  %v783 = vmul.f32 %v379, %v655
  %v784 = vmul.f32 %v381, %v656
  %v785 = vmul.f32 %v383, %v657
  %v786 = vmul.f32 %v385, %v658
  %v787 = vmul.f32 %v389, %v659
  %v788 = vmul.f32 %v391, %v660
  %v789 = vmul.f32 %v393, %v661
  %v790 = vmul.f32 %v395, %v662
  %v791 = vmul.f32 %v399, %v663
  %v792 = vmul.f32 %v401, %v664
  %v793 = vmul.f32 %v403, %v665
  %v794 = vmul.f32 %v405, %v666
  %v795 = vmul.f32 %v409, %v667
  %v796 = vmul.f32 %v411, %v668
  %v797 = vmul.f32 %v413, %v669
  %v798 = vmul.f32 %v415, %v670
  %v799 = vmul.f32 %v419, %v671
  %v800 = vmul.f32 %v421, %v672
  %v801 = vmul.f32 %v423, %v673
  %v802 = vmul.f32 %v425, %v674
  %v803 = vmul.f32 %v429, %v675
  %v804 = vmul.f32 %v431, %v676
  %v805 = vmul.f32 %v433, %v677
  %v806 = vmul.f32 %v435, %v678
  %v807 = vmul.f32 %v439, %v679
  %v808 = vmul.f32 %v441, %v680
  %v809 = vmul.f32 %v443, %v681
  %v810 = vmul.f32 %v445, %v682
  %v811 = vmul.f32 %v449, %v683
  %v812 = vmul.f32 %v451, %v684
  %v813 = vmul.f32 %v453, %v685
  %v814 = vmul.f32 %v455, %v686
  %v815 = vmul.f32 %v459, %v687
  %v816 = vmul.f32 %v461, %v688
  %v817 = vmul.f32 %v463, %v689
  %v818 = vmul.f32 %v465, %v690
  %v819 = vmul.f32 %v469, %v691
  %v820 = vmul.f32 %v471, %v692
  %v821 = vmul.f32 %v473, %v693
  %v822 = vmul.f32 %v475, %v694
  %v823 = vmul.f32 %v479, %v695
  %v824 = vmul.f32 %v481, %v696
  %v825 = vmul.f32 %v483, %v697
  %v826 = vmul.f32 %v485, %v698
  %v827 = vmul.f32 %v489, %v699
  %v828 = vmul.f32 %v491, %v700
  %v829 = vmul.f32 %v493, %v701
  %v830 = vmul.f32 %v495, %v702
  %v831 = vmul.f32 %v499, %v703
  %v832 = vmul.f32 %v501, %v704
  %v833 = vmul.f32 %v503, %v705
  %v834 = vmul.f32 %v505, %v706
  %v835 = vmul.f32 %v509, %v707
  %v836 = vmul.f32 %v511, %v708
  %v837 = vmul.f32 %v513, %v709
  %v838 = vmul.f32 %v515, %v710
  %v839 = vmul.f32 %v519, %v711
  %v840 = vmul.f32 %v521, %v712
  %v841 = vmul.f32 %v523, %v713
  %v842 = vmul.f32 %v525, %v714
  %v843 = vmul.f32 %v529, %v715
  %v844 = vmul.f32 %v531, %v716
  %v845 = vmul.f32 %v533, %v717
  %v846 = vmul.f32 %v535, %v718
  %v847 = vmul.f32 %v539, %v719
  %v848 = vmul.f32 %v541, %v720
  %v849 = vmul.f32 %v543, %v721
  %v850 = vmul.f32 %v545, %v722
  %v851 = vmul.f32 %v549, %v723
  %v852 = vmul.f32 %v551, %v724
  %v853 = vmul.f32 %v553, %v725
  %v854 = vmul.f32 %v555, %v726
  %v855 = vmul.f32 %v559, %v727
  %v856 = vmul.f32 %v561, %v728
  %v857 = vmul.f32 %v563, %v729
  %v858 = vmul.f32 %v565, %v730
  %v859 = vmul.f32 %v569, %v731
  %v860 = vmul.f32 %v571, %v732
  %v861 = vmul.f32 %v573, %v733
  %v862 = vmul.f32 %v575, %v734
  %v863 = vmul.f32 %v579, %v735
  %v864 = vmul.f32 %v581, %v736
  %v865 = vmul.f32 %v583, %v737
  %v866 = vmul.f32 %v585, %v738
  %v867 = vmul.f32 %v589, %v739
  %v868 = vmul.f32 %v591, %v740
  %v869 = vmul.f32 %v593, %v741
  %v870 = vmul.f32 %v595, %v742
  %v871 = vmul.f32 %v599, %v743
  %v872 = vmul.f32 %v601, %v744
  %v873 = vmul.f32 %v603, %v745
  %v874 = vmul.f32 %v605, %v746
  %v875 = vmul.f32 %v609, %v747
  %v876 = vmul.f32 %v611, %v748
  %v877 = vmul.f32 %v613, %v749
  %v878 = vmul.f32 %v615, %v750
  %v879 = vmul.f32 %v619, %v751
  %v880 = vmul.f32 %v621, %v752
  %v881 = vmul.f32 %v623, %v753
  %v882 = vmul.f32 %v625, %v754
  %v883 = vmul.f32 %v755, 0.044715
  %v884 = vmul.f32 %v756, 0.044715
  %v885 = vmul.f32 %v757, 0.044715
  %v886 = vmul.f32 %v758, 0.044715
  %v887 = vmul.f32 %v759, 0.044715
  %v888 = vmul.f32 %v760, 0.044715
  %v889 = vmul.f32 %v761, 0.044715
  %v890 = vmul.f32 %v762, 0.044715
  %v891 = vmul.f32 %v763, 0.044715
  %v892 = vmul.f32 %v764, 0.044715
  %v893 = vmul.f32 %v765, 0.044715
  %v894 = vmul.f32 %v766, 0.044715
  %v895 = vmul.f32 %v767, 0.044715
  %v896 = vmul.f32 %v768, 0.044715
  %v897 = vmul.f32 %v769, 0.044715
  %v898 = vmul.f32 %v770, 0.044715
  %v899 = vmul.f32 %v771, 0.044715
  %v900 = vmul.f32 %v772, 0.044715
  %v901 = vmul.f32 %v773, 0.044715
  %v902 = vmul.f32 %v774, 0.044715
  %v903 = vmul.f32 %v775, 0.044715
  %v904 = vmul.f32 %v776, 0.044715
  %v905 = vmul.f32 %v777, 0.044715
  %v906 = vmul.f32 %v778, 0.044715
  %v907 = vmul.f32 %v779, 0.044715
  %v908 = vmul.f32 %v780, 0.044715
  %v909 = vmul.f32 %v781, 0.044715
  %v910 = vmul.f32 %v782, 0.044715
  %v911 = vmul.f32 %v783, 0.044715
  %v912 = vmul.f32 %v784, 0.044715
  %v913 = vmul.f32 %v785, 0.044715
  %v914 = vmul.f32 %v786, 0.044715
  %v915 = vmul.f32 %v787, 0.044715
  %v916 = vmul.f32 %v788, 0.044715
  %v917 = vmul.f32 %v789, 0.044715
  %v918 = vmul.f32 %v790, 0.044715
  %v919 = vmul.f32 %v791, 0.044715
  %v920 = vmul.f32 %v792, 0.044715
  %v921 = vmul.f32 %v793, 0.044715
  %v922 = vmul.f32 %v794, 0.044715
  %v923 = vmul.f32 %v795, 0.044715
  %v924 = vmul.f32 %v796, 0.044715
  %v925 = vmul.f32 %v797, 0.044715
  %v926 = vmul.f32 %v798, 0.044715
  %v927 = vmul.f32 %v799, 0.044715
  %v928 = vmul.f32 %v800, 0.044715
  %v929 = vmul.f32 %v801, 0.044715
  %v930 = vmul.f32 %v802, 0.044715
  %v931 = vmul.f32 %v803, 0.044715
  %v932 = vmul.f32 %v804, 0.044715
  %v933 = vmul.f32 %v805, 0.044715
  %v934 = vmul.f32 %v806, 0.044715
  %v935 = vmul.f32 %v807, 0.044715
  %v936 = vmul.f32 %v808, 0.044715
  %v937 = vmul.f32 %v809, 0.044715
  %v938 = vmul.f32 %v810, 0.044715
  %v939 = vmul.f32 %v811, 0.044715
  %v940 = vmul.f32 %v812, 0.044715
  %v941 = vmul.f32 %v813, 0.044715
  %v942 = vmul.f32 %v814, 0.044715
  %v943 = vmul.f32 %v815, 0.044715
  %v944 = vmul.f32 %v816, 0.044715
  %v945 = vmul.f32 %v817, 0.044715
  %v946 = vmul.f32 %v818, 0.044715
  %v947 = vmul.f32 %v819, 0.044715
  %v948 = vmul.f32 %v820, 0.044715
  %v949 = vmul.f32 %v821, 0.044715
  %v950 = vmul.f32 %v822, 0.044715
  %v951 = vmul.f32 %v823, 0.044715
  %v952 = vmul.f32 %v824, 0.044715
  %v953 = vmul.f32 %v825, 0.044715
  %v954 = vmul.f32 %v826, 0.044715
  %v955 = vmul.f32 %v827, 0.044715
  %v956 = vmul.f32 %v828, 0.044715
  %v957 = vmul.f32 %v829, 0.044715
  %v958 = vmul.f32 %v830, 0.044715
  %v959 = vmul.f32 %v831, 0.044715
  %v960 = vmul.f32 %v832, 0.044715
  %v961 = vmul.f32 %v833, 0.044715
  %v962 = vmul.f32 %v834, 0.044715
  %v963 = vmul.f32 %v835, 0.044715
  %v964 = vmul.f32 %v836, 0.044715
  %v965 = vmul.f32 %v837, 0.044715
  %v966 = vmul.f32 %v838, 0.044715
  %v967 = vmul.f32 %v839, 0.044715
  %v968 = vmul.f32 %v840, 0.044715
  %v969 = vmul.f32 %v841, 0.044715
  %v970 = vmul.f32 %v842, 0.044715
  %v971 = vmul.f32 %v843, 0.044715
  %v972 = vmul.f32 %v844, 0.044715
  %v973 = vmul.f32 %v845, 0.044715
  %v974 = vmul.f32 %v846, 0.044715
  %v975 = vmul.f32 %v847, 0.044715
  %v976 = vmul.f32 %v848, 0.044715
  %v977 = vmul.f32 %v849, 0.044715
  %v978 = vmul.f32 %v850, 0.044715
  %v979 = vmul.f32 %v851, 0.044715
  %v980 = vmul.f32 %v852, 0.044715
  %v981 = vmul.f32 %v853, 0.044715
  %v982 = vmul.f32 %v854, 0.044715
  %v983 = vmul.f32 %v855, 0.044715
  %v984 = vmul.f32 %v856, 0.044715
  %v985 = vmul.f32 %v857, 0.044715
  %v986 = vmul.f32 %v858, 0.044715
  %v987 = vmul.f32 %v859, 0.044715
  %v988 = vmul.f32 %v860, 0.044715
  %v989 = vmul.f32 %v861, 0.044715
  %v990 = vmul.f32 %v862, 0.044715
  %v991 = vmul.f32 %v863, 0.044715
  %v992 = vmul.f32 %v864, 0.044715
  %v993 = vmul.f32 %v865, 0.044715
  %v994 = vmul.f32 %v866, 0.044715
  %v995 = vmul.f32 %v867, 0.044715
  %v996 = vmul.f32 %v868, 0.044715
  %v997 = vmul.f32 %v869, 0.044715
  %v998 = vmul.f32 %v870, 0.044715
  %v999 = vmul.f32 %v871, 0.044715
  %v1000 = vmul.f32 %v872, 0.044715
  %v1001 = vmul.f32 %v873, 0.044715
  %v1002 = vmul.f32 %v874, 0.044715
  %v1003 = vmul.f32 %v875, 0.044715
  %v1004 = vmul.f32 %v876, 0.044715
  %v1005 = vmul.f32 %v877, 0.044715
  %v1006 = vmul.f32 %v878, 0.044715
  %v1007 = vmul.f32 %v879, 0.044715
  %v1008 = vmul.f32 %v880, 0.044715
  %v1009 = vmul.f32 %v881, 0.044715
  %v1010 = vmul.f32 %v882, 0.044715
  %v1011 = vadd.f32 %v309, %v883
  %v1012 = vadd.f32 %v311, %v884
  %v1013 = vadd.f32 %v313, %v885
  %v1014 = vadd.f32 %v315, %v886
  %v1015 = vadd.f32 %v319, %v887
  %v1016 = vadd.f32 %v321, %v888
  %v1017 = vadd.f32 %v323, %v889
  %v1018 = vadd.f32 %v325, %v890
  %v1019 = vadd.f32 %v329, %v891
  %v1020 = vadd.f32 %v331, %v892
  %v1021 = vadd.f32 %v333, %v893
  %v1022 = vadd.f32 %v335, %v894
  %v1023 = vadd.f32 %v339, %v895
  %v1024 = vadd.f32 %v341, %v896
  %v1025 = vadd.f32 %v343, %v897
  %v1026 = vadd.f32 %v345, %v898
  %v1027 = vadd.f32 %v349, %v899
  %v1028 = vadd.f32 %v351, %v900
  %v1029 = vadd.f32 %v353, %v901
  %v1030 = vadd.f32 %v355, %v902
  %v1031 = vadd.f32 %v359, %v903
  %v1032 = vadd.f32 %v361, %v904
  %v1033 = vadd.f32 %v363, %v905
  %v1034 = vadd.f32 %v365, %v906
  %v1035 = vadd.f32 %v369, %v907
  %v1036 = vadd.f32 %v371, %v908
  %v1037 = vadd.f32 %v373, %v909
  %v1038 = vadd.f32 %v375, %v910
  %v1039 = vadd.f32 %v379, %v911
  %v1040 = vadd.f32 %v381, %v912
  %v1041 = vadd.f32 %v383, %v913
  %v1042 = vadd.f32 %v385, %v914
  %v1043 = vadd.f32 %v389, %v915
  %v1044 = vadd.f32 %v391, %v916
  %v1045 = vadd.f32 %v393, %v917
  %v1046 = vadd.f32 %v395, %v918
  %v1047 = vadd.f32 %v399, %v919
  %v1048 = vadd.f32 %v401, %v920
  %v1049 = vadd.f32 %v403, %v921
  %v1050 = vadd.f32 %v405, %v922
  %v1051 = vadd.f32 %v409, %v923
  %v1052 = vadd.f32 %v411, %v924
  %v1053 = vadd.f32 %v413, %v925
  %v1054 = vadd.f32 %v415, %v926
  %v1055 = vadd.f32 %v419, %v927
  %v1056 = vadd.f32 %v421, %v928
  %v1057 = vadd.f32 %v423, %v929
  %v1058 = vadd.f32 %v425, %v930
  %v1059 = vadd.f32 %v429, %v931
  %v1060 = vadd.f32 %v431, %v932
  %v1061 = vadd.f32 %v433, %v933
  %v1062 = vadd.f32 %v435, %v934
  %v1063 = vadd.f32 %v439, %v935
  %v1064 = vadd.f32 %v441, %v936
  %v1065 = vadd.f32 %v443, %v937
  %v1066 = vadd.f32 %v445, %v938
  %v1067 = vadd.f32 %v449, %v939
  %v1068 = vadd.f32 %v451, %v940
  %v1069 = vadd.f32 %v453, %v941
  %v1070 = vadd.f32 %v455, %v942
  %v1071 = vadd.f32 %v459, %v943
  %v1072 = vadd.f32 %v461, %v944
  %v1073 = vadd.f32 %v463, %v945
  %v1074 = vadd.f32 %v465, %v946
  %v1075 = vadd.f32 %v469, %v947
  %v1076 = vadd.f32 %v471, %v948
  %v1077 = vadd.f32 %v473, %v949
  %v1078 = vadd.f32 %v475, %v950
  %v1079 = vadd.f32 %v479, %v951
  %v1080 = vadd.f32 %v481, %v952
  %v1081 = vadd.f32 %v483, %v953
  %v1082 = vadd.f32 %v485, %v954
  %v1083 = vadd.f32 %v489, %v955
  %v1084 = vadd.f32 %v491, %v956
  %v1085 = vadd.f32 %v493, %v957
  %v1086 = vadd.f32 %v495, %v958
  %v1087 = vadd.f32 %v499, %v959
  %v1088 = vadd.f32 %v501, %v960
  %v1089 = vadd.f32 %v503, %v961
  %v1090 = vadd.f32 %v505, %v962
  %v1091 = vadd.f32 %v509, %v963
  %v1092 = vadd.f32 %v511, %v964
  %v1093 = vadd.f32 %v513, %v965
  %v1094 = vadd.f32 %v515, %v966
  %v1095 = vadd.f32 %v519, %v967
  %v1096 = vadd.f32 %v521, %v968
  %v1097 = vadd.f32 %v523, %v969
  %v1098 = vadd.f32 %v525, %v970
  %v1099 = vadd.f32 %v529, %v971
  %v1100 = vadd.f32 %v531, %v972
  %v1101 = vadd.f32 %v533, %v973
  %v1102 = vadd.f32 %v535, %v974
  %v1103 = vadd.f32 %v539, %v975
  %v1104 = vadd.f32 %v541, %v976
  %v1105 = vadd.f32 %v543, %v977
  %v1106 = vadd.f32 %v545, %v978
  %v1107 = vadd.f32 %v549, %v979
  %v1108 = vadd.f32 %v551, %v980
  %v1109 = vadd.f32 %v553, %v981
  %v1110 = vadd.f32 %v555, %v982
  %v1111 = vadd.f32 %v559, %v983
  %v1112 = vadd.f32 %v561, %v984
  %v1113 = vadd.f32 %v563, %v985
  %v1114 = vadd.f32 %v565, %v986
  %v1115 = vadd.f32 %v569, %v987
  %v1116 = vadd.f32 %v571, %v988
  %v1117 = vadd.f32 %v573, %v989
  %v1118 = vadd.f32 %v575, %v990
  %v1119 = vadd.f32 %v579, %v991
  %v1120 = vadd.f32 %v581, %v992
  %v1121 = vadd.f32 %v583, %v993
  %v1122 = vadd.f32 %v585, %v994
  %v1123 = vadd.f32 %v589, %v995
  %v1124 = vadd.f32 %v591, %v996
  %v1125 = vadd.f32 %v593, %v997
  %v1126 = vadd.f32 %v595, %v998
  %v1127 = vadd.f32 %v599, %v999
  %v1128 = vadd.f32 %v601, %v1000
  %v1129 = vadd.f32 %v603, %v1001
  %v1130 = vadd.f32 %v605, %v1002
  %v1131 = vadd.f32 %v609, %v1003
  %v1132 = vadd.f32 %v611, %v1004
  %v1133 = vadd.f32 %v613, %v1005
  %v1134 = vadd.f32 %v615, %v1006
  %v1135 = vadd.f32 %v619, %v1007
  %v1136 = vadd.f32 %v621, %v1008
  %v1137 = vadd.f32 %v623, %v1009
  %v1138 = vadd.f32 %v625, %v1010
  %v1139 = vmul.f32 %v1011, 0.7978846
  %v1140 = vmul.f32 %v1012, 0.7978846
  %v1141 = vmul.f32 %v1013, 0.7978846
  %v1142 = vmul.f32 %v1014, 0.7978846
  %v1143 = vmul.f32 %v1015, 0.7978846
  %v1144 = vmul.f32 %v1016, 0.7978846
  %v1145 = vmul.f32 %v1017, 0.7978846
  %v1146 = vmul.f32 %v1018, 0.7978846
  %v1147 = vmul.f32 %v1019, 0.7978846
  %v1148 = vmul.f32 %v1020, 0.7978846
  %v1149 = vmul.f32 %v1021, 0.7978846
  %v1150 = vmul.f32 %v1022, 0.7978846
  %v1151 = vmul.f32 %v1023, 0.7978846
  %v1152 = vmul.f32 %v1024, 0.7978846
  %v1153 = vmul.f32 %v1025, 0.7978846
  %v1154 = vmul.f32 %v1026, 0.7978846
  %v1155 = vmul.f32 %v1027, 0.7978846
  %v1156 = vmul.f32 %v1028, 0.7978846
  %v1157 = vmul.f32 %v1029, 0.7978846
  %v1158 = vmul.f32 %v1030, 0.7978846
  %v1159 = vmul.f32 %v1031, 0.7978846
  %v1160 = vmul.f32 %v1032, 0.7978846
  %v1161 = vmul.f32 %v1033, 0.7978846
  %v1162 = vmul.f32 %v1034, 0.7978846
  %v1163 = vmul.f32 %v1035, 0.7978846
  %v1164 = vmul.f32 %v1036, 0.7978846
  %v1165 = vmul.f32 %v1037, 0.7978846
  %v1166 = vmul.f32 %v1038, 0.7978846
  %v1167 = vmul.f32 %v1039, 0.7978846
  %v1168 = vmul.f32 %v1040, 0.7978846
  %v1169 = vmul.f32 %v1041, 0.7978846
  %v1170 = vmul.f32 %v1042, 0.7978846
  %v1171 = vmul.f32 %v1043, 0.7978846
  %v1172 = vmul.f32 %v1044, 0.7978846
  %v1173 = vmul.f32 %v1045, 0.7978846
  %v1174 = vmul.f32 %v1046, 0.7978846
  %v1175 = vmul.f32 %v1047, 0.7978846
  %v1176 = vmul.f32 %v1048, 0.7978846
  %v1177 = vmul.f32 %v1049, 0.7978846
  %v1178 = vmul.f32 %v1050, 0.7978846
  %v1179 = vmul.f32 %v1051, 0.7978846
  %v1180 = vmul.f32 %v1052, 0.7978846
  %v1181 = vmul.f32 %v1053, 0.7978846
  %v1182 = vmul.f32 %v1054, 0.7978846
  %v1183 = vmul.f32 %v1055, 0.7978846
  %v1184 = vmul.f32 %v1056, 0.7978846
  %v1185 = vmul.f32 %v1057, 0.7978846
  %v1186 = vmul.f32 %v1058, 0.7978846
  %v1187 = vmul.f32 %v1059, 0.7978846
  %v1188 = vmul.f32 %v1060, 0.7978846
  %v1189 = vmul.f32 %v1061, 0.7978846
  %v1190 = vmul.f32 %v1062, 0.7978846
  %v1191 = vmul.f32 %v1063, 0.7978846
  %v1192 = vmul.f32 %v1064, 0.7978846
  %v1193 = vmul.f32 %v1065, 0.7978846
  %v1194 = vmul.f32 %v1066, 0.7978846
  %v1195 = vmul.f32 %v1067, 0.7978846
  %v1196 = vmul.f32 %v1068, 0.7978846
  %v1197 = vmul.f32 %v1069, 0.7978846
  %v1198 = vmul.f32 %v1070, 0.7978846
  %v1199 = vmul.f32 %v1071, 0.7978846
  %v1200 = vmul.f32 %v1072, 0.7978846
  %v1201 = vmul.f32 %v1073, 0.7978846
  %v1202 = vmul.f32 %v1074, 0.7978846
  %v1203 = vmul.f32 %v1075, 0.7978846
  %v1204 = vmul.f32 %v1076, 0.7978846
  %v1205 = vmul.f32 %v1077, 0.7978846
  %v1206 = vmul.f32 %v1078, 0.7978846
  %v1207 = vmul.f32 %v1079, 0.7978846
  %v1208 = vmul.f32 %v1080, 0.7978846
  %v1209 = vmul.f32 %v1081, 0.7978846
  %v1210 = vmul.f32 %v1082, 0.7978846
  %v1211 = vmul.f32 %v1083, 0.7978846
  %v1212 = vmul.f32 %v1084, 0.7978846
  %v1213 = vmul.f32 %v1085, 0.7978846
  %v1214 = vmul.f32 %v1086, 0.7978846
  %v1215 = vmul.f32 %v1087, 0.7978846
  %v1216 = vmul.f32 %v1088, 0.7978846
  %v1217 = vmul.f32 %v1089, 0.7978846
  %v1218 = vmul.f32 %v1090, 0.7978846
  %v1219 = vmul.f32 %v1091, 0.7978846
  %v1220 = vmul.f32 %v1092, 0.7978846
  %v1221 = vmul.f32 %v1093, 0.7978846
  %v1222 = vmul.f32 %v1094, 0.7978846
  %v1223 = vmul.f32 %v1095, 0.7978846
  %v1224 = vmul.f32 %v1096, 0.7978846
  %v1225 = vmul.f32 %v1097, 0.7978846
  %v1226 = vmul.f32 %v1098, 0.7978846
  %v1227 = vmul.f32 %v1099, 0.7978846
  %v1228 = vmul.f32 %v1100, 0.7978846
  %v1229 = vmul.f32 %v1101, 0.7978846
  %v1230 = vmul.f32 %v1102, 0.7978846
  %v1231 = vmul.f32 %v1103, 0.7978846
  %v1232 = vmul.f32 %v1104, 0.7978846
  %v1233 = vmul.f32 %v1105, 0.7978846
  %v1234 = vmul.f32 %v1106, 0.7978846
  %v1235 = vmul.f32 %v1107, 0.7978846
  %v1236 = vmul.f32 %v1108, 0.7978846
  %v1237 = vmul.f32 %v1109, 0.7978846
  %v1238 = vmul.f32 %v1110, 0.7978846
  %v1239 = vmul.f32 %v1111, 0.7978846
  %v1240 = vmul.f32 %v1112, 0.7978846
  %v1241 = vmul.f32 %v1113, 0.7978846
  %v1242 = vmul.f32 %v1114, 0.7978846
  %v1243 = vmul.f32 %v1115, 0.7978846
  %v1244 = vmul.f32 %v1116, 0.7978846
  %v1245 = vmul.f32 %v1117, 0.7978846
  %v1246 = vmul.f32 %v1118, 0.7978846
  %v1247 = vmul.f32 %v1119, 0.7978846
  %v1248 = vmul.f32 %v1120, 0.7978846
  %v1249 = vmul.f32 %v1121, 0.7978846
  %v1250 = vmul.f32 %v1122, 0.7978846
  %v1251 = vmul.f32 %v1123, 0.7978846
  %v1252 = vmul.f32 %v1124, 0.7978846
  %v1253 = vmul.f32 %v1125, 0.7978846
  %v1254 = vmul.f32 %v1126, 0.7978846
  %v1255 = vmul.f32 %v1127, 0.7978846
  %v1256 = vmul.f32 %v1128, 0.7978846
  %v1257 = vmul.f32 %v1129, 0.7978846
  %v1258 = vmul.f32 %v1130, 0.7978846
  %v1259 = vmul.f32 %v1131, 0.7978846
  %v1260 = vmul.f32 %v1132, 0.7978846
  %v1261 = vmul.f32 %v1133, 0.7978846
  %v1262 = vmul.f32 %v1134, 0.7978846
  %v1263 = vmul.f32 %v1135, 0.7978846
  %v1264 = vmul.f32 %v1136, 0.7978846
  %v1265 = vmul.f32 %v1137, 0.7978846
  %v1266 = vmul.f32 %v1138, 0.7978846
  %v1267 = vtanh.pop %v1139
  %v1268 = vtanh.pop %v1140
  %v1269 = vtanh.pop %v1141
  %v1270 = vtanh.pop %v1142
  %v1271 = vtanh.pop %v1143
  %v1272 = vtanh.pop %v1144
  %v1273 = vtanh.pop %v1145
  %v1274 = vtanh.pop %v1146
  %v1275 = vtanh.pop %v1147
  %v1276 = vtanh.pop %v1148
  %v1277 = vtanh.pop %v1149
  %v1278 = vtanh.pop %v1150
  %v1279 = vtanh.pop %v1151
  %v1280 = vtanh.pop %v1152
  %v1281 = vtanh.pop %v1153
  %v1282 = vtanh.pop %v1154
  %v1283 = vtanh.pop %v1155
  %v1284 = vtanh.pop %v1156
  %v1285 = vtanh.pop %v1157
  %v1286 = vtanh.pop %v1158
  %v1287 = vtanh.pop %v1159
  %v1288 = vtanh.pop %v1160
  %v1289 = vtanh.pop %v1161
  %v1290 = vtanh.pop %v1162
  %v1291 = vtanh.pop %v1163
  %v1292 = vtanh.pop %v1164
  %v1293 = vtanh.pop %v1165
  %v1294 = vtanh.pop %v1166
  %v1295 = vtanh.pop %v1167
  %v1296 = vtanh.pop %v1168
  %v1297 = vtanh.pop %v1169
  %v1298 = vtanh.pop %v1170
  %v1299 = vtanh.pop %v1171
  %v1300 = vtanh.pop %v1172
  %v1301 = vtanh.pop %v1173
  %v1302 = vtanh.pop %v1174
  %v1303 = vtanh.pop %v1175
  %v1304 = vtanh.pop %v1176
  %v1305 = vtanh.pop %v1177
  %v1306 = vtanh.pop %v1178
  %v1307 = vtanh.pop %v1179
  %v1308 = vtanh.pop %v1180
  %v1309 = vtanh.pop %v1181
  %v1310 = vtanh.pop %v1182
  %v1311 = vtanh.pop %v1183
  %v1312 = vtanh.pop %v1184
  %v1313 = vtanh.pop %v1185
  %v1314 = vtanh.pop %v1186
  %v1315 = vtanh.pop %v1187
  %v1316 = vtanh.pop %v1188
  %v1317 = vtanh.pop %v1189
  %v1318 = vtanh.pop %v1190
  %v1319 = vtanh.pop %v1191
  %v1320 = vtanh.pop %v1192
  %v1321 = vtanh.pop %v1193
  %v1322 = vtanh.pop %v1194
  %v1323 = vtanh.pop %v1195
  %v1324 = vtanh.pop %v1196
  %v1325 = vtanh.pop %v1197
  %v1326 = vtanh.pop %v1198
  %v1327 = vtanh.pop %v1199
  %v1328 = vtanh.pop %v1200
  %v1329 = vtanh.pop %v1201
  %v1330 = vtanh.pop %v1202
  %v1331 = vtanh.pop %v1203
  %v1332 = vtanh.pop %v1204
  %v1333 = vtanh.pop %v1205
  %v1334 = vtanh.pop %v1206
  %v1335 = vtanh.pop %v1207
  %v1336 = vtanh.pop %v1208
  %v1337 = vtanh.pop %v1209
  %v1338 = vtanh.pop %v1210
  %v1339 = vtanh.pop %v1211
  %v1340 = vtanh.pop %v1212
  %v1341 = vtanh.pop %v1213
  %v1342 = vtanh.pop %v1214
  %v1343 = vtanh.pop %v1215
  %v1344 = vtanh.pop %v1216
  %v1345 = vtanh.pop %v1217
  %v1346 = vtanh.pop %v1218
  %v1347 = vtanh.pop %v1219
  %v1348 = vtanh.pop %v1220
  %v1349 = vtanh.pop %v1221
  %v1350 = vtanh.pop %v1222
  %v1351 = vtanh.pop %v1223
  %v1352 = vtanh.pop %v1224
  %v1353 = vtanh.pop %v1225
  %v1354 = vtanh.pop %v1226
  %v1355 = vtanh.pop %v1227
  %v1356 = vtanh.pop %v1228
  %v1357 = vtanh.pop %v1229
  %v1358 = vtanh.pop %v1230
  %v1359 = vtanh.pop %v1231
  %v1360 = vtanh.pop %v1232
  %v1361 = vtanh.pop %v1233
  %v1362 = vtanh.pop %v1234
  %v1363 = vtanh.pop %v1235
  %v1364 = vtanh.pop %v1236
  %v1365 = vtanh.pop %v1237
  %v1366 = vtanh.pop %v1238
  %v1367 = vtanh.pop %v1239
  %v1368 = vtanh.pop %v1240
  %v1369 = vtanh.pop %v1241
  %v1370 = vtanh.pop %v1242
  %v1371 = vtanh.pop %v1243
  %v1372 = vtanh.pop %v1244
  %v1373 = vtanh.pop %v1245
  %v1374 = vtanh.pop %v1246
  %v1375 = vtanh.pop %v1247
  %v1376 = vtanh.pop %v1248
  %v1377 = vtanh.pop %v1249
  %v1378 = vtanh.pop %v1250
  %v1379 = vtanh.pop %v1251
  %v1380 = vtanh.pop %v1252
  %v1381 = vtanh.pop %v1253
  %v1382 = vtanh.pop %v1254
  %v1383 = vtanh.pop %v1255
  %v1384 = vtanh.pop %v1256
  %v1385 = vtanh.pop %v1257
  %v1386 = vtanh.pop %v1258
  %v1387 = vtanh.pop %v1259
  %v1388 = vtanh.pop %v1260
  %v1389 = vtanh.pop %v1261
  %v1390 = vtanh.pop %v1262
  %v1391 = vtanh.pop %v1263
  %v1392 = vtanh.pop %v1264
  %v1393 = vtanh.pop %v1265
  %v1394 = vtanh.pop %v1266
  %v1395 = vadd.f32 %v1267, 1.0
  %v1396 = vadd.f32 %v1268, 1.0
  %v1397 = vadd.f32 %v1269, 1.0
  %v1398 = vadd.f32 %v1270, 1.0
  %v1399 = vadd.f32 %v1271, 1.0
  %v1400 = vadd.f32 %v1272, 1.0
  %v1401 = vadd.f32 %v1273, 1.0
  %v1402 = vadd.f32 %v1274, 1.0
  %v1403 = vadd.f32 %v1275, 1.0
  %v1404 = vadd.f32 %v1276, 1.0
  %v1405 = vadd.f32 %v1277, 1.0
  %v1406 = vadd.f32 %v1278, 1.0
  %v1407 = vadd.f32 %v1279, 1.0
  %v1408 = vadd.f32 %v1280, 1.0
  %v1409 = vadd.f32 %v1281, 1.0
  %v1410 = vadd.f32 %v1282, 1.0
  %v1411 = vadd.f32 %v1283, 1.0
  %v1412 = vadd.f32 %v1284, 1.0
  %v1413 = vadd.f32 %v1285, 1.0
  %v1414 = vadd.f32 %v1286, 1.0
  %v1415 = vadd.f32 %v1287, 1.0
  %v1416 = vadd.f32 %v1288, 1.0
  %v1417 = vadd.f32 %v1289, 1.0
  %v1418 = vadd.f32 %v1290, 1.0
  %v1419 = vadd.f32 %v1291, 1.0
  %v1420 = vadd.f32 %v1292, 1.0
  %v1421 = vadd.f32 %v1293, 1.0
  %v1422 = vadd.f32 %v1294, 1.0
  %v1423 = vadd.f32 %v1295, 1.0
  %v1424 = vadd.f32 %v1296, 1.0
  %v1425 = vadd.f32 %v1297, 1.0
  %v1426 = vadd.f32 %v1298, 1.0
  %v1427 = vadd.f32 %v1299, 1.0
  %v1428 = vadd.f32 %v1300, 1.0
  %v1429 = vadd.f32 %v1301, 1.0
  %v1430 = vadd.f32 %v1302, 1.0
  %v1431 = vadd.f32 %v1303, 1.0
  %v1432 = vadd.f32 %v1304, 1.0
  %v1433 = vadd.f32 %v1305, 1.0
  %v1434 = vadd.f32 %v1306, 1.0
  %v1435 = vadd.f32 %v1307, 1.0
  %v1436 = vadd.f32 %v1308, 1.0
  %v1437 = vadd.f32 %v1309, 1.0
  %v1438 = vadd.f32 %v1310, 1.0
  %v1439 = vadd.f32 %v1311, 1.0
  %v1440 = vadd.f32 %v1312, 1.0
  %v1441 = vadd.f32 %v1313, 1.0
  %v1442 = vadd.f32 %v1314, 1.0
  %v1443 = vadd.f32 %v1315, 1.0
  %v1444 = vadd.f32 %v1316, 1.0
  %v1445 = vadd.f32 %v1317, 1.0
  %v1446 = vadd.f32 %v1318, 1.0
  %v1447 = vadd.f32 %v1319, 1.0
  %v1448 = vadd.f32 %v1320, 1.0
  %v1449 = vadd.f32 %v1321, 1.0
  %v1450 = vadd.f32 %v1322, 1.0
  %v1451 = vadd.f32 %v1323, 1.0
  %v1452 = vadd.f32 %v1324, 1.0
  %v1453 = vadd.f32 %v1325, 1.0
  %v1454 = vadd.f32 %v1326, 1.0
  %v1455 = vadd.f32 %v1327, 1.0
  %v1456 = vadd.f32 %v1328, 1.0
  %v1457 = vadd.f32 %v1329, 1.0
  %v1458 = vadd.f32 %v1330, 1.0
  %v1459 = vadd.f32 %v1331, 1.0
  %v1460 = vadd.f32 %v1332, 1.0
  %v1461 = vadd.f32 %v1333, 1.0
  %v1462 = vadd.f32 %v1334, 1.0
  %v1463 = vadd.f32 %v1335, 1.0
  %v1464 = vadd.f32 %v1336, 1.0
  %v1465 = vadd.f32 %v1337, 1.0
  %v1466 = vadd.f32 %v1338, 1.0
  %v1467 = vadd.f32 %v1339, 1.0
  %v1468 = vadd.f32 %v1340, 1.0
  %v1469 = vadd.f32 %v1341, 1.0
  %v1470 = vadd.f32 %v1342, 1.0
  %v1471 = vadd.f32 %v1343, 1.0
  %v1472 = vadd.f32 %v1344, 1.0
  %v1473 = vadd.f32 %v1345, 1.0
  %v1474 = vadd.f32 %v1346, 1.0
  %v1475 = vadd.f32 %v1347, 1.0
  %v1476 = vadd.f32 %v1348, 1.0
  %v1477 = vadd.f32 %v1349, 1.0
  %v1478 = vadd.f32 %v1350, 1.0
  %v1479 = vadd.f32 %v1351, 1.0
  %v1480 = vadd.f32 %v1352, 1.0
  %v1481 = vadd.f32 %v1353, 1.0
  %v1482 = vadd.f32 %v1354, 1.0
  %v1483 = vadd.f32 %v1355, 1.0
  %v1484 = vadd.f32 %v1356, 1.0
  %v1485 = vadd.f32 %v1357, 1.0
  %v1486 = vadd.f32 %v1358, 1.0
  %v1487 = vadd.f32 %v1359, 1.0
  %v1488 = vadd.f32 %v1360, 1.0
  %v1489 = vadd.f32 %v1361, 1.0
  %v1490 = vadd.f32 %v1362, 1.0
  %v1491 = vadd.f32 %v1363, 1.0
  %v1492 = vadd.f32 %v1364, 1.0
  %v1493 = vadd.f32 %v1365, 1.0
  %v1494 = vadd.f32 %v1366, 1.0
  %v1495 = vadd.f32 %v1367, 1.0
  %v1496 = vadd.f32 %v1368, 1.0
  %v1497 = vadd.f32 %v1369, 1.0
  %v1498 = vadd.f32 %v1370, 1.0
  %v1499 = vadd.f32 %v1371, 1.0
  %v1500 = vadd.f32 %v1372, 1.0
  %v1501 = vadd.f32 %v1373, 1.0
  %v1502 = vadd.f32 %v1374, 1.0
  %v1503 = vadd.f32 %v1375, 1.0
  %v1504 = vadd.f32 %v1376, 1.0
  %v1505 = vadd.f32 %v1377, 1.0
  %v1506 = vadd.f32 %v1378, 1.0
  %v1507 = vadd.f32 %v1379, 1.0
  %v1508 = vadd.f32 %v1380, 1.0
  %v1509 = vadd.f32 %v1381, 1.0
  %v1510 = vadd.f32 %v1382, 1.0
  %v1511 = vadd.f32 %v1383, 1.0
  %v1512 = vadd.f32 %v1384, 1.0
  %v1513 = vadd.f32 %v1385, 1.0
  %v1514 = vadd.f32 %v1386, 1.0
  %v1515 = vadd.f32 %v1387, 1.0
  %v1516 = vadd.f32 %v1388, 1.0
  %v1517 = vadd.f32 %v1389, 1.0
  %v1518 = vadd.f32 %v1390, 1.0
  %v1519 = vadd.f32 %v1391, 1.0
  %v1520 = vadd.f32 %v1392, 1.0
  %v1521 = vadd.f32 %v1393, 1.0
  %v1522 = vadd.f32 %v1394, 1.0
  %v1523 = vmul.f32 %v1395, 0.5
  %v1524 = vmul.f32 %v1396, 0.5
  %v1525 = vmul.f32 %v1397, 0.5
  %v1526 = vmul.f32 %v1398, 0.5
  %v1527 = vmul.f32 %v1399, 0.5
  %v1528 = vmul.f32 %v1400, 0.5
  %v1529 = vmul.f32 %v1401, 0.5
  %v1530 = vmul.f32 %v1402, 0.5
  %v1531 = vmul.f32 %v1403, 0.5
  %v1532 = vmul.f32 %v1404, 0.5
  %v1533 = vmul.f32 %v1405, 0.5
  %v1534 = vmul.f32 %v1406, 0.5
  %v1535 = vmul.f32 %v1407, 0.5
  %v1536 = vmul.f32 %v1408, 0.5
  %v1537 = vmul.f32 %v1409, 0.5
  %v1538 = vmul.f32 %v1410, 0.5
  %v1539 = vmul.f32 %v1411, 0.5
  %v1540 = vmul.f32 %v1412, 0.5
  %v1541 = vmul.f32 %v1413, 0.5
  %v1542 = vmul.f32 %v1414, 0.5
  %v1543 = vmul.f32 %v1415, 0.5
  %v1544 = vmul.f32 %v1416, 0.5
  %v1545 = vmul.f32 %v1417, 0.5
  %v1546 = vmul.f32 %v1418, 0.5
  %v1547 = vmul.f32 %v1419, 0.5
  %v1548 = vmul.f32 %v1420, 0.5
  %v1549 = vmul.f32 %v1421, 0.5
  %v1550 = vmul.f32 %v1422, 0.5
  %v1551 = vmul.f32 %v1423, 0.5
  %v1552 = vmul.f32 %v1424, 0.5
  %v1553 = vmul.f32 %v1425, 0.5
  %v1554 = vmul.f32 %v1426, 0.5
  %v1555 = vmul.f32 %v1427, 0.5
  %v1556 = vmul.f32 %v1428, 0.5
  %v1557 = vmul.f32 %v1429, 0.5
  %v1558 = vmul.f32 %v1430, 0.5
  %v1559 = vmul.f32 %v1431, 0.5
  %v1560 = vmul.f32 %v1432, 0.5
  %v1561 = vmul.f32 %v1433, 0.5
  %v1562 = vmul.f32 %v1434, 0.5
  %v1563 = vmul.f32 %v1435, 0.5
  %v1564 = vmul.f32 %v1436, 0.5
  %v1565 = vmul.f32 %v1437, 0.5
  %v1566 = vmul.f32 %v1438, 0.5
  %v1567 = vmul.f32 %v1439, 0.5
  %v1568 = vmul.f32 %v1440, 0.5
  %v1569 = vmul.f32 %v1441, 0.5
  %v1570 = vmul.f32 %v1442, 0.5
  %v1571 = vmul.f32 %v1443, 0.5
  %v1572 = vmul.f32 %v1444, 0.5
  %v1573 = vmul.f32 %v1445, 0.5
  %v1574 = vmul.f32 %v1446, 0.5
  %v1575 = vmul.f32 %v1447, 0.5
  %v1576 = vmul.f32 %v1448, 0.5
  %v1577 = vmul.f32 %v1449, 0.5
  %v1578 = vmul.f32 %v1450, 0.5
  %v1579 = vmul.f32 %v1451, 0.5
  %v1580 = vmul.f32 %v1452, 0.5
  %v1581 = vmul.f32 %v1453, 0.5
  %v1582 = vmul.f32 %v1454, 0.5
  %v1583 = vmul.f32 %v1455, 0.5
  %v1584 = vmul.f32 %v1456, 0.5
  %v1585 = vmul.f32 %v1457, 0.5
  %v1586 = vmul.f32 %v1458, 0.5
  %v1587 = vmul.f32 %v1459, 0.5
  %v1588 = vmul.f32 %v1460, 0.5
  %v1589 = vmul.f32 %v1461, 0.5
  %v1590 = vmul.f32 %v1462, 0.5
  %v1591 = vmul.f32 %v1463, 0.5
  %v1592 = vmul.f32 %v1464, 0.5
  %v1593 = vmul.f32 %v1465, 0.5
  %v1594 = vmul.f32 %v1466, 0.5
  %v1595 = vmul.f32 %v1467, 0.5
  %v1596 = vmul.f32 %v1468, 0.5
  %v1597 = vmul.f32 %v1469, 0.5
  %v1598 = vmul.f32 %v1470, 0.5
  %v1599 = vmul.f32 %v1471, 0.5
  %v1600 = vmul.f32 %v1472, 0.5
  %v1601 = vmul.f32 %v1473, 0.5
  %v1602 = vmul.f32 %v1474, 0.5
  %v1603 = vmul.f32 %v1475, 0.5
  %v1604 = vmul.f32 %v1476, 0.5
  %v1605 = vmul.f32 %v1477, 0.5
  %v1606 = vmul.f32 %v1478, 0.5
  %v1607 = vmul.f32 %v1479, 0.5
  %v1608 = vmul.f32 %v1480, 0.5
  %v1609 = vmul.f32 %v1481, 0.5
  %v1610 = vmul.f32 %v1482, 0.5
  %v1611 = vmul.f32 %v1483, 0.5
  %v1612 = vmul.f32 %v1484, 0.5
  %v1613 = vmul.f32 %v1485, 0.5
  %v1614 = vmul.f32 %v1486, 0.5
  %v1615 = vmul.f32 %v1487, 0.5
  %v1616 = vmul.f32 %v1488, 0.5
  %v1617 = vmul.f32 %v1489, 0.5
  %v1618 = vmul.f32 %v1490, 0.5
  %v1619 = vmul.f32 %v1491, 0.5
  %v1620 = vmul.f32 %v1492, 0.5
  %v1621 = vmul.f32 %v1493, 0.5
  %v1622 = vmul.f32 %v1494, 0.5
  %v1623 = vmul.f32 %v1495, 0.5
  %v1624 = vmul.f32 %v1496, 0.5
  %v1625 = vmul.f32 %v1497, 0.5
  %v1626 = vmul.f32 %v1498, 0.5
  %v1627 = vmul.f32 %v1499, 0.5
  %v1628 = vmul.f32 %v1500, 0.5
  %v1629 = vmul.f32 %v1501, 0.5
  %v1630 = vmul.f32 %v1502, 0.5
  %v1631 = vmul.f32 %v1503, 0.5
  %v1632 = vmul.f32 %v1504, 0.5
  %v1633 = vmul.f32 %v1505, 0.5
  %v1634 = vmul.f32 %v1506, 0.5
  %v1635 = vmul.f32 %v1507, 0.5
  %v1636 = vmul.f32 %v1508, 0.5
  %v1637 = vmul.f32 %v1509, 0.5
  %v1638 = vmul.f32 %v1510, 0.5
  %v1639 = vmul.f32 %v1511, 0.5
  %v1640 = vmul.f32 %v1512, 0.5
  %v1641 = vmul.f32 %v1513, 0.5
  %v1642 = vmul.f32 %v1514, 0.5
  %v1643 = vmul.f32 %v1515, 0.5
  %v1644 = vmul.f32 %v1516, 0.5
  %v1645 = vmul.f32 %v1517, 0.5
  %v1646 = vmul.f32 %v1518, 0.5
  %v1647 = vmul.f32 %v1519, 0.5
  %v1648 = vmul.f32 %v1520, 0.5
  %v1649 = vmul.f32 %v1521, 0.5
  %v1650 = vmul.f32 %v1522, 0.5
  %v1651 = vmul.f32 %v309, %v1523
  %v1652 = vmul.f32 %v311, %v1524
  %v1653 = vmul.f32 %v313, %v1525
  %v1654 = vmul.f32 %v315, %v1526
  %v1655 = vmul.f32 %v319, %v1527
  %v1656 = vmul.f32 %v321, %v1528
  %v1657 = vmul.f32 %v323, %v1529
  %v1658 = vmul.f32 %v325, %v1530
  %v1659 = vmul.f32 %v329, %v1531
  %v1660 = vmul.f32 %v331, %v1532
  %v1661 = vmul.f32 %v333, %v1533
  %v1662 = vmul.f32 %v335, %v1534
  %v1663 = vmul.f32 %v339, %v1535
  %v1664 = vmul.f32 %v341, %v1536
  %v1665 = vmul.f32 %v343, %v1537
  %v1666 = vmul.f32 %v345, %v1538
  %v1667 = vmul.f32 %v349, %v1539
  %v1668 = vmul.f32 %v351, %v1540
  %v1669 = vmul.f32 %v353, %v1541
  %v1670 = vmul.f32 %v355, %v1542
  %v1671 = vmul.f32 %v359, %v1543
  %v1672 = vmul.f32 %v361, %v1544
  %v1673 = vmul.f32 %v363, %v1545
  %v1674 = vmul.f32 %v365, %v1546
  %v1675 = vmul.f32 %v369, %v1547
  %v1676 = vmul.f32 %v371, %v1548
  %v1677 = vmul.f32 %v373, %v1549
  %v1678 = vmul.f32 %v375, %v1550
  %v1679 = vmul.f32 %v379, %v1551
  %v1680 = vmul.f32 %v381, %v1552
  %v1681 = vmul.f32 %v383, %v1553
  %v1682 = vmul.f32 %v385, %v1554
  %v1683 = vmul.f32 %v389, %v1555
  %v1684 = vmul.f32 %v391, %v1556
  %v1685 = vmul.f32 %v393, %v1557
  %v1686 = vmul.f32 %v395, %v1558
  %v1687 = vmul.f32 %v399, %v1559
  %v1688 = vmul.f32 %v401, %v1560
  %v1689 = vmul.f32 %v403, %v1561
  %v1690 = vmul.f32 %v405, %v1562
  %v1691 = vmul.f32 %v409, %v1563
  %v1692 = vmul.f32 %v411, %v1564
  %v1693 = vmul.f32 %v413, %v1565
  %v1694 = vmul.f32 %v415, %v1566
  %v1695 = vmul.f32 %v419, %v1567
  %v1696 = vmul.f32 %v421, %v1568
  %v1697 = vmul.f32 %v423, %v1569
  %v1698 = vmul.f32 %v425, %v1570
  %v1699 = vmul.f32 %v429, %v1571
  %v1700 = vmul.f32 %v431, %v1572
  %v1701 = vmul.f32 %v433, %v1573
  %v1702 = vmul.f32 %v435, %v1574
  %v1703 = vmul.f32 %v439, %v1575
  %v1704 = vmul.f32 %v441, %v1576
  %v1705 = vmul.f32 %v443, %v1577
  %v1706 = vmul.f32 %v445, %v1578
  %v1707 = vmul.f32 %v449, %v1579
  %v1708 = vmul.f32 %v451, %v1580
  %v1709 = vmul.f32 %v453, %v1581
  %v1710 = vmul.f32 %v455, %v1582
  %v1711 = vmul.f32 %v459, %v1583
  %v1712 = vmul.f32 %v461, %v1584
  %v1713 = vmul.f32 %v463, %v1585
  %v1714 = vmul.f32 %v465, %v1586
  %v1715 = vmul.f32 %v469, %v1587
  %v1716 = vmul.f32 %v471, %v1588
  %v1717 = vmul.f32 %v473, %v1589
  %v1718 = vmul.f32 %v475, %v1590
  %v1719 = vmul.f32 %v479, %v1591
  %v1720 = vmul.f32 %v481, %v1592
  %v1721 = vmul.f32 %v483, %v1593
  %v1722 = vmul.f32 %v485, %v1594
  %v1723 = vmul.f32 %v489, %v1595
  %v1724 = vmul.f32 %v491, %v1596
  %v1725 = vmul.f32 %v493, %v1597
  %v1726 = vmul.f32 %v495, %v1598
  %v1727 = vmul.f32 %v499, %v1599
  %v1728 = vmul.f32 %v501, %v1600
  %v1729 = vmul.f32 %v503, %v1601
  %v1730 = vmul.f32 %v505, %v1602
  %v1731 = vmul.f32 %v509, %v1603
  %v1732 = vmul.f32 %v511, %v1604
  %v1733 = vmul.f32 %v513, %v1605
  %v1734 = vmul.f32 %v515, %v1606
  %v1735 = vmul.f32 %v519, %v1607
  %v1736 = vmul.f32 %v521, %v1608
  %v1737 = vmul.f32 %v523, %v1609
  %v1738 = vmul.f32 %v525, %v1610
  %v1739 = vmul.f32 %v529, %v1611
  %v1740 = vmul.f32 %v531, %v1612
  %v1741 = vmul.f32 %v533, %v1613
  %v1742 = vmul.f32 %v535, %v1614
  %v1743 = vmul.f32 %v539, %v1615
  %v1744 = vmul.f32 %v541, %v1616
  %v1745 = vmul.f32 %v543, %v1617
  %v1746 = vmul.f32 %v545, %v1618
  %v1747 = vmul.f32 %v549, %v1619
  %v1748 = vmul.f32 %v551, %v1620
  %v1749 = vmul.f32 %v553, %v1621
  %v1750 = vmul.f32 %v555, %v1622
  %v1751 = vmul.f32 %v559, %v1623
  %v1752 = vmul.f32 %v561, %v1624
  %v1753 = vmul.f32 %v563, %v1625
  %v1754 = vmul.f32 %v565, %v1626
  %v1755 = vmul.f32 %v569, %v1627
  %v1756 = vmul.f32 %v571, %v1628
  %v1757 = vmul.f32 %v573, %v1629
  %v1758 = vmul.f32 %v575, %v1630
  %v1759 = vmul.f32 %v579, %v1631
  %v1760 = vmul.f32 %v581, %v1632
  %v1761 = vmul.f32 %v583, %v1633
  %v1762 = vmul.f32 %v585, %v1634
  %v1763 = vmul.f32 %v589, %v1635
  %v1764 = vmul.f32 %v591, %v1636
  %v1765 = vmul.f32 %v593, %v1637
  %v1766 = vmul.f32 %v595, %v1638
  %v1767 = vmul.f32 %v599, %v1639
  %v1768 = vmul.f32 %v601, %v1640
  %v1769 = vmul.f32 %v603, %v1641
  %v1770 = vmul.f32 %v605, %v1642
  %v1771 = vmul.f32 %v609, %v1643
  %v1772 = vmul.f32 %v611, %v1644
  %v1773 = vmul.f32 %v613, %v1645
  %v1774 = vmul.f32 %v615, %v1646
  %v1775 = vmul.f32 %v619, %v1647
  %v1776 = vmul.f32 %v621, %v1648
  %v1777 = vmul.f32 %v623, %v1649
  %v1778 = vmul.f32 %v625, %v1650
  %v1779 = vpack.c.bf16 %v1653, %v1651
  %v1780 = vpack.c.bf16 %v1654, %v1652
  %v1781 = vpack.c.bf16 %v1657, %v1655
  %v1782 = vpack.c.bf16 %v1658, %v1656
  %v1783 = vpack.c.bf16 %v1661, %v1659
  %v1784 = vpack.c.bf16 %v1662, %v1660
  %v1785 = vpack.c.bf16 %v1665, %v1663
  %v1786 = vpack.c.bf16 %v1666, %v1664
  %v1787 = vpack.c.bf16 %v1669, %v1667
  %v1788 = vpack.c.bf16 %v1670, %v1668
  %v1789 = vpack.c.bf16 %v1673, %v1671
  %v1790 = vpack.c.bf16 %v1674, %v1672
  %v1791 = vpack.c.bf16 %v1677, %v1675
  %v1792 = vpack.c.bf16 %v1678, %v1676
  %v1793 = vpack.c.bf16 %v1681, %v1679
  %v1794 = vpack.c.bf16 %v1682, %v1680
  %v1795 = vpack.c.bf16 %v1685, %v1683
  %v1796 = vpack.c.bf16 %v1686, %v1684
  %v1797 = vpack.c.bf16 %v1689, %v1687
  %v1798 = vpack.c.bf16 %v1690, %v1688
  %v1799 = vpack.c.bf16 %v1693, %v1691
  %v1800 = vpack.c.bf16 %v1694, %v1692
  %v1801 = vpack.c.bf16 %v1697, %v1695
  %v1802 = vpack.c.bf16 %v1698, %v1696
  %v1803 = vpack.c.bf16 %v1701, %v1699
  %v1804 = vpack.c.bf16 %v1702, %v1700
  %v1805 = vpack.c.bf16 %v1705, %v1703
  %v1806 = vpack.c.bf16 %v1706, %v1704
  %v1807 = vpack.c.bf16 %v1709, %v1707
  %v1808 = vpack.c.bf16 %v1710, %v1708
  %v1809 = vpack.c.bf16 %v1713, %v1711
  %v1810 = vpack.c.bf16 %v1714, %v1712
  %v1811 = vpack.c.bf16 %v1717, %v1715
  %v1812 = vpack.c.bf16 %v1718, %v1716
  %v1813 = vpack.c.bf16 %v1721, %v1719
  %v1814 = vpack.c.bf16 %v1722, %v1720
  %v1815 = vpack.c.bf16 %v1725, %v1723
  %v1816 = vpack.c.bf16 %v1726, %v1724
  %v1817 = vpack.c.bf16 %v1729, %v1727
  %v1818 = vpack.c.bf16 %v1730, %v1728
  %v1819 = vpack.c.bf16 %v1733, %v1731
  %v1820 = vpack.c.bf16 %v1734, %v1732
  %v1821 = vpack.c.bf16 %v1737, %v1735
  %v1822 = vpack.c.bf16 %v1738, %v1736
  %v1823 = vpack.c.bf16 %v1741, %v1739
  %v1824 = vpack.c.bf16 %v1742, %v1740
  %v1825 = vpack.c.bf16 %v1745, %v1743
  %v1826 = vpack.c.bf16 %v1746, %v1744
  %v1827 = vpack.c.bf16 %v1749, %v1747
  %v1828 = vpack.c.bf16 %v1750, %v1748
  %v1829 = vpack.c.bf16 %v1753, %v1751
  %v1830 = vpack.c.bf16 %v1754, %v1752
  %v1831 = vpack.c.bf16 %v1757, %v1755
  %v1832 = vpack.c.bf16 %v1758, %v1756
  %v1833 = vpack.c.bf16 %v1761, %v1759
  %v1834 = vpack.c.bf16 %v1762, %v1760
  %v1835 = vpack.c.bf16 %v1765, %v1763
  %v1836 = vpack.c.bf16 %v1766, %v1764
  %v1837 = vpack.c.bf16 %v1769, %v1767
  %v1838 = vpack.c.bf16 %v1770, %v1768
  %v1839 = vpack.c.bf16 %v1773, %v1771
  %v1840 = vpack.c.bf16 %v1774, %v1772
  %v1841 = vpack.c.bf16 %v1777, %v1775
  %v1842 = vpack.c.bf16 %v1778, %v1776
  %v1843 = vld [vmem:[%s3] sm:$0xf]
  %v1844 = vld [vmem:[%s3 + $0x4] sm:$0xf]
  %v1845 = vld [vmem:[%s3 + $0x8] sm:$0xf]
  %v1846 = vld [vmem:[%s3 + $0xc] sm:$0xf]
  %v1847 = vld [vmem:[%s3 + $0x10] sm:$0xf]
  %v1848 = vld [vmem:[%s3 + $0x14] sm:$0xf]
  %v1849 = vld [vmem:[%s3 + $0x18] sm:$0xf]
  %v1850 = vld [vmem:[%s3 + $0x1c] sm:$0xf]
  %v1851 = vld [vmem:[%s3 + $0x20] sm:$0xf]
  %v1852 = vld [vmem:[%s3 + $0x24] sm:$0xf]
  %v1853 = vld [vmem:[%s3 + $0x28] sm:$0xf]
  %v1854 = vld [vmem:[%s3 + $0x2c] sm:$0xf]
  %v1855 = vld [vmem:[%s3 + $0x30] sm:$0xf]
  %v1856 = vld [vmem:[%s3 + $0x34] sm:$0xf]
  %v1857 = vld [vmem:[%s3 + $0x38] sm:$0xf]
  %v1858 = vld [vmem:[%s3 + $0x3c] sm:$0xf]
  %v1859 = vld [vmem:[%s3 + $0x40] sm:$0xf]
  %v1860 = vld [vmem:[%s3 + $0x44] sm:$0xf]
  %v1861 = vld [vmem:[%s3 + $0x48] sm:$0xf]
  %v1862 = vld [vmem:[%s3 + $0x4c] sm:$0xf]
  %v1863 = vld [vmem:[%s3 + $0x50] sm:$0xf]
  %v1864 = vld [vmem:[%s3 + $0x54] sm:$0xf]
  %v1865 = vld [vmem:[%s3 + $0x58] sm:$0xf]
  %v1866 = vld [vmem:[%s3 + $0x5c] sm:$0xf]
  %v1867 = vld [vmem:[%s3 + $0x60] sm:$0xf]
  %v1868 = vld [vmem:[%s3 + $0x64] sm:$0xf]
  %v1869 = vld [vmem:[%s3 + $0x68] sm:$0xf]
  %v1870 = vld [vmem:[%s3 + $0x6c] sm:$0xf]
  %v1871 = vld [vmem:[%s3 + $0x70] sm:$0xf]
  %v1872 = vld [vmem:[%s3 + $0x74] sm:$0xf]
  %v1873 = vld [vmem:[%s3 + $0x78] sm:$0xf]
  %v1874 = vld [vmem:[%s3 + $0x7c] sm:$0xf]
  %v1875 = vld [vmem:[%s4] sm:$0x1]
  %v1877 = vlaneseq
  %v1878 = vshrl.u32 %v1877, 7
  %v1879 = vsub.s32 0, %v1878
  %v1880 = vrot.slane %v1875, %v1879
  %v1914 = vunpack.c.l.b16 %v1843
  %v1915 = vunpack.c.l.b16 %v1844
  %v1916 = vunpack.c.l.b16 %v1845
  %v1917 = vunpack.c.l.b16 %v1846
  %v1918 = vunpack.c.l.b16 %v1847
  %v1919 = vunpack.c.l.b16 %v1848
  %v1920 = vunpack.c.l.b16 %v1849
  %v1921 = vunpack.c.l.b16 %v1850
  %v1922 = vunpack.c.l.b16 %v1851
  %v1923 = vunpack.c.l.b16 %v1852
  %v1924 = vunpack.c.l.b16 %v1853
  %v1925 = vunpack.c.l.b16 %v1854
  %v1926 = vunpack.c.l.b16 %v1855
  %v1927 = vunpack.c.l.b16 %v1856
  %v1928 = vunpack.c.l.b16 %v1857
  %v1929 = vunpack.c.l.b16 %v1858
  %v1930 = vunpack.c.l.b16 %v1859
  %v1931 = vunpack.c.l.b16 %v1860
  %v1932 = vunpack.c.l.b16 %v1861
  %v1933 = vunpack.c.l.b16 %v1862
  %v1934 = vunpack.c.l.b16 %v1863
  %v1935 = vunpack.c.l.b16 %v1864
  %v1936 = vunpack.c.l.b16 %v1865
  %v1937 = vunpack.c.l.b16 %v1866
  %v1938 = vunpack.c.l.b16 %v1867
  %v1939 = vunpack.c.l.b16 %v1868
  %v1940 = vunpack.c.l.b16 %v1869
  %v1941 = vunpack.c.l.b16 %v1870
  %v1942 = vunpack.c.l.b16 %v1871
  %v1943 = vunpack.c.l.b16 %v1872
  %v1944 = vunpack.c.l.b16 %v1873
  %v1945 = vunpack.c.l.b16 %v1874
  %v1946 = vpack.c.b16 %v1915, %v1914
  %v1947 = vpack.c.b16 %v1917, %v1916
  %v1948 = vpack.c.b16 %v1919, %v1918
  %v1949 = vpack.c.b16 %v1921, %v1920
  %v1950 = vpack.c.b16 %v1923, %v1922
  %v1951 = vpack.c.b16 %v1925, %v1924
  %v1952 = vpack.c.b16 %v1927, %v1926
  %v1953 = vpack.c.b16 %v1929, %v1928
  %v1954 = vpack.c.b16 %v1931, %v1930
  %v1955 = vpack.c.b16 %v1933, %v1932
  %v1956 = vpack.c.b16 %v1935, %v1934
  %v1957 = vpack.c.b16 %v1937, %v1936
  %v1958 = vpack.c.b16 %v1939, %v1938
  %v1959 = vpack.c.b16 %v1941, %v1940
  %v1960 = vpack.c.b16 %v1943, %v1942
  %v1961 = vpack.c.b16 %v1945, %v1944
  %1978 = vmatprep.subr.bf16.mxu0 0
  %1979 = vmatpush1.bf16.msra.mxu0 %v1946
  %1980 = vmatprep.subr.bf16.mxu0 0
  %1981 = vmatpush1.bf16.msra.mxu0 %v1947
  %1982 = vmatprep.subr.bf16.mxu0 0
  %1983 = vmatpush1.bf16.msra.mxu0 %v1948
  %1984 = vmatprep.subr.bf16.mxu0 0
  %1985 = vmatpush1.bf16.msra.mxu0 %v1949
  %1986 = vmatprep.subr.bf16.mxu0 0
  %1987 = vmatpush1.bf16.msra.mxu0 %v1950
  %1988 = vmatprep.subr.bf16.mxu0 0
  %1989 = vmatpush1.bf16.msra.mxu0 %v1951
  %1990 = vmatprep.subr.bf16.mxu0 0
  %1991 = vmatpush1.bf16.msra.mxu0 %v1952
  %1992 = vmatprep.subr.bf16.mxu0 0
  %1993 = vmatpush1.bf16.msra.mxu0 %v1953
  %1994 = vmatprep.subr.bf16.mxu0 0
  %1995 = vmatpush1.bf16.msra.mxu0 %v1954
  %1996 = vmatprep.subr.bf16.mxu0 0
  %1997 = vmatpush1.bf16.msra.mxu0 %v1955
  %1998 = vmatprep.subr.bf16.mxu0 0
  %1999 = vmatpush1.bf16.msra.mxu0 %v1956
  %2000 = vmatprep.subr.bf16.mxu0 0
  %2001 = vmatpush1.bf16.msra.mxu0 %v1957
  %2002 = vmatprep.subr.bf16.mxu0 0
  %2003 = vmatpush1.bf16.msra.mxu0 %v1958
  %2004 = vmatprep.subr.bf16.mxu0 0
  %2005 = vmatpush1.bf16.msra.mxu0 %v1959
  %2006 = vmatprep.subr.bf16.mxu0 0
  %2007 = vmatpush1.bf16.msra.mxu0 %v1960
  %2008 = vmatprep.subr.bf16.mxu0 0
  %2009 = vmatpush1.bf16.msra.mxu0 %v1961
  %2010 = vmatprep.mubr.bf16.mxu0 %v1780
  %2011 = vmatmul.mubr.bf16.gmra.mrb[0].mxu0 %v1779
  %v2012 = vpop.f32.mrb[0].mxu0
  %v2013 = vadd.f32 %v1880, %v2012
  %v2014 = vpop.f32.mrb[0].mxu0
  %v2015 = vpop.f32.mrb[0].mxu0
  %v2016 = vadd.f32 %v1880, %v2015
  %v2017 = vpop.f32.mrb[0].mxu0
  %2018 = vmatprep.mubr.bf16.mxu0 %v1782
  %2019 = vmatmul.mubr.bf16.gmra.mrb[0].mxu0 %v1781
  %v2020 = vpop.f32.mrb[0].mxu0
  %v2021 = vadd.f32 %v1880, %v2020
  %v2022 = vpop.f32.mrb[0].mxu0
  %v2023 = vpop.f32.mrb[0].mxu0
  %v2024 = vadd.f32 %v1880, %v2023
  %v2025 = vpop.f32.mrb[0].mxu0
  %2026 = vmatprep.mubr.bf16.mxu0 %v1784
  %2027 = vmatmul.mubr.bf16.gmra.mrb[0].mxu0 %v1783
  %v2028 = vpop.f32.mrb[0].mxu0
  %v2029 = vadd.f32 %v1880, %v2028
  %v2030 = vpop.f32.mrb[0].mxu0
  %v2031 = vpop.f32.mrb[0].mxu0
  %v2032 = vadd.f32 %v1880, %v2031
  %v2033 = vpop.f32.mrb[0].mxu0
  %2034 = vmatprep.mubr.bf16.mxu0 %v1786
  %2035 = vmatmul.mubr.bf16.gmra.mrb[0].mxu0 %v1785
  %v2036 = vpop.f32.mrb[0].mxu0
  %v2037 = vadd.f32 %v1880, %v2036
  %v2038 = vpop.f32.mrb[0].mxu0
  %v2039 = vpop.f32.mrb[0].mxu0
  %v2040 = vadd.f32 %v1880, %v2039
  %v2041 = vpop.f32.mrb[0].mxu0
  %2042 = vmatprep.mubr.bf16.mxu0 %v1788
  %2043 = vmatmul.mubr.bf16.gmra.mrb[0].mxu0 %v1787
  %v2044 = vpop.f32.mrb[0].mxu0
  %v2045 = vadd.f32 %v1880, %v2044
  %v2046 = vpop.f32.mrb[0].mxu0
  %v2047 = vpop.f32.mrb[0].mxu0
  %v2048 = vadd.f32 %v1880, %v2047
  %v2049 = vpop.f32.mrb[0].mxu0
  %2050 = vmatprep.mubr.bf16.mxu0 %v1790
  %2051 = vmatmul.mubr.bf16.gmra.mrb[0].mxu0 %v1789
  %v2052 = vpop.f32.mrb[0].mxu0
  %v2053 = vadd.f32 %v1880, %v2052
  %v2054 = vpop.f32.mrb[0].mxu0
  %v2055 = vpop.f32.mrb[0].mxu0
  %v2056 = vadd.f32 %v1880, %v2055
  %v2057 = vpop.f32.mrb[0].mxu0
  %2058 = vmatprep.mubr.bf16.mxu0 %v1792
  %2059 = vmatmul.mubr.bf16.gmra.mrb[0].mxu0 %v1791
  %v2060 = vpop.f32.mrb[0].mxu0
  %v2061 = vadd.f32 %v1880, %v2060
  %v2062 = vpop.f32.mrb[0].mxu0
  %v2063 = vpop.f32.mrb[0].mxu0
  %v2064 = vadd.f32 %v1880, %v2063
  %v2065 = vpop.f32.mrb[0].mxu0
  %2066 = vmatprep.mubr.bf16.mxu0 %v1794
  %2067 = vmatmul.mubr.bf16.gmra.mrb[0].mxu0 %v1793
  %v2068 = vpop.f32.mrb[0].mxu0
  %v2069 = vadd.f32 %v1880, %v2068
  %v2070 = vpop.f32.mrb[0].mxu0
  %v2071 = vpop.f32.mrb[0].mxu0
  %v2072 = vadd.f32 %v1880, %v2071
  %v2073 = vpop.f32.mrb[0].mxu0
  %2074 = vmatprep.mubr.bf16.mxu0 %v1796
  %2075 = vmatmul.mubr.bf16.gmra.mrb[0].mxu0 %v1795
  %v2076 = vpop.f32.mrb[0].mxu0
  %v2077 = vadd.f32 %v1880, %v2076
  %v2078 = vpop.f32.mrb[0].mxu0
  %v2079 = vpop.f32.mrb[0].mxu0
  %v2080 = vadd.f32 %v1880, %v2079
  %v2081 = vpop.f32.mrb[0].mxu0
  %2082 = vmatprep.mubr.bf16.mxu0 %v1798
  %2083 = vmatmul.mubr.bf16.gmra.mrb[0].mxu0 %v1797
  %v2084 = vpop.f32.mrb[0].mxu0
  %v2085 = vadd.f32 %v1880, %v2084
  %v2086 = vpop.f32.mrb[0].mxu0
  %v2087 = vpop.f32.mrb[0].mxu0
  %v2088 = vadd.f32 %v1880, %v2087
  %v2089 = vpop.f32.mrb[0].mxu0
  %2090 = vmatprep.mubr.bf16.mxu0 %v1800
  %2091 = vmatmul.mubr.bf16.gmra.mrb[0].mxu0 %v1799
  %v2092 = vpop.f32.mrb[0].mxu0
  %v2093 = vadd.f32 %v1880, %v2092
  %v2094 = vpop.f32.mrb[0].mxu0
  %v2095 = vpop.f32.mrb[0].mxu0
  %v2096 = vadd.f32 %v1880, %v2095
  %v2097 = vpop.f32.mrb[0].mxu0
  %2098 = vmatprep.mubr.bf16.mxu0 %v1802
  %2099 = vmatmul.mubr.bf16.gmra.mrb[0].mxu0 %v1801
  %v2100 = vpop.f32.mrb[0].mxu0
  %v2101 = vadd.f32 %v1880, %v2100
  %v2102 = vpop.f32.mrb[0].mxu0
  %v2103 = vpop.f32.mrb[0].mxu0
  %v2104 = vadd.f32 %v1880, %v2103
  %v2105 = vpop.f32.mrb[0].mxu0
  %2106 = vmatprep.mubr.bf16.mxu0 %v1804
  %2107 = vmatmul.mubr.bf16.gmra.mrb[0].mxu0 %v1803
  %v2108 = vpop.f32.mrb[0].mxu0
  %v2109 = vadd.f32 %v1880, %v2108
  %v2110 = vpop.f32.mrb[0].mxu0
  %v2111 = vpop.f32.mrb[0].mxu0
  %v2112 = vadd.f32 %v1880, %v2111
  %v2113 = vpop.f32.mrb[0].mxu0
  %2114 = vmatprep.mubr.bf16.mxu0 %v1806
  %2115 = vmatmul.mubr.bf16.gmra.mrb[0].mxu0 %v1805
  %v2116 = vpop.f32.mrb[0].mxu0
  %v2117 = vadd.f32 %v1880, %v2116
  %v2118 = vpop.f32.mrb[0].mxu0
  %v2119 = vpop.f32.mrb[0].mxu0
  %v2120 = vadd.f32 %v1880, %v2119
  %v2121 = vpop.f32.mrb[0].mxu0
  %2122 = vmatprep.mubr.bf16.mxu0 %v1808
  %2123 = vmatmul.mubr.bf16.gmra.mrb[0].mxu0 %v1807
  %v2124 = vpop.f32.mrb[0].mxu0
  %v2125 = vadd.f32 %v1880, %v2124
  %v2126 = vpop.f32.mrb[0].mxu0
  %v2127 = vpop.f32.mrb[0].mxu0
  %v2128 = vadd.f32 %v1880, %v2127
  %v2129 = vpop.f32.mrb[0].mxu0
  %2130 = vmatprep.mubr.bf16.mxu0 %v1810
  %2131 = vmatmul.mubr.bf16.gmra.mrb[0].mxu0 %v1809
  %v2132 = vpop.f32.mrb[0].mxu0
  %v2133 = vadd.f32 %v1880, %v2132
  %v2134 = vpop.f32.mrb[0].mxu0
  %v2135 = vpop.f32.mrb[0].mxu0
  %v2136 = vadd.f32 %v1880, %v2135
  %v2137 = vpop.f32.mrb[0].mxu0
  %2138 = vmatprep.mubr.bf16.mxu0 %v1812
  %2139 = vmatmul.mubr.bf16.gmra.mrb[0].mxu0 %v1811
  %v2140 = vpop.f32.mrb[0].mxu0
  %v2141 = vadd.f32 %v1880, %v2140
  %v2142 = vpop.f32.mrb[0].mxu0
  %v2143 = vpop.f32.mrb[0].mxu0
  %v2144 = vadd.f32 %v1880, %v2143
  %v2145 = vpop.f32.mrb[0].mxu0
  %2146 = vmatprep.mubr.bf16.mxu0 %v1814
  %2147 = vmatmul.mubr.bf16.gmra.mrb[0].mxu0 %v1813
  %v2148 = vpop.f32.mrb[0].mxu0
  %v2149 = vadd.f32 %v1880, %v2148
  %v2150 = vpop.f32.mrb[0].mxu0
  %v2151 = vpop.f32.mrb[0].mxu0
  %v2152 = vadd.f32 %v1880, %v2151
  %v2153 = vpop.f32.mrb[0].mxu0
  %2154 = vmatprep.mubr.bf16.mxu0 %v1816
  %2155 = vmatmul.mubr.bf16.gmra.mrb[0].mxu0 %v1815
  %v2156 = vpop.f32.mrb[0].mxu0
  %v2157 = vadd.f32 %v1880, %v2156
  %v2158 = vpop.f32.mrb[0].mxu0
  %v2159 = vpop.f32.mrb[0].mxu0
  %v2160 = vadd.f32 %v1880, %v2159
  %v2161 = vpop.f32.mrb[0].mxu0
  %2162 = vmatprep.mubr.bf16.mxu0 %v1818
  %2163 = vmatmul.mubr.bf16.gmra.mrb[0].mxu0 %v1817
  %v2164 = vpop.f32.mrb[0].mxu0
  %v2165 = vadd.f32 %v1880, %v2164
  %v2166 = vpop.f32.mrb[0].mxu0
  %v2167 = vpop.f32.mrb[0].mxu0
  %v2168 = vadd.f32 %v1880, %v2167
  %v2169 = vpop.f32.mrb[0].mxu0
  %2170 = vmatprep.mubr.bf16.mxu0 %v1820
  %2171 = vmatmul.mubr.bf16.gmra.mrb[0].mxu0 %v1819
  %v2172 = vpop.f32.mrb[0].mxu0
  %v2173 = vadd.f32 %v1880, %v2172
  %v2174 = vpop.f32.mrb[0].mxu0
  %v2175 = vpop.f32.mrb[0].mxu0
  %v2176 = vadd.f32 %v1880, %v2175
  %v2177 = vpop.f32.mrb[0].mxu0
  %2178 = vmatprep.mubr.bf16.mxu0 %v1822
  %2179 = vmatmul.mubr.bf16.gmra.mrb[0].mxu0 %v1821
  %v2180 = vpop.f32.mrb[0].mxu0
  %v2181 = vadd.f32 %v1880, %v2180
  %v2182 = vpop.f32.mrb[0].mxu0
  %v2183 = vpop.f32.mrb[0].mxu0
  %v2184 = vadd.f32 %v1880, %v2183
  %v2185 = vpop.f32.mrb[0].mxu0
  %2186 = vmatprep.mubr.bf16.mxu0 %v1824
  %2187 = vmatmul.mubr.bf16.gmra.mrb[0].mxu0 %v1823
  %v2188 = vpop.f32.mrb[0].mxu0
  %v2189 = vadd.f32 %v1880, %v2188
  %v2190 = vpop.f32.mrb[0].mxu0
  %v2191 = vpop.f32.mrb[0].mxu0
  %v2192 = vadd.f32 %v1880, %v2191
  %v2193 = vpop.f32.mrb[0].mxu0
  %2194 = vmatprep.mubr.bf16.mxu0 %v1826
  %2195 = vmatmul.mubr.bf16.gmra.mrb[0].mxu0 %v1825
  %v2196 = vpop.f32.mrb[0].mxu0
  %v2197 = vadd.f32 %v1880, %v2196
  %v2198 = vpop.f32.mrb[0].mxu0
  %v2199 = vpop.f32.mrb[0].mxu0
  %v2200 = vadd.f32 %v1880, %v2199
  %v2201 = vpop.f32.mrb[0].mxu0
  %2202 = vmatprep.mubr.bf16.mxu0 %v1828
  %2203 = vmatmul.mubr.bf16.gmra.mrb[0].mxu0 %v1827
  %v2204 = vpop.f32.mrb[0].mxu0
  %v2205 = vadd.f32 %v1880, %v2204
  %v2206 = vpop.f32.mrb[0].mxu0
  %v2207 = vpop.f32.mrb[0].mxu0
  %v2208 = vadd.f32 %v1880, %v2207
  %v2209 = vpop.f32.mrb[0].mxu0
  %2210 = vmatprep.mubr.bf16.mxu0 %v1830
  %2211 = vmatmul.mubr.bf16.gmra.mrb[0].mxu0 %v1829
  %v2212 = vpop.f32.mrb[0].mxu0
  %v2213 = vadd.f32 %v1880, %v2212
  %v2214 = vpop.f32.mrb[0].mxu0
  %v2215 = vpop.f32.mrb[0].mxu0
  %v2216 = vadd.f32 %v1880, %v2215
  %v2217 = vpop.f32.mrb[0].mxu0
  %2218 = vmatprep.mubr.bf16.mxu0 %v1832
  %2219 = vmatmul.mubr.bf16.gmra.mrb[0].mxu0 %v1831
  %v2220 = vpop.f32.mrb[0].mxu0
  %v2221 = vadd.f32 %v1880, %v2220
  %v2222 = vpop.f32.mrb[0].mxu0
  %v2223 = vpop.f32.mrb[0].mxu0
  %v2224 = vadd.f32 %v1880, %v2223
  %v2225 = vpop.f32.mrb[0].mxu0
  %2226 = vmatprep.mubr.bf16.mxu0 %v1834
  %2227 = vmatmul.mubr.bf16.gmra.mrb[0].mxu0 %v1833
  %v2228 = vpop.f32.mrb[0].mxu0
  %v2229 = vadd.f32 %v1880, %v2228
  %v2230 = vpop.f32.mrb[0].mxu0
  %v2231 = vpop.f32.mrb[0].mxu0
  %v2232 = vadd.f32 %v1880, %v2231
  %v2233 = vpop.f32.mrb[0].mxu0
  %2234 = vmatprep.mubr.bf16.mxu0 %v1836
  %2235 = vmatmul.mubr.bf16.gmra.mrb[0].mxu0 %v1835
  %v2236 = vpop.f32.mrb[0].mxu0
  %v2237 = vadd.f32 %v1880, %v2236
  %v2238 = vpop.f32.mrb[0].mxu0
  %v2239 = vpop.f32.mrb[0].mxu0
  %v2240 = vadd.f32 %v1880, %v2239
  %v2241 = vpop.f32.mrb[0].mxu0
  %2242 = vmatprep.mubr.bf16.mxu0 %v1838
  %2243 = vmatmul.mubr.bf16.gmra.mrb[0].mxu0 %v1837
  %v2244 = vpop.f32.mrb[0].mxu0
  %v2245 = vadd.f32 %v1880, %v2244
  %v2246 = vpop.f32.mrb[0].mxu0
  %v2247 = vpop.f32.mrb[0].mxu0
  %v2248 = vadd.f32 %v1880, %v2247
  %v2249 = vpop.f32.mrb[0].mxu0
  %2250 = vmatprep.mubr.bf16.mxu0 %v1840
  %2251 = vmatmul.mubr.bf16.gmra.mrb[0].mxu0 %v1839
  %v2252 = vpop.f32.mrb[0].mxu0
  %v2253 = vadd.f32 %v1880, %v2252
  %v2254 = vpop.f32.mrb[0].mxu0
  %v2255 = vpop.f32.mrb[0].mxu0
  %v2256 = vadd.f32 %v1880, %v2255
  %v2257 = vpop.f32.mrb[0].mxu0
  %2258 = vmatprep.mubr.bf16.mxu0 %v1842
  %2259 = vmatmul.mubr.bf16.gmra.mrb[0].mxu0 %v1841
  %v2260 = vpop.f32.mrb[0].mxu0
  %v2261 = vadd.f32 %v1880, %v2260
  %v2262 = vpop.f32.mrb[0].mxu0
  %v2263 = vpop.f32.mrb[0].mxu0
  %v2264 = vadd.f32 %v1880, %v2263
  %v2265 = vpop.f32.mrb[0].mxu0
  %2266 = vdwg.mxu0
  %v2267 = vadd.f32 %v2013, %v21
  %v2268 = vadd.f32 %v2016, %v22
  %v2269 = vadd.f32 %v2021, %v23
  %v2270 = vadd.f32 %v2024, %v24
  %v2271 = vadd.f32 %v2029, %v25
  %v2272 = vadd.f32 %v2032, %v26
  %v2273 = vadd.f32 %v2037, %v27
  %v2274 = vadd.f32 %v2040, %v28
  %v2275 = vadd.f32 %v2045, %v29
  %v2276 = vadd.f32 %v2048, %v30
  %v2277 = vadd.f32 %v2053, %v31
  %v2278 = vadd.f32 %v2056, %v32
  %v2279 = vadd.f32 %v2061, %v33
  %v2280 = vadd.f32 %v2064, %v34
  %v2281 = vadd.f32 %v2069, %v35
  %v2282 = vadd.f32 %v2072, %v36
  %v2283 = vadd.f32 %v2077, %v37
  %v2284 = vadd.f32 %v2080, %v38
  %v2285 = vadd.f32 %v2085, %v39
  %v2286 = vadd.f32 %v2088, %v40
  %v2287 = vadd.f32 %v2093, %v41
  %v2288 = vadd.f32 %v2096, %v42
  %v2289 = vadd.f32 %v2101, %v43
  %v2290 = vadd.f32 %v2104, %v44
  %v2291 = vadd.f32 %v2109, %v45
  %v2292 = vadd.f32 %v2112, %v46
  %v2293 = vadd.f32 %v2117, %v47
  %v2294 = vadd.f32 %v2120, %v48
  %v2295 = vadd.f32 %v2125, %v49
  %v2296 = vadd.f32 %v2128, %v50
  %v2297 = vadd.f32 %v2133, %v51
  %v2298 = vadd.f32 %v2136, %v52
  %v2299 = vadd.f32 %v2141, %v53
  %v2300 = vadd.f32 %v2144, %v54
  %v2301 = vadd.f32 %v2149, %v55
  %v2302 = vadd.f32 %v2152, %v56
  %v2303 = vadd.f32 %v2157, %v57
  %v2304 = vadd.f32 %v2160, %v58
  %v2305 = vadd.f32 %v2165, %v59
  %v2306 = vadd.f32 %v2168, %v60
  %v2307 = vadd.f32 %v2173, %v61
  %v2308 = vadd.f32 %v2176, %v62
  %v2309 = vadd.f32 %v2181, %v63
  %v2310 = vadd.f32 %v2184, %v64
  %v2311 = vadd.f32 %v2189, %v65
  %v2312 = vadd.f32 %v2192, %v66
  %v2313 = vadd.f32 %v2197, %v67
  %v2314 = vadd.f32 %v2200, %v68
  %v2315 = vadd.f32 %v2205, %v69
  %v2316 = vadd.f32 %v2208, %v70
  %v2317 = vadd.f32 %v2213, %v71
  %v2318 = vadd.f32 %v2216, %v72
  %v2319 = vadd.f32 %v2221, %v73
  %v2320 = vadd.f32 %v2224, %v74
  %v2321 = vadd.f32 %v2229, %v75
  %v2322 = vadd.f32 %v2232, %v76
  %v2323 = vadd.f32 %v2237, %v77
  %v2324 = vadd.f32 %v2240, %v78
  %v2325 = vadd.f32 %v2245, %v79
  %v2326 = vadd.f32 %v2248, %v80
  %v2327 = vadd.f32 %v2253, %v81
  %v2328 = vadd.f32 %v2256, %v82
  %v2329 = vadd.f32 %v2261, %v83
  %v2330 = vadd.f32 %v2264, %v84
  %2331 = vst.msk [vmem:[%s5] sm:$0xff] %vm177, %v2267
  %2332 = vst.msk [vmem:[%s5 + $0x8] sm:$0xff] %vm177, %v2268
  %2333 = vst.msk [vmem:[%s5 + $0x10] sm:$0xff] %vm177, %v2269
  %2334 = vst.msk [vmem:[%s5 + $0x18] sm:$0xff] %vm177, %v2270
  %2335 = vst.msk [vmem:[%s5 + $0x20] sm:$0xff] %vm177, %v2271
  %2336 = vst.msk [vmem:[%s5 + $0x28] sm:$0xff] %vm177, %v2272
  %2337 = vst.msk [vmem:[%s5 + $0x30] sm:$0xff] %vm177, %v2273
  %2338 = vst.msk [vmem:[%s5 + $0x38] sm:$0xff] %vm177, %v2274
  %2339 = vst.msk [vmem:[%s5 + $0x40] sm:$0xff] %vm177, %v2275
  %2340 = vst.msk [vmem:[%s5 + $0x48] sm:$0xff] %vm177, %v2276
  %2341 = vst.msk [vmem:[%s5 + $0x50] sm:$0xff] %vm177, %v2277
  %2342 = vst.msk [vmem:[%s5 + $0x58] sm:$0xff] %vm177, %v2278
  %2343 = vst.msk [vmem:[%s5 + $0x60] sm:$0xff] %vm177, %v2279
  %2344 = vst.msk [vmem:[%s5 + $0x68] sm:$0xff] %vm177, %v2280
  %2345 = vst.msk [vmem:[%s5 + $0x70] sm:$0xff] %vm177, %v2281
  %2346 = vst.msk [vmem:[%s5 + $0x78] sm:$0xff] %vm177, %v2282
  %2347 = vst.msk [vmem:[%s5 + $0x80] sm:$0xff] %vm177, %v2283
  %2348 = vst.msk [vmem:[%s5 + $0x88] sm:$0xff] %vm177, %v2284
  %2349 = vst.msk [vmem:[%s5 + $0x90] sm:$0xff] %vm177, %v2285
  %2350 = vst.msk [vmem:[%s5 + $0x98] sm:$0xff] %vm177, %v2286
  %2351 = vst.msk [vmem:[%s5 + $0xa0] sm:$0xff] %vm177, %v2287
  %2352 = vst.msk [vmem:[%s5 + $0xa8] sm:$0xff] %vm177, %v2288
  %2353 = vst.msk [vmem:[%s5 + $0xb0] sm:$0xff] %vm177, %v2289
  %2354 = vst.msk [vmem:[%s5 + $0xb8] sm:$0xff] %vm177, %v2290
  %2355 = vst.msk [vmem:[%s5 + $0xc0] sm:$0xff] %vm177, %v2291
  %2356 = vst.msk [vmem:[%s5 + $0xc8] sm:$0xff] %vm177, %v2292
  %2357 = vst.msk [vmem:[%s5 + $0xd0] sm:$0xff] %vm177, %v2293
  %2358 = vst.msk [vmem:[%s5 + $0xd8] sm:$0xff] %vm177, %v2294
  %2359 = vst.msk [vmem:[%s5 + $0xe0] sm:$0xff] %vm177, %v2295
  %2360 = vst.msk [vmem:[%s5 + $0xe8] sm:$0xff] %vm177, %v2296
  %2361 = vst.msk [vmem:[%s5 + $0xf0] sm:$0xff] %vm177, %v2297
  %2362 = vst.msk [vmem:[%s5 + $0xf8] sm:$0xff] %vm177, %v2298
  %2363 = vst.msk [vmem:[%s5 + $0x100] sm:$0xff] %vm177, %v2299
  %2364 = vst.msk [vmem:[%s5 + $0x108] sm:$0xff] %vm177, %v2300
  %2365 = vst.msk [vmem:[%s5 + $0x110] sm:$0xff] %vm177, %v2301
  %2366 = vst.msk [vmem:[%s5 + $0x118] sm:$0xff] %vm177, %v2302
  %2367 = vst.msk [vmem:[%s5 + $0x120] sm:$0xff] %vm177, %v2303
  %2368 = vst.msk [vmem:[%s5 + $0x128] sm:$0xff] %vm177, %v2304
  %2369 = vst.msk [vmem:[%s5 + $0x130] sm:$0xff] %vm177, %v2305
  %2370 = vst.msk [vmem:[%s5 + $0x138] sm:$0xff] %vm177, %v2306
  %2371 = vst.msk [vmem:[%s5 + $0x140] sm:$0xff] %vm177, %v2307
  %2372 = vst.msk [vmem:[%s5 + $0x148] sm:$0xff] %vm177, %v2308
  %2373 = vst.msk [vmem:[%s5 + $0x150] sm:$0xff] %vm177, %v2309
  %2374 = vst.msk [vmem:[%s5 + $0x158] sm:$0xff] %vm177, %v2310
  %2375 = vst.msk [vmem:[%s5 + $0x160] sm:$0xff] %vm177, %v2311
  %2376 = vst.msk [vmem:[%s5 + $0x168] sm:$0xff] %vm177, %v2312
  %2377 = vst.msk [vmem:[%s5 + $0x170] sm:$0xff] %vm177, %v2313
  %2378 = vst.msk [vmem:[%s5 + $0x178] sm:$0xff] %vm177, %v2314
  %2379 = vst.msk [vmem:[%s5 + $0x180] sm:$0xff] %vm177, %v2315
  %2380 = vst.msk [vmem:[%s5 + $0x188] sm:$0xff] %vm177, %v2316
  %2381 = vst.msk [vmem:[%s5 + $0x190] sm:$0xff] %vm177, %v2317
  %2382 = vst.msk [vmem:[%s5 + $0x198] sm:$0xff] %vm177, %v2318
  %2383 = vst.msk [vmem:[%s5 + $0x1a0] sm:$0xff] %vm177, %v2319
  %2384 = vst.msk [vmem:[%s5 + $0x1a8] sm:$0xff] %vm177, %v2320
  %2385 = vst.msk [vmem:[%s5 + $0x1b0] sm:$0xff] %vm177, %v2321
  %2386 = vst.msk [vmem:[%s5 + $0x1b8] sm:$0xff] %vm177, %v2322
  %2387 = vst.msk [vmem:[%s5 + $0x1c0] sm:$0xff] %vm177, %v2323
  %2388 = vst.msk [vmem:[%s5 + $0x1c8] sm:$0xff] %vm177, %v2324
  %2389 = vst.msk [vmem:[%s5 + $0x1d0] sm:$0xff] %vm177, %v2325
  %2390 = vst.msk [vmem:[%s5 + $0x1d8] sm:$0xff] %vm177, %v2326
  %2391 = vst.msk [vmem:[%s5 + $0x1e0] sm:$0xff] %vm177, %v2327
  %2392 = vst.msk [vmem:[%s5 + $0x1e8] sm:$0xff] %vm177, %v2328
  %2393 = vst.msk [vmem:[%s5 + $0x1f0] sm:$0xff] %vm177, %v2329
  %2394 = vst.msk [vmem:[%s5 + $0x1f8] sm:$0xff] %vm177, %v2330
  // Predicated region
  $region22: #{tpu_custom_call.1} parent=0 // pred_check
    _
  $region23: #{tpu_custom_call.1} parent=0 // pred_check_branch
    %2396 = sbr.rel (0) target = $region25
  $region24: #{tpu_custom_call.1} parent=0 // pred_region
    _
  $region25: #{tpu_custom_call.1} parent=0 // pred_fallthru
    _
  // Predicated region
  $region26: #{tpu_custom_call.1} parent=0 // pred_check
    _
  $region27: #{tpu_custom_call.1} parent=0 // pred_check_branch
    %2398 = sbr.rel (0) target = $region29
  $region28: #{tpu_custom_call.1} parent=0 // pred_region
    _
  $region29: #{tpu_custom_call.1} parent=0 // pred_fallthru
    _

</llo_original>
